<compile_context>
chip_gen: v6e
topology: v6e:2x2x1
jax: 0.10.0
libtpu: 0.0.40
codegen_flags: <defaults>
</compile_context>

<pallas_src>
import math
from functools import partial

import jax
import jax.numpy as jnp
from jax import lax
from jax.experimental import pallas as pl
from jax.experimental.pallas import tpu as pltpu


# ----------------------------------------------------------------------------
# Fused QKV projection kernel:  y = x @ W^T   (bias-free nn.Linear, W = (N, K))
# ----------------------------------------------------------------------------
def _linear_kernel(x_ref, w_ref, o_ref):
    # Contract the last dims of both operands so the MXU consumes the
    # transposed RHS directly (no wrapper-side or in-kernel .T).
    o_ref[...] = lax.dot_general(
        x_ref[...], w_ref[...], (((1,), (1,)), ((), ())),
        preferred_element_type=jnp.float32).astype(o_ref.dtype)


def pallas_linear(x2d, w, *, tm=None):
    """y = x2d @ w.T, w in PyTorch nn.Linear layout (out_features, in_features).

    M is tiled so the grid has >=2 parallel steps (megacore) and BlockSpec
    double-buffering can pipeline DMA against the MXU; the weight block uses a
    constant index_map so it stays VMEM-resident across the M tiles.
    """
    M, K = x2d.shape
    N = w.shape[0]
    if tm is None:
        tm = 128 if M % 128 == 0 else (8 if M % 8 == 0 else M)
    # TODO(synk): at production M/N/K also tile N and K (accumulator + pl.when)
    # and feed bf16 operands with (16, 128)-aligned blocks.
    return pl.pallas_call(
        _linear_kernel,
        out_shape=jax.ShapeDtypeStruct((M, N), jnp.float32),
        grid=(M // tm,),
        in_specs=[pl.BlockSpec((tm, K), lambda i: (i, 0)),
                  pl.BlockSpec((N, K), lambda i: (0, 0))],   # weight resident
        out_specs=pl.BlockSpec((tm, N), lambda i: (i, 0)),
        compiler_params=pltpu.CompilerParams(
            dimension_semantics=("parallel",)),
    )(x2d, w)


# ----------------------------------------------------------------------------
# Attention kernel: one grid step == one batch element, all heads at once.
# ----------------------------------------------------------------------------
def _attn_kernel(q_ref, k_ref, v_ref, rel_ref, bias_ref,
                 qe_ref, ke_ref, ve_ref, wo_ref, o_ref, *, nh):
    # q:    (S, H)   bf16, lane-dense, pre-scaled by 1/sqrt(hd)
    # k, v: (2S, H)  bf16, lane-dense
    # rel:  (S, 2S)  int32 distance buckets in [0, D)
    # bias: (S, 2S)  f32 additive mask (-1e30 masked, 0 otherwise)
    # qe/ke/ve: (D, H) bf16 tables (ke pre-scaled by 1/sqrt(hd)); wo: (H, H) bf16
    # o:    (S, H)   f32, final layout (out_proj fused)
    S, H = q_ref.shape
    KS = k_ref.shape[0]
    D = qe_ref.shape[0]
    hd = H // nh
    f32 = jnp.float32

    q = q_ref[...]
    k = k_ref[...]
    v = v_ref[...]
    qe = qe_ref[...]
    ke = ke_ref[...]
    ve = ve_ref[...]
    rel = rel_ref[...]
    bias = bias_ref[...]

    # --- per-head MXU matmuls on lane-dense operands (static lane slices) ----
    # content scores and the q-side relative-position weights share the same
    # LHS (q_h) and contraction dim (hd): fuse them into one matmul by
    # stacking [k_h ; qe_h] along the key/bucket axis.
    sc_parts, qpw_parts, kpw_parts = [], [], []
    for h in range(nh):
        sl = slice(h * hd, (h + 1) * hd)
        q_h, k_h = q[:, sl], k[:, sl]
        qe_h, ke_h = qe[:, sl], ke[:, sl]
        kq_h = jnp.concatenate([k_h, qe_h], axis=0)              # (2S + D, hd)
        sqw = lax.dot_general(q_h, kq_h, (((1,), (1,)), ((), ())),
                              preferred_element_type=f32)        # (S, 2S + D)
        sc_parts.append(sqw[:, :KS])                             # (S, 2S)
        qpw_parts.append(sqw[:, KS:])                            # (S, D)
        kpw_parts.append(
            lax.dot_general(ke_h, k_h, (((1,), (1,)), ((), ())),
                            preferred_element_type=f32))         # (D, 2S)
    scores = jnp.stack(sc_parts, axis=0) + bias[None]            # (nh, S, 2S)
    qpw = jnp.stack(qpw_parts, axis=0)                           # (nh, S, D)
    kpw = jnp.stack(kpw_parts, axis=0)                           # (nh, D, 2S)

    # --- relative-position gather (torch.gather over rel buckets) ------------
    # pos[h,s,t] = qpw[h,s,rel[s,t]] + kpw[h,rel[s,t],t], expressed as a D-step
    # select-accumulate over (nh, S, 2S) tensors: no (nh, S, 2S, D) intermediate.
    for e in range(D):
        sel = (rel == e)[None]                                   # (1, S, 2S)
        contrib = qpw[:, :, e:e + 1] + kpw[:, e:e + 1, :]        # (nh, S, 2S)
        scores = scores + jnp.where(sel, contrib, 0.0)

    # --- masked softmax over the key axis (f32; exp on EUP, approx recip) ----
    # Note: fully-masked query rows give a uniform distribution here (finite
    # -1e30 bias) instead of the NaN row PyTorch's -inf masked_fill produces.
    m = jnp.max(scores, axis=-1, keepdims=True)
    ex = jnp.exp(scores - m)
    p = ex * pl.reciprocal(jnp.sum(ex, axis=-1, keepdims=True), approx=True)

    # --- scatter_add of attention probs onto distance buckets: (nh, S, D) ----
    vdw_cols = [
        jnp.sum(jnp.where((rel == e)[None], p, 0.0), axis=-1, keepdims=True)
        for e in range(D)
    ]
    vdw = jnp.concatenate(vdw_cols, axis=-1)                     # (nh, S, D)

    # --- per-head context, lane-concat, single fused output projection -------
    p_bf = p.astype(v.dtype)
    vdw_bf = vdw.astype(ve.dtype)
    ctx_parts = []
    for h in range(nh):
        sl = slice(h * hd, (h + 1) * hd)
        ctx_h = lax.dot_general(p_bf[h], v[:, sl], (((1,), (0,)), ((), ())),
                                preferred_element_type=f32)      # (S, hd)
        ctx_h = ctx_h + lax.dot_general(
            vdw_bf[h], ve[:, sl], (((1,), (0,)), ((), ())),
            preferred_element_type=f32)
        ctx_parts.append(ctx_h)
    # head-concat along lanes == torch's transpose(1,2).view(B, S, H) layout
    ctx = jnp.concatenate(ctx_parts, axis=-1).astype(wo_ref.dtype)   # (S, H)

    # out = ctx @ W_out^T : one (S, H) x (H, H) MXU matmul in the final layout.
    o_ref[...] = lax.dot_general(
        ctx, wo_ref[...], (((1,), (1,)), ((), ())),
        preferred_element_type=f32).astype(o_ref.dtype)


# ----------------------------------------------------------------------------
# Full forward pass
# ----------------------------------------------------------------------------
def multi_head_attention_digraph(x, rel_distance, mask, qpe, kpe, vpe,
                                 w_qkv, w_out, num_heads):
    """w_qkv = concat([fc_q.weight, fc_k.weight, fc_v.weight], axis=0), built
    ONCE outside this (jitted) function."""
    B, S, H = x.shape
    nh = num_heads
    hd = H // nh
    KS = 2 * S
    inv_scale = 1.0 / math.sqrt(hd)

    # fused q/k/v projection: one M-tiled MXU matmul, lane-dense 5H output
    qkv = pallas_linear(x.reshape(B * S, H), w_qkv).reshape(B, S, 5 * H)

    # lane-dense (head-concat) layouts; NO head transpose in the wrapper.
    # The (B, S, 2H) k/v projections are viewed as sequence length 2S, exactly
    # matching the torch .view semantics (row-major reinterpretation).
    # 1/sqrt(hd) is folded into q (covers content + q_pos) and ke (covers k_pos).
    q = (qkv[..., :H] * inv_scale).astype(jnp.bfloat16)              # (B, S, H)
    k = qkv[..., H:3 * H].reshape(B, KS, H).astype(jnp.bfloat16)     # (B, 2S, H)
    v = qkv[..., 3 * H:].reshape(B, KS, H).astype(jnp.bfloat16)      # (B, 2S, H)
    qe = qpe.astype(jnp.bfloat16)                                    # (D, H)
    ke = (kpe * inv_scale).astype(jnp.bfloat16)                      # (D, H)
    ve = vpe.astype(jnp.bfloat16)                                    # (D, H)
    wo = w_out.astype(jnp.bfloat16)                                  # (H, H)

    rel = rel_distance.astype(jnp.int32)                             # (B, S, 2S)
    # additive mask bias: one f32 add in-kernel instead of int compare+select.
    bias = jnp.where(mask, jnp.float32(-1e30), jnp.float32(0.0))     # (B, S, 2S)

    D = qe.shape[0]
    out = pl.pallas_call(
        partial(_attn_kernel, nh=nh),
        out_shape=jax.ShapeDtypeStruct((B, S, H), jnp.float32),
        grid=(B,),
        in_specs=[
            pl.BlockSpec((None, S, H), lambda b: (b, 0, 0)),     # q (lane-dense)
            pl.BlockSpec((None, KS, H), lambda b: (b, 0, 0)),    # k
            pl.BlockSpec((None, KS, H), lambda b: (b, 0, 0)),    # v
            pl.BlockSpec((None, S, KS), lambda b: (b, 0, 0)),    # rel
            pl.BlockSpec((None, S, KS), lambda b: (b, 0, 0)),    # mask bias
            # parameter tables: constant block index -> VMEM-resident across
            # the batch grid (no per-step re-DMA).
            pl.BlockSpec((D, H), lambda b: (0, 0)),              # qe
            pl.BlockSpec((D, H), lambda b: (0, 0)),              # ke (scaled)
            pl.BlockSpec((D, H), lambda b: (0, 0)),              # ve
            pl.BlockSpec((H, H), lambda b: (0, 0)),              # w_out
        ],
        out_specs=pl.BlockSpec((None, S, H), lambda b: (b, 0, 0)),
        compiler_params=pltpu.CompilerParams(
            dimension_semantics=("parallel",)),   # >=2 steps: both v7x TCs busy
    )(q, k, v, rel, bias, qe, ke, ve, wo)
    return out


# ----------------------------------------------------------------------------
# Pure-JAX reference (mirrors the PyTorch forward exactly)
# ----------------------------------------------------------------------------
def reference(x, rel, mask, qpe, kpe, vpe, w_q, w_k, w_v, w_out, nh):
    B, S, H = x.shape
    hd = H // nh
    D = qpe.shape[0]
    KS = 2 * S
    scale = math.sqrt(hd)
    q = (x @ w_q.T).reshape(B, S, nh, hd).transpose(0, 2, 1, 3)
    k = (x @ w_k.T).reshape(B, KS, nh, hd).transpose(0, 2, 1, 3)
    v = (x @ w_v.T).reshape(B, KS, nh, hd).transpose(0, 2, 1, 3)
    qe = qpe.reshape(D, nh, hd).transpose(1, 0, 2)
    ke = kpe.reshape(D, nh, hd).transpose(1, 0, 2)
    ve = vpe.reshape(D, nh, hd).transpose(1, 0, 2)
    relb = jnp.broadcast_to(rel[:, None], (B, nh, S, KS))
    qpw = jnp.einsum('bhsd,hed->bhse', q, qe)
    kpw = jnp.einsum('bhkd,hed->bhke', k, ke)
    q_pos = jnp.take_along_axis(qpw, relb, axis=3)
    k_pos = jnp.take_along_axis(kpw, relb.transpose(0, 1, 3, 2),
                                axis=3).transpose(0, 1, 3, 2)
    scores = jnp.einsum('bhsd,bhkd->bhsk', q, k)
    scores = (scores + q_pos + k_pos) / scale
    scores = jnp.where(mask[:, None, :, :], -jnp.inf, scores)
    p = jax.nn.softmax(scores, axis=-1)
    onehot = jax.nn.one_hot(rel, D, dtype=jnp.float32)
    vdw = jnp.einsum('bhsk,bskd->bhsd', p, onehot)
    out = jnp.einsum('bhsk,bhkd->bhsd', p, v) + jnp.einsum('bhse,hed->bhsd', vdw, ve)
    out = out.transpose(0, 2, 1, 3).reshape(B, S, H)
    return out @ w_out.T


if __name__ == "__main__":
    B, S, H, NH, D = 2, 8, 32, 4, 16

    key = jax.random.PRNGKey(0)
    ks = jax.random.split(key, 10)
    x = jax.random.normal(ks[0], (B, S, H), jnp.float32)
    rel = jax.random.randint(ks[1], (B, S, 2 * S), 0, D, jnp.int32)
    mask = jax.random.uniform(ks[2], (B, S, 2 * S)) < 0.2
    mask = mask.at[:, :, 0].set(False)   # keep >=1 valid key per query row
    qpe = jax.random.normal(ks[3], (D, H), jnp.float32) * 0.1
    kpe = jax.random.normal(ks[4], (D, H), jnp.float32) * 0.1
    vpe = jax.random.normal(ks[5], (D, H), jnp.float32) * 0.1
    w_q = jax.random.normal(ks[6], (H, H), jnp.float32) / math.sqrt(H)
    w_k = jax.random.normal(ks[7], (2 * H, H), jnp.float32) / math.sqrt(H)
    w_v = jax.random.normal(ks[8], (2 * H, H), jnp.float32) / math.sqrt(H)
    w_out = jax.random.normal(ks[9], (H, H), jnp.float32) / math.sqrt(H)

    # q/k/v projection weights concatenated ONCE, outside the jitted forward
    # (no per-call HBM concat pass).
    w_qkv = jnp.concatenate([w_q, w_k, w_v], axis=0)             # (5H, H)

    fwd = jax.jit(multi_head_attention_digraph, static_argnums=(8,))
    out = jax.block_until_ready(fwd(x, rel, mask, qpe, kpe, vpe, w_qkv, w_out, NH))

    # accurate f32 baseline; precision scoped here instead of a global config
    with jax.default_matmul_precision("highest"):
        ref = reference(x, rel, mask, qpe, kpe, vpe, w_q, w_k, w_v, w_out, NH)

    assert out.shape == (B, S, H), out.shape
    # tolerance reflects bf16 MXU operands in the kernel vs. the f32
    # "highest"-precision reference (and the EUP approx reciprocal).
    err = float(jnp.max(jnp.abs(out - ref)))
    assert jnp.allclose(out, ref, atol=2.5e-2, rtol=2.5e-2), err
    print("KERNEL_OK")
</pallas_src>

<mosaic_0001>
module attributes {stable_mosaic.version = 11 : i64} {
  func.func @_linear_kernel(%arg0: i32, %arg1: memref<8x32xf32, #tpu.memory_space<vmem>>, %arg2: memref<160x32xf32, #tpu.memory_space<vmem>>, %arg3: memref<8x160xf32, #tpu.memory_space<vmem>>) attributes {dimension_semantics = [#tpu.dimension_semantics<parallel>], iteration_bounds = array<i64: 2>, scalar_prefetch = 0 : i64, scratch_operands = 0 : i64, tpu.core_type = #tpu.core_type<tc>, window_params = [{transform_indices = @transform_0, window_bounds = array<i64: 8, 32>}, {pipeline_mode = #tpu.pipeline_mode<synchronous>, transform_indices = @transform_1, window_bounds = array<i64: 160, 32>}, {transform_indices = @transform_2, window_bounds = array<i64: 8, 160>}]} {
    %c0 = arith.constant 0 : index
    %c0_0 = arith.constant 0 : index
    %0 = vector.load %arg1[%c0, %c0_0] : memref<8x32xf32, #tpu.memory_space<vmem>>, vector<8x32xf32>
    %c0_1 = arith.constant 0 : index
    %c0_2 = arith.constant 0 : index
    %1 = vector.load %arg2[%c0_1, %c0_2] : memref<160x32xf32, #tpu.memory_space<vmem>>, vector<160x32xf32>
    %cst = arith.constant dense<0.000000e+00> : vector<8x160xf32>
    %2 = tpu.matmul %0, %1, %cst {dimension_numbers = #tpu.dot_dimension_numbers<[1], [1], [0], [0], [0, 0, 1, 0], [], []>} : vector<8x32xf32>, vector<160x32xf32>, vector<8x160xf32> -> vector<8x160xf32>
    %c0_3 = arith.constant 0 : index
    %c0_4 = arith.constant 0 : index
    %3 = vector.load %arg3[%c0_3, %c0_4] : memref<8x160xf32, #tpu.memory_space<vmem>>, vector<8x160xf32>
    tpu.vector_store %arg3[%c0_3, %c0_4], %2 {strides = array<i32>} : memref<8x160xf32, #tpu.memory_space<vmem>>, vector<8x160xf32>,
    return
  }
  func.func @transform_0(%arg0: i32) -> (i32, i32) {
    %c0_i32 = arith.constant 0 : i32
    %c0_i32_0 = arith.constant 0 : i32
    return %arg0, %c0_i32 : i32, i32
  }
  func.func @transform_1(%arg0: i32) -> (i32, i32) {
    %c0_i32 = arith.constant 0 : i32
    %c0_i32_0 = arith.constant 0 : i32
    %c0_i32_1 = arith.constant 0 : i32
    return %c0_i32, %c0_i32_0 : i32, i32
  }
  func.func @transform_2(%arg0: i32) -> (i32, i32) {
    %c0_i32 = arith.constant 0 : i32
    %c0_i32_0 = arith.constant 0 : i32
    return %arg0, %c0_i32 : i32, i32
  }
}

module attributes {stable_mosaic.version = 11 : i64} {
  func.func @_attn_kernel(%arg0: i32, %arg1: memref<1x8x32xbf16, #tpu.memory_space<vmem>>, %arg2: memref<1x16x32xbf16, #tpu.memory_space<vmem>>, %arg3: memref<1x16x32xbf16, #tpu.memory_space<vmem>>, %arg4: memref<1x8x16xi32, #tpu.memory_space<vmem>>, %arg5: memref<1x8x16xf32, #tpu.memory_space<vmem>>, %arg6: memref<16x32xbf16, #tpu.memory_space<vmem>>, %arg7: memref<16x32xbf16, #tpu.memory_space<vmem>>, %arg8: memref<16x32xbf16, #tpu.memory_space<vmem>>, %arg9: memref<32x32xbf16, #tpu.memory_space<vmem>>, %arg10: memref<1x8x32xf32, #tpu.memory_space<vmem>>) attributes {dimension_semantics = [#tpu.dimension_semantics<parallel>], iteration_bounds = array<i64: 2>, scalar_prefetch = 0 : i64, scratch_operands = 0 : i64, tpu.core_type = #tpu.core_type<tc>, window_params = [{transform_indices = @transform_0, window_bounds = array<i64: 1, 8, 32>}, {transform_indices = @transform_1, window_bounds = array<i64: 1, 16, 32>}, {transform_indices = @transform_2, window_bounds = array<i64: 1, 16, 32>}, {transform_indices = @transform_3, window_bounds = array<i64: 1, 8, 16>}, {transform_indices = @transform_4, window_bounds = array<i64: 1, 8, 16>}, {pipeline_mode = #tpu.pipeline_mode<synchronous>, transform_indices = @transform_5, window_bounds = array<i64: 16, 32>}, {pipeline_mode = #tpu.pipeline_mode<synchronous>, transform_indices = @transform_6, window_bounds = array<i64: 16, 32>}, {pipeline_mode = #tpu.pipeline_mode<synchronous>, transform_indices = @transform_7, window_bounds = array<i64: 16, 32>}, {pipeline_mode = #tpu.pipeline_mode<synchronous>, transform_indices = @transform_8, window_bounds = array<i64: 32, 32>}, {transform_indices = @transform_9, window_bounds = array<i64: 1, 8, 32>}]} {
    %c0 = arith.constant 0 : index
    %c0_0 = arith.constant 0 : index
    %c0_1 = arith.constant 0 : index
    %0 = vector.load %arg1[%c0, %c0_0, %c0_1] : memref<1x8x32xbf16, #tpu.memory_space<vmem>>, vector<1x8x32xbf16>
    %1 = vector.shape_cast %0 : vector<1x8x32xbf16> to vector<8x32xbf16>
    %c0_2 = arith.constant 0 : index
    %c0_3 = arith.constant 0 : index
    %c0_4 = arith.constant 0 : index
    %2 = vector.load %arg2[%c0_2, %c0_3, %c0_4] : memref<1x16x32xbf16, #tpu.memory_space<vmem>>, vector<1x16x32xbf16>
    %3 = vector.shape_cast %2 : vector<1x16x32xbf16> to vector<16x32xbf16>
    %c0_5 = arith.constant 0 : index
    %c0_6 = arith.constant 0 : index
    %c0_7 = arith.constant 0 : index
    %4 = vector.load %arg3[%c0_5, %c0_6, %c0_7] : memref<1x16x32xbf16, #tpu.memory_space<vmem>>, vector<1x16x32xbf16>
    %5 = vector.shape_cast %4 : vector<1x16x32xbf16> to vector<16x32xbf16>
    %c0_8 = arith.constant 0 : index
    %c0_9 = arith.constant 0 : index
    %6 = vector.load %arg6[%c0_8, %c0_9] : memref<16x32xbf16, #tpu.memory_space<vmem>>, vector<16x32xbf16>
    %c0_10 = arith.constant 0 : index
    %c0_11 = arith.constant 0 : index
    %7 = vector.load %arg7[%c0_10, %c0_11] : memref<16x32xbf16, #tpu.memory_space<vmem>>, vector<16x32xbf16>
    %c0_12 = arith.constant 0 : index
    %c0_13 = arith.constant 0 : index
    %8 = vector.load %arg8[%c0_12, %c0_13] : memref<16x32xbf16, #tpu.memory_space<vmem>>, vector<16x32xbf16>
    %c0_14 = arith.constant 0 : index
    %c0_15 = arith.constant 0 : index
    %c0_16 = arith.constant 0 : index
    %9 = vector.load %arg4[%c0_14, %c0_15, %c0_16] : memref<1x8x16xi32, #tpu.memory_space<vmem>>, vector<1x8x16xi32>
    %10 = vector.shape_cast %9 : vector<1x8x16xi32> to vector<8x16xi32>
    %c0_17 = arith.constant 0 : index
    %c0_18 = arith.constant 0 : index
    %c0_19 = arith.constant 0 : index
    %11 = vector.load %arg5[%c0_17, %c0_18, %c0_19] : memref<1x8x16xf32, #tpu.memory_space<vmem>>, vector<1x8x16xf32>
    %12 = vector.shape_cast %11 : vector<1x8x16xf32> to vector<8x16xf32>
    %13 = vector.extract_strided_slice %1 {offsets = [0, 0], sizes = [8, 8], strides = [1, 1]} : vector<8x32xbf16> to vector<8x8xbf16>
    %14 = vector.extract_strided_slice %3 {offsets = [0, 0], sizes = [16, 8], strides = [1, 1]} : vector<16x32xbf16> to vector<16x8xbf16>
    %15 = vector.extract_strided_slice %6 {offsets = [0, 0], sizes = [16, 8], strides = [1, 1]} : vector<16x32xbf16> to vector<16x8xbf16>
    %16 = vector.extract_strided_slice %7 {offsets = [0, 0], sizes = [16, 8], strides = [1, 1]} : vector<16x32xbf16> to vector<16x8xbf16>
    %17 = tpu.concatenate %14, %15 in 0 : vector<16x8xbf16>, vector<16x8xbf16> -> vector<32x8xbf16>
    %cst = arith.constant dense<0.000000e+00> : vector<8x32xf32>
    %18 = tpu.matmul %13, %17, %cst {dimension_numbers = #tpu.dot_dimension_numbers<[1], [1], [0], [0], [0, 0, 1, 0], [], []>} : vector<8x8xbf16>, vector<32x8xbf16>, vector<8x32xf32> -> vector<8x32xf32>
    %19 = vector.extract_strided_slice %18 {offsets = [0, 0], sizes = [8, 16], strides = [1, 1]} : vector<8x32xf32> to vector<8x16xf32>
    %20 = vector.extract_strided_slice %18 {offsets = [0, 16], sizes = [8, 16], strides = [1, 1]} : vector<8x32xf32> to vector<8x16xf32>
    %cst_20 = arith.constant dense<0.000000e+00> : vector<16x16xf32>
    %21 = tpu.matmul %16, %14, %cst_20 {dimension_numbers = #tpu.dot_dimension_numbers<[1], [1], [0], [0], [0, 0, 1, 0], [], []>} : vector<16x8xbf16>, vector<16x8xbf16>, vector<16x16xf32> -> vector<16x16xf32>
    %22 = vector.extract_strided_slice %1 {offsets = [0, 8], sizes = [8, 8], strides = [1, 1]} : vector<8x32xbf16> to vector<8x8xbf16>
    %23 = vector.extract_strided_slice %3 {offsets = [0, 8], sizes = [16, 8], strides = [1, 1]} : vector<16x32xbf16> to vector<16x8xbf16>
    %24 = vector.extract_strided_slice %6 {offsets = [0, 8], sizes = [16, 8], strides = [1, 1]} : vector<16x32xbf16> to vector<16x8xbf16>
    %25 = vector.extract_strided_slice %7 {offsets = [0, 8], sizes = [16, 8], strides = [1, 1]} : vector<16x32xbf16> to vector<16x8xbf16>
    %26 = tpu.concatenate %23, %24 in 0 : vector<16x8xbf16>, vector<16x8xbf16> -> vector<32x8xbf16>
    %cst_21 = arith.constant dense<0.000000e+00> : vector<8x32xf32>
    %27 = tpu.matmul %22, %26, %cst_21 {dimension_numbers = #tpu.dot_dimension_numbers<[1], [1], [0], [0], [0, 0, 1, 0], [], []>} : vector<8x8xbf16>, vector<32x8xbf16>, vector<8x32xf32> -> vector<8x32xf32>
    %28 = vector.extract_strided_slice %27 {offsets = [0, 0], sizes = [8, 16], strides = [1, 1]} : vector<8x32xf32> to vector<8x16xf32>
    %29 = vector.extract_strided_slice %27 {offsets = [0, 16], sizes = [8, 16], strides = [1, 1]} : vector<8x32xf32> to vector<8x16xf32>
    %cst_22 = arith.constant dense<0.000000e+00> : vector<16x16xf32>
    %30 = tpu.matmul %25, %23, %cst_22 {dimension_numbers = #tpu.dot_dimension_numbers<[1], [1], [0], [0], [0, 0, 1, 0], [], []>} : vector<16x8xbf16>, vector<16x8xbf16>, vector<16x16xf32> -> vector<16x16xf32>
    %31 = vector.extract_strided_slice %1 {offsets = [0, 16], sizes = [8, 8], strides = [1, 1]} : vector<8x32xbf16> to vector<8x8xbf16>
    %32 = vector.extract_strided_slice %3 {offsets = [0, 16], sizes = [16, 8], strides = [1, 1]} : vector<16x32xbf16> to vector<16x8xbf16>
    %33 = vector.extract_strided_slice %6 {offsets = [0, 16], sizes = [16, 8], strides = [1, 1]} : vector<16x32xbf16> to vector<16x8xbf16>
    %34 = vector.extract_strided_slice %7 {offsets = [0, 16], sizes = [16, 8], strides = [1, 1]} : vector<16x32xbf16> to vector<16x8xbf16>
    %35 = tpu.concatenate %32, %33 in 0 : vector<16x8xbf16>, vector<16x8xbf16> -> vector<32x8xbf16>
    %cst_23 = arith.constant dense<0.000000e+00> : vector<8x32xf32>
    %36 = tpu.matmul %31, %35, %cst_23 {dimension_numbers = #tpu.dot_dimension_numbers<[1], [1], [0], [0], [0, 0, 1, 0], [], []>} : vector<8x8xbf16>, vector<32x8xbf16>, vector<8x32xf32> -> vector<8x32xf32>
    %37 = vector.extract_strided_slice %36 {offsets = [0, 0], sizes = [8, 16], strides = [1, 1]} : vector<8x32xf32> to vector<8x16xf32>
    %38 = vector.extract_strided_slice %36 {offsets = [0, 16], sizes = [8, 16], strides = [1, 1]} : vector<8x32xf32> to vector<8x16xf32>
    %cst_24 = arith.constant dense<0.000000e+00> : vector<16x16xf32>
    %39 = tpu.matmul %34, %32, %cst_24 {dimension_numbers = #tpu.dot_dimension_numbers<[1], [1], [0], [0], [0, 0, 1, 0], [], []>} : vector<16x8xbf16>, vector<16x8xbf16>, vector<16x16xf32> -> vector<16x16xf32>
    %40 = vector.extract_strided_slice %1 {offsets = [0, 24], sizes = [8, 8], strides = [1, 1]} : vector<8x32xbf16> to vector<8x8xbf16>
    %41 = vector.extract_strided_slice %3 {offsets = [0, 24], sizes = [16, 8], strides = [1, 1]} : vector<16x32xbf16> to vector<16x8xbf16>
    %42 = vector.extract_strided_slice %6 {offsets = [0, 24], sizes = [16, 8], strides = [1, 1]} : vector<16x32xbf16> to vector<16x8xbf16>
    %43 = vector.extract_strided_slice %7 {offsets = [0, 24], sizes = [16, 8], strides = [1, 1]} : vector<16x32xbf16> to vector<16x8xbf16>
    %44 = tpu.concatenate %41, %42 in 0 : vector<16x8xbf16>, vector<16x8xbf16> -> vector<32x8xbf16>
    %cst_25 = arith.constant dense<0.000000e+00> : vector<8x32xf32>
    %45 = tpu.matmul %40, %44, %cst_25 {dimension_numbers = #tpu.dot_dimension_numbers<[1], [1], [0], [0], [0, 0, 1, 0], [], []>} : vector<8x8xbf16>, vector<32x8xbf16>, vector<8x32xf32> -> vector<8x32xf32>
    %46 = vector.extract_strided_slice %45 {offsets = [0, 0], sizes = [8, 16], strides = [1, 1]} : vector<8x32xf32> to vector<8x16xf32>
    %47 = vector.extract_strided_slice %45 {offsets = [0, 16], sizes = [8, 16], strides = [1, 1]} : vector<8x32xf32> to vector<8x16xf32>
    %cst_26 = arith.constant dense<0.000000e+00> : vector<16x16xf32>
    %48 = tpu.matmul %43, %41, %cst_26 {dimension_numbers = #tpu.dot_dimension_numbers<[1], [1], [0], [0], [0, 0, 1, 0], [], []>} : vector<16x8xbf16>, vector<16x8xbf16>, vector<16x16xf32> -> vector<16x16xf32>
    %49 = vector.shape_cast %19 : vector<8x16xf32> to vector<1x8x16xf32>
    %50 = vector.shape_cast %28 : vector<8x16xf32> to vector<1x8x16xf32>
    %51 = vector.shape_cast %37 : vector<8x16xf32> to vector<1x8x16xf32>
    %52 = vector.shape_cast %46 : vector<8x16xf32> to vector<1x8x16xf32>
    %53 = tpu.concatenate %49, %50, %51, %52 in 0 : vector<1x8x16xf32>, vector<1x8x16xf32>, vector<1x8x16xf32>, vector<1x8x16xf32> -> vector<4x8x16xf32>
    %54 = vector.shape_cast %12 : vector<8x16xf32> to vector<1x8x16xf32>
    %55 = vector.broadcast %54 : vector<1x8x16xf32> to vector<4x8x16xf32>
    %56 = arith.addf %53, %55 : vector<4x8x16xf32>
    %57 = vector.shape_cast %20 : vector<8x16xf32> to vector<1x8x16xf32>
    %58 = vector.shape_cast %29 : vector<8x16xf32> to vector<1x8x16xf32>
    %59 = vector.shape_cast %38 : vector<8x16xf32> to vector<1x8x16xf32>
    %60 = vector.shape_cast %47 : vector<8x16xf32> to vector<1x8x16xf32>
    %61 = tpu.concatenate %57, %58, %59, %60 in 0 : vector<1x8x16xf32>, vector<1x8x16xf32>, vector<1x8x16xf32>, vector<1x8x16xf32> -> vector<4x8x16xf32>
    %62 = vector.shape_cast %21 : vector<16x16xf32> to vector<1x16x16xf32>
    %63 = vector.shape_cast %30 : vector<16x16xf32> to vector<1x16x16xf32>
    %64 = vector.shape_cast %39 : vector<16x16xf32> to vector<1x16x16xf32>
    %65 = vector.shape_cast %48 : vector<16x16xf32> to vector<1x16x16xf32>
    %66 = tpu.concatenate %62, %63, %64, %65 in 0 : vector<1x16x16xf32>, vector<1x16x16xf32>, vector<1x16x16xf32>, vector<1x16x16xf32> -> vector<4x16x16xf32>
    %c0_i32 = arith.constant 0 : i32
    %67 = vector.broadcast %c0_i32 : i32 to vector<8x16xi32>
    %68 = arith.cmpi eq, %10, %67 : vector<8x16xi32>
    %69 = vector.shape_cast %68 : vector<8x16xi1> to vector<1x8x16xi1>
    %70 = vector.extract_strided_slice %61 {offsets = [0, 0, 0], sizes = [4, 8, 1], strides = [1, 1, 1]} : vector<4x8x16xf32> to vector<4x8x1xf32>
    %71 = vector.extract_strided_slice %66 {offsets = [0, 0, 0], sizes = [4, 1, 16], strides = [1, 1, 1]} : vector<4x16x16xf32> to vector<4x1x16xf32>
    %72 = vector.broadcast %70 : vector<4x8x1xf32> to vector<4x8x16xf32>
    %73 = vector.broadcast %71 : vector<4x1x16xf32> to vector<4x8x16xf32>
    %74 = arith.addf %72, %73 : vector<4x8x16xf32>
    %cst_27 = arith.constant 0.000000e+00 : f32
    %75 = vector.shape_cast %69 : vector<1x8x16xi1> to vector<1x8x16xi1>
    %76 = vector.broadcast %75 : vector<1x8x16xi1> to vector<4x8x16xi1>
    %77 = vector.broadcast %cst_27 : f32 to vector<4x8x16xf32>
    %78 = arith.select %76, %74, %77 : vector<4x8x16xi1>, vector<4x8x16xf32>
    %79 = arith.addf %56, %78 : vector<4x8x16xf32>
    %c1_i32 = arith.constant 1 : i32
    %80 = vector.broadcast %c1_i32 : i32 to vector<8x16xi32>
    %81 = arith.cmpi eq, %10, %80 : vector<8x16xi32>
    %82 = vector.shape_cast %81 : vector<8x16xi1> to vector<1x8x16xi1>
    %83 = vector.extract_strided_slice %61 {offsets = [0, 0, 1], sizes = [4, 8, 1], strides = [1, 1, 1]} : vector<4x8x16xf32> to vector<4x8x1xf32>
    %84 = vector.extract_strided_slice %66 {offsets = [0, 1, 0], sizes = [4, 1, 16], strides = [1, 1, 1]} : vector<4x16x16xf32> to vector<4x1x16xf32>
    %85 = vector.broadcast %83 : vector<4x8x1xf32> to vector<4x8x16xf32>
    %86 = vector.broadcast %84 : vector<4x1x16xf32> to vector<4x8x16xf32>
    %87 = arith.addf %85, %86 : vector<4x8x16xf32>
    %cst_28 = arith.constant 0.000000e+00 : f32
    %88 = vector.shape_cast %82 : vector<1x8x16xi1> to vector<1x8x16xi1>
    %89 = vector.broadcast %88 : vector<1x8x16xi1> to vector<4x8x16xi1>
    %90 = vector.broadcast %cst_28 : f32 to vector<4x8x16xf32>
    %91 = arith.select %89, %87, %90 : vector<4x8x16xi1>, vector<4x8x16xf32>
    %92 = arith.addf %79, %91 : vector<4x8x16xf32>
    %c2_i32 = arith.constant 2 : i32
    %93 = vector.broadcast %c2_i32 : i32 to vector<8x16xi32>
    %94 = arith.cmpi eq, %10, %93 : vector<8x16xi32>
    %95 = vector.shape_cast %94 : vector<8x16xi1> to vector<1x8x16xi1>
    %96 = vector.extract_strided_slice %61 {offsets = [0, 0, 2], sizes = [4, 8, 1], strides = [1, 1, 1]} : vector<4x8x16xf32> to vector<4x8x1xf32>
    %97 = vector.extract_strided_slice %66 {offsets = [0, 2, 0], sizes = [4, 1, 16], strides = [1, 1, 1]} : vector<4x16x16xf32> to vector<4x1x16xf32>
    %98 = vector.broadcast %96 : vector<4x8x1xf32> to vector<4x8x16xf32>
    %99 = vector.broadcast %97 : vector<4x1x16xf32> to vector<4x8x16xf32>
    %100 = arith.addf %98, %99 : vector<4x8x16xf32>
    %cst_29 = arith.constant 0.000000e+00 : f32
    %101 = vector.shape_cast %95 : vector<1x8x16xi1> to vector<1x8x16xi1>
    %102 = vector.broadcast %101 : vector<1x8x16xi1> to vector<4x8x16xi1>
    %103 = vector.broadcast %cst_29 : f32 to vector<4x8x16xf32>
    %104 = arith.select %102, %100, %103 : vector<4x8x16xi1>, vector<4x8x16xf32>
    %105 = arith.addf %92, %104 : vector<4x8x16xf32>
    %c3_i32 = arith.constant 3 : i32
    %106 = vector.broadcast %c3_i32 : i32 to vector<8x16xi32>
    %107 = arith.cmpi eq, %10, %106 : vector<8x16xi32>
    %108 = vector.shape_cast %107 : vector<8x16xi1> to vector<1x8x16xi1>
    %109 = vector.extract_strided_slice %61 {offsets = [0, 0, 3], sizes = [4, 8, 1], strides = [1, 1, 1]} : vector<4x8x16xf32> to vector<4x8x1xf32>
    %110 = vector.extract_strided_slice %66 {offsets = [0, 3, 0], sizes = [4, 1, 16], strides = [1, 1, 1]} : vector<4x16x16xf32> to vector<4x1x16xf32>
    %111 = vector.broadcast %109 : vector<4x8x1xf32> to vector<4x8x16xf32>
    %112 = vector.broadcast %110 : vector<4x1x16xf32> to vector<4x8x16xf32>
    %113 = arith.addf %111, %112 : vector<4x8x16xf32>
    %cst_30 = arith.constant 0.000000e+00 : f32
    %114 = vector.shape_cast %108 : vector<1x8x16xi1> to vector<1x8x16xi1>
    %115 = vector.broadcast %114 : vector<1x8x16xi1> to vector<4x8x16xi1>
    %116 = vector.broadcast %cst_30 : f32 to vector<4x8x16xf32>
    %117 = arith.select %115, %113, %116 : vector<4x8x16xi1>, vector<4x8x16xf32>
    %118 = arith.addf %105, %117 : vector<4x8x16xf32>
    %c4_i32 = arith.constant 4 : i32
    %119 = vector.broadcast %c4_i32 : i32 to vector<8x16xi32>
    %120 = arith.cmpi eq, %10, %119 : vector<8x16xi32>
    %121 = vector.shape_cast %120 : vector<8x16xi1> to vector<1x8x16xi1>
    %122 = vector.extract_strided_slice %61 {offsets = [0, 0, 4], sizes = [4, 8, 1], strides = [1, 1, 1]} : vector<4x8x16xf32> to vector<4x8x1xf32>
    %123 = vector.extract_strided_slice %66 {offsets = [0, 4, 0], sizes = [4, 1, 16], strides = [1, 1, 1]} : vector<4x16x16xf32> to vector<4x1x16xf32>
    %124 = vector.broadcast %122 : vector<4x8x1xf32> to vector<4x8x16xf32>
    %125 = vector.broadcast %123 : vector<4x1x16xf32> to vector<4x8x16xf32>
    %126 = arith.addf %124, %125 : vector<4x8x16xf32>
    %cst_31 = arith.constant 0.000000e+00 : f32
    %127 = vector.shape_cast %121 : vector<1x8x16xi1> to vector<1x8x16xi1>
    %128 = vector.broadcast %127 : vector<1x8x16xi1> to vector<4x8x16xi1>
    %129 = vector.broadcast %cst_31 : f32 to vector<4x8x16xf32>
    %130 = arith.select %128, %126, %129 : vector<4x8x16xi1>, vector<4x8x16xf32>
    %131 = arith.addf %118, %130 : vector<4x8x16xf32>
    %c5_i32 = arith.constant 5 : i32
    %132 = vector.broadcast %c5_i32 : i32 to vector<8x16xi32>
    %133 = arith.cmpi eq, %10, %132 : vector<8x16xi32>
    %134 = vector.shape_cast %133 : vector<8x16xi1> to vector<1x8x16xi1>
    %135 = vector.extract_strided_slice %61 {offsets = [0, 0, 5], sizes = [4, 8, 1], strides = [1, 1, 1]} : vector<4x8x16xf32> to vector<4x8x1xf32>
    %136 = vector.extract_strided_slice %66 {offsets = [0, 5, 0], sizes = [4, 1, 16], strides = [1, 1, 1]} : vector<4x16x16xf32> to vector<4x1x16xf32>
    %137 = vector.broadcast %135 : vector<4x8x1xf32> to vector<4x8x16xf32>
    %138 = vector.broadcast %136 : vector<4x1x16xf32> to vector<4x8x16xf32>
    %139 = arith.addf %137, %138 : vector<4x8x16xf32>
    %cst_32 = arith.constant 0.000000e+00 : f32
    %140 = vector.shape_cast %134 : vector<1x8x16xi1> to vector<1x8x16xi1>
    %141 = vector.broadcast %140 : vector<1x8x16xi1> to vector<4x8x16xi1>
    %142 = vector.broadcast %cst_32 : f32 to vector<4x8x16xf32>
    %143 = arith.select %141, %139, %142 : vector<4x8x16xi1>, vector<4x8x16xf32>
    %144 = arith.addf %131, %143 : vector<4x8x16xf32>
    %c6_i32 = arith.constant 6 : i32
    %145 = vector.broadcast %c6_i32 : i32 to vector<8x16xi32>
    %146 = arith.cmpi eq, %10, %145 : vector<8x16xi32>
    %147 = vector.shape_cast %146 : vector<8x16xi1> to vector<1x8x16xi1>
    %148 = vector.extract_strided_slice %61 {offsets = [0, 0, 6], sizes = [4, 8, 1], strides = [1, 1, 1]} : vector<4x8x16xf32> to vector<4x8x1xf32>
    %149 = vector.extract_strided_slice %66 {offsets = [0, 6, 0], sizes = [4, 1, 16], strides = [1, 1, 1]} : vector<4x16x16xf32> to vector<4x1x16xf32>
    %150 = vector.broadcast %148 : vector<4x8x1xf32> to vector<4x8x16xf32>
    %151 = vector.broadcast %149 : vector<4x1x16xf32> to vector<4x8x16xf32>
    %152 = arith.addf %150, %151 : vector<4x8x16xf32>
    %cst_33 = arith.constant 0.000000e+00 : f32
    %153 = vector.shape_cast %147 : vector<1x8x16xi1> to vector<1x8x16xi1>
    %154 = vector.broadcast %153 : vector<1x8x16xi1> to vector<4x8x16xi1>
    %155 = vector.broadcast %cst_33 : f32 to vector<4x8x16xf32>
    %156 = arith.select %154, %152, %155 : vector<4x8x16xi1>, vector<4x8x16xf32>
    %157 = arith.addf %144, %156 : vector<4x8x16xf32>
    %c7_i32 = arith.constant 7 : i32
    %158 = vector.broadcast %c7_i32 : i32 to vector<8x16xi32>
    %159 = arith.cmpi eq, %10, %158 : vector<8x16xi32>
    %160 = vector.shape_cast %159 : vector<8x16xi1> to vector<1x8x16xi1>
    %161 = vector.extract_strided_slice %61 {offsets = [0, 0, 7], sizes = [4, 8, 1], strides = [1, 1, 1]} : vector<4x8x16xf32> to vector<4x8x1xf32>
    %162 = vector.extract_strided_slice %66 {offsets = [0, 7, 0], sizes = [4, 1, 16], strides = [1, 1, 1]} : vector<4x16x16xf32> to vector<4x1x16xf32>
    %163 = vector.broadcast %161 : vector<4x8x1xf32> to vector<4x8x16xf32>
    %164 = vector.broadcast %162 : vector<4x1x16xf32> to vector<4x8x16xf32>
    %165 = arith.addf %163, %164 : vector<4x8x16xf32>
    %cst_34 = arith.constant 0.000000e+00 : f32
    %166 = vector.shape_cast %160 : vector<1x8x16xi1> to vector<1x8x16xi1>
    %167 = vector.broadcast %166 : vector<1x8x16xi1> to vector<4x8x16xi1>
    %168 = vector.broadcast %cst_34 : f32 to vector<4x8x16xf32>
    %169 = arith.select %167, %165, %168 : vector<4x8x16xi1>, vector<4x8x16xf32>
    %170 = arith.addf %157, %169 : vector<4x8x16xf32>
    %c8_i32 = arith.constant 8 : i32
    %171 = vector.broadcast %c8_i32 : i32 to vector<8x16xi32>
    %172 = arith.cmpi eq, %10, %171 : vector<8x16xi32>
    %173 = vector.shape_cast %172 : vector<8x16xi1> to vector<1x8x16xi1>
    %174 = vector.extract_strided_slice %61 {offsets = [0, 0, 8], sizes = [4, 8, 1], strides = [1, 1, 1]} : vector<4x8x16xf32> to vector<4x8x1xf32>
    %175 = vector.extract_strided_slice %66 {offsets = [0, 8, 0], sizes = [4, 1, 16], strides = [1, 1, 1]} : vector<4x16x16xf32> to vector<4x1x16xf32>
    %176 = vector.broadcast %174 : vector<4x8x1xf32> to vector<4x8x16xf32>
    %177 = vector.broadcast %175 : vector<4x1x16xf32> to vector<4x8x16xf32>
    %178 = arith.addf %176, %177 : vector<4x8x16xf32>
    %cst_35 = arith.constant 0.000000e+00 : f32
    %179 = vector.shape_cast %173 : vector<1x8x16xi1> to vector<1x8x16xi1>
    %180 = vector.broadcast %179 : vector<1x8x16xi1> to vector<4x8x16xi1>
    %181 = vector.broadcast %cst_35 : f32 to vector<4x8x16xf32>
    %182 = arith.select %180, %178, %181 : vector<4x8x16xi1>, vector<4x8x16xf32>
    %183 = arith.addf %170, %182 : vector<4x8x16xf32>
    %c9_i32 = arith.constant 9 : i32
    %184 = vector.broadcast %c9_i32 : i32 to vector<8x16xi32>
    %185 = arith.cmpi eq, %10, %184 : vector<8x16xi32>
    %186 = vector.shape_cast %185 : vector<8x16xi1> to vector<1x8x16xi1>
    %187 = vector.extract_strided_slice %61 {offsets = [0, 0, 9], sizes = [4, 8, 1], strides = [1, 1, 1]} : vector<4x8x16xf32> to vector<4x8x1xf32>
    %188 = vector.extract_strided_slice %66 {offsets = [0, 9, 0], sizes = [4, 1, 16], strides = [1, 1, 1]} : vector<4x16x16xf32> to vector<4x1x16xf32>
    %189 = vector.broadcast %187 : vector<4x8x1xf32> to vector<4x8x16xf32>
    %190 = vector.broadcast %188 : vector<4x1x16xf32> to vector<4x8x16xf32>
    %191 = arith.addf %189, %190 : vector<4x8x16xf32>
    %cst_36 = arith.constant 0.000000e+00 : f32
    %192 = vector.shape_cast %186 : vector<1x8x16xi1> to vector<1x8x16xi1>
    %193 = vector.broadcast %192 : vector<1x8x16xi1> to vector<4x8x16xi1>
    %194 = vector.broadcast %cst_36 : f32 to vector<4x8x16xf32>
    %195 = arith.select %193, %191, %194 : vector<4x8x16xi1>, vector<4x8x16xf32>
    %196 = arith.addf %183, %195 : vector<4x8x16xf32>
    %c10_i32 = arith.constant 10 : i32
    %197 = vector.broadcast %c10_i32 : i32 to vector<8x16xi32>
    %198 = arith.cmpi eq, %10, %197 : vector<8x16xi32>
    %199 = vector.shape_cast %198 : vector<8x16xi1> to vector<1x8x16xi1>
    %200 = vector.extract_strided_slice %61 {offsets = [0, 0, 10], sizes = [4, 8, 1], strides = [1, 1, 1]} : vector<4x8x16xf32> to vector<4x8x1xf32>
    %201 = vector.extract_strided_slice %66 {offsets = [0, 10, 0], sizes = [4, 1, 16], strides = [1, 1, 1]} : vector<4x16x16xf32> to vector<4x1x16xf32>
    %202 = vector.broadcast %200 : vector<4x8x1xf32> to vector<4x8x16xf32>
    %203 = vector.broadcast %201 : vector<4x1x16xf32> to vector<4x8x16xf32>
    %204 = arith.addf %202, %203 : vector<4x8x16xf32>
    %cst_37 = arith.constant 0.000000e+00 : f32
    %205 = vector.shape_cast %199 : vector<1x8x16xi1> to vector<1x8x16xi1>
    %206 = vector.broadcast %205 : vector<1x8x16xi1> to vector<4x8x16xi1>
    %207 = vector.broadcast %cst_37 : f32 to vector<4x8x16xf32>
    %208 = arith.select %206, %204, %207 : vector<4x8x16xi1>, vector<4x8x16xf32>
    %209 = arith.addf %196, %208 : vector<4x8x16xf32>
    %c11_i32 = arith.constant 11 : i32
    %210 = vector.broadcast %c11_i32 : i32 to vector<8x16xi32>
    %211 = arith.cmpi eq, %10, %210 : vector<8x16xi32>
    %212 = vector.shape_cast %211 : vector<8x16xi1> to vector<1x8x16xi1>
    %213 = vector.extract_strided_slice %61 {offsets = [0, 0, 11], sizes = [4, 8, 1], strides = [1, 1, 1]} : vector<4x8x16xf32> to vector<4x8x1xf32>
    %214 = vector.extract_strided_slice %66 {offsets = [0, 11, 0], sizes = [4, 1, 16], strides = [1, 1, 1]} : vector<4x16x16xf32> to vector<4x1x16xf32>
    %215 = vector.broadcast %213 : vector<4x8x1xf32> to vector<4x8x16xf32>
    %216 = vector.broadcast %214 : vector<4x1x16xf32> to vector<4x8x16xf32>
    %217 = arith.addf %215, %216 : vector<4x8x16xf32>
    %cst_38 = arith.constant 0.000000e+00 : f32
    %218 = vector.shape_cast %212 : vector<1x8x16xi1> to vector<1x8x16xi1>
    %219 = vector.broadcast %218 : vector<1x8x16xi1> to vector<4x8x16xi1>
    %220 = vector.broadcast %cst_38 : f32 to vector<4x8x16xf32>
    %221 = arith.select %219, %217, %220 : vector<4x8x16xi1>, vector<4x8x16xf32>
    %222 = arith.addf %209, %221 : vector<4x8x16xf32>
    %c12_i32 = arith.constant 12 : i32
    %223 = vector.broadcast %c12_i32 : i32 to vector<8x16xi32>
    %224 = arith.cmpi eq, %10, %223 : vector<8x16xi32>
    %225 = vector.shape_cast %224 : vector<8x16xi1> to vector<1x8x16xi1>
    %226 = vector.extract_strided_slice %61 {offsets = [0, 0, 12], sizes = [4, 8, 1], strides = [1, 1, 1]} : vector<4x8x16xf32> to vector<4x8x1xf32>
    %227 = vector.extract_strided_slice %66 {offsets = [0, 12, 0], sizes = [4, 1, 16], strides = [1, 1, 1]} : vector<4x16x16xf32> to vector<4x1x16xf32>
    %228 = vector.broadcast %226 : vector<4x8x1xf32> to vector<4x8x16xf32>
    %229 = vector.broadcast %227 : vector<4x1x16xf32> to vector<4x8x16xf32>
    %230 = arith.addf %228, %229 : vector<4x8x16xf32>
    %cst_39 = arith.constant 0.000000e+00 : f32
    %231 = vector.shape_cast %225 : vector<1x8x16xi1> to vector<1x8x16xi1>
    %232 = vector.broadcast %231 : vector<1x8x16xi1> to vector<4x8x16xi1>
    %233 = vector.broadcast %cst_39 : f32 to vector<4x8x16xf32>
    %234 = arith.select %232, %230, %233 : vector<4x8x16xi1>, vector<4x8x16xf32>
    %235 = arith.addf %222, %234 : vector<4x8x16xf32>
    %c13_i32 = arith.constant 13 : i32
    %236 = vector.broadcast %c13_i32 : i32 to vector<8x16xi32>
    %237 = arith.cmpi eq, %10, %236 : vector<8x16xi32>
    %238 = vector.shape_cast %237 : vector<8x16xi1> to vector<1x8x16xi1>
    %239 = vector.extract_strided_slice %61 {offsets = [0, 0, 13], sizes = [4, 8, 1], strides = [1, 1, 1]} : vector<4x8x16xf32> to vector<4x8x1xf32>
    %240 = vector.extract_strided_slice %66 {offsets = [0, 13, 0], sizes = [4, 1, 16], strides = [1, 1, 1]} : vector<4x16x16xf32> to vector<4x1x16xf32>
    %241 = vector.broadcast %239 : vector<4x8x1xf32> to vector<4x8x16xf32>
    %242 = vector.broadcast %240 : vector<4x1x16xf32> to vector<4x8x16xf32>
    %243 = arith.addf %241, %242 : vector<4x8x16xf32>
    %cst_40 = arith.constant 0.000000e+00 : f32
    %244 = vector.shape_cast %238 : vector<1x8x16xi1> to vector<1x8x16xi1>
    %245 = vector.broadcast %244 : vector<1x8x16xi1> to vector<4x8x16xi1>
    %246 = vector.broadcast %cst_40 : f32 to vector<4x8x16xf32>
    %247 = arith.select %245, %243, %246 : vector<4x8x16xi1>, vector<4x8x16xf32>
    %248 = arith.addf %235, %247 : vector<4x8x16xf32>
    %c14_i32 = arith.constant 14 : i32
    %249 = vector.broadcast %c14_i32 : i32 to vector<8x16xi32>
    %250 = arith.cmpi eq, %10, %249 : vector<8x16xi32>
    %251 = vector.shape_cast %250 : vector<8x16xi1> to vector<1x8x16xi1>
    %252 = vector.extract_strided_slice %61 {offsets = [0, 0, 14], sizes = [4, 8, 1], strides = [1, 1, 1]} : vector<4x8x16xf32> to vector<4x8x1xf32>
    %253 = vector.extract_strided_slice %66 {offsets = [0, 14, 0], sizes = [4, 1, 16], strides = [1, 1, 1]} : vector<4x16x16xf32> to vector<4x1x16xf32>
    %254 = vector.broadcast %252 : vector<4x8x1xf32> to vector<4x8x16xf32>
    %255 = vector.broadcast %253 : vector<4x1x16xf32> to vector<4x8x16xf32>
    %256 = arith.addf %254, %255 : vector<4x8x16xf32>
    %cst_41 = arith.constant 0.000000e+00 : f32
    %257 = vector.shape_cast %251 : vector<1x8x16xi1> to vector<1x8x16xi1>
    %258 = vector.broadcast %257 : vector<1x8x16xi1> to vector<4x8x16xi1>
    %259 = vector.broadcast %cst_41 : f32 to vector<4x8x16xf32>
    %260 = arith.select %258, %256, %259 : vector<4x8x16xi1>, vector<4x8x16xf32>
    %261 = arith.addf %248, %260 : vector<4x8x16xf32>
    %c15_i32 = arith.constant 15 : i32
    %262 = vector.broadcast %c15_i32 : i32 to vector<8x16xi32>
    %263 = arith.cmpi eq, %10, %262 : vector<8x16xi32>
    %264 = vector.shape_cast %263 : vector<8x16xi1> to vector<1x8x16xi1>
    %265 = vector.extract_strided_slice %61 {offsets = [0, 0, 15], sizes = [4, 8, 1], strides = [1, 1, 1]} : vector<4x8x16xf32> to vector<4x8x1xf32>
    %266 = vector.extract_strided_slice %66 {offsets = [0, 15, 0], sizes = [4, 1, 16], strides = [1, 1, 1]} : vector<4x16x16xf32> to vector<4x1x16xf32>
    %267 = vector.broadcast %265 : vector<4x8x1xf32> to vector<4x8x16xf32>
    %268 = vector.broadcast %266 : vector<4x1x16xf32> to vector<4x8x16xf32>
    %269 = arith.addf %267, %268 : vector<4x8x16xf32>
    %cst_42 = arith.constant 0.000000e+00 : f32
    %270 = vector.shape_cast %264 : vector<1x8x16xi1> to vector<1x8x16xi1>
    %271 = vector.broadcast %270 : vector<1x8x16xi1> to vector<4x8x16xi1>
    %272 = vector.broadcast %cst_42 : f32 to vector<4x8x16xf32>
    %273 = arith.select %271, %269, %272 : vector<4x8x16xi1>, vector<4x8x16xf32>
    %274 = arith.addf %261, %273 : vector<4x8x16xf32>
    %cst_43 = arith.constant dense<0xFF800000> : vector<4x8xf32>
    %275 = vector.multi_reduction <maximumf>, %274, %cst_43 [2] : vector<4x8x16xf32> to vector<4x8xf32>
    %276 = vector.shape_cast %275 : vector<4x8xf32> to vector<4x8x1xf32>
    %277 = vector.broadcast %276 : vector<4x8x1xf32> to vector<4x8x16xf32>
    %278 = arith.subf %274, %277 : vector<4x8x16xf32>
    %279 = math.exp %278 : vector<4x8x16xf32>
    %cst_44 = arith.constant dense<0.000000e+00> : vector<4x8xf32>
    %280 = vector.multi_reduction <add>, %279, %cst_44 [2] : vector<4x8x16xf32> to vector<4x8xf32>
    %281 = vector.shape_cast %280 : vector<4x8xf32> to vector<4x8x1xf32>
    %282 = tpu.reciprocal %281 {approx = true} : vector<4x8x1xf32> -> vector<4x8x1xf32>
    %283 = vector.broadcast %282 : vector<4x8x1xf32> to vector<4x8x16xf32>
    %284 = arith.mulf %279, %283 : vector<4x8x16xf32>
    %c0_i32_45 = arith.constant 0 : i32
    %285 = vector.broadcast %c0_i32_45 : i32 to vector<8x16xi32>
    %286 = arith.cmpi eq, %10, %285 : vector<8x16xi32>
    %287 = vector.shape_cast %286 : vector<8x16xi1> to vector<1x8x16xi1>
    %cst_46 = arith.constant 0.000000e+00 : f32
    %288 = vector.shape_cast %287 : vector<1x8x16xi1> to vector<1x8x16xi1>
    %289 = vector.broadcast %288 : vector<1x8x16xi1> to vector<4x8x16xi1>
    %290 = vector.broadcast %cst_46 : f32 to vector<4x8x16xf32>
    %291 = arith.select %289, %284, %290 : vector<4x8x16xi1>, vector<4x8x16xf32>
    %cst_47 = arith.constant dense<0.000000e+00> : vector<4x8xf32>
    %292 = vector.multi_reduction <add>, %291, %cst_47 [2] : vector<4x8x16xf32> to vector<4x8xf32>
    %293 = vector.shape_cast %292 : vector<4x8xf32> to vector<4x8x1xf32>
    %c1_i32_48 = arith.constant 1 : i32
    %294 = vector.broadcast %c1_i32_48 : i32 to vector<8x16xi32>
    %295 = arith.cmpi eq, %10, %294 : vector<8x16xi32>
    %296 = vector.shape_cast %295 : vector<8x16xi1> to vector<1x8x16xi1>
    %cst_49 = arith.constant 0.000000e+00 : f32
    %297 = vector.shape_cast %296 : vector<1x8x16xi1> to vector<1x8x16xi1>
    %298 = vector.broadcast %297 : vector<1x8x16xi1> to vector<4x8x16xi1>
    %299 = vector.broadcast %cst_49 : f32 to vector<4x8x16xf32>
    %300 = arith.select %298, %284, %299 : vector<4x8x16xi1>, vector<4x8x16xf32>
    %cst_50 = arith.constant dense<0.000000e+00> : vector<4x8xf32>
    %301 = vector.multi_reduction <add>, %300, %cst_50 [2] : vector<4x8x16xf32> to vector<4x8xf32>
    %302 = vector.shape_cast %301 : vector<4x8xf32> to vector<4x8x1xf32>
    %c2_i32_51 = arith.constant 2 : i32
    %303 = vector.broadcast %c2_i32_51 : i32 to vector<8x16xi32>
    %304 = arith.cmpi eq, %10, %303 : vector<8x16xi32>
    %305 = vector.shape_cast %304 : vector<8x16xi1> to vector<1x8x16xi1>
    %cst_52 = arith.constant 0.000000e+00 : f32
    %306 = vector.shape_cast %305 : vector<1x8x16xi1> to vector<1x8x16xi1>
    %307 = vector.broadcast %306 : vector<1x8x16xi1> to vector<4x8x16xi1>
    %308 = vector.broadcast %cst_52 : f32 to vector<4x8x16xf32>
    %309 = arith.select %307, %284, %308 : vector<4x8x16xi1>, vector<4x8x16xf32>
    %cst_53 = arith.constant dense<0.000000e+00> : vector<4x8xf32>
    %310 = vector.multi_reduction <add>, %309, %cst_53 [2] : vector<4x8x16xf32> to vector<4x8xf32>
    %311 = vector.shape_cast %310 : vector<4x8xf32> to vector<4x8x1xf32>
    %c3_i32_54 = arith.constant 3 : i32
    %312 = vector.broadcast %c3_i32_54 : i32 to vector<8x16xi32>
    %313 = arith.cmpi eq, %10, %312 : vector<8x16xi32>
    %314 = vector.shape_cast %313 : vector<8x16xi1> to vector<1x8x16xi1>
    %cst_55 = arith.constant 0.000000e+00 : f32
    %315 = vector.shape_cast %314 : vector<1x8x16xi1> to vector<1x8x16xi1>
    %316 = vector.broadcast %315 : vector<1x8x16xi1> to vector<4x8x16xi1>
    %317 = vector.broadcast %cst_55 : f32 to vector<4x8x16xf32>
    %318 = arith.select %316, %284, %317 : vector<4x8x16xi1>, vector<4x8x16xf32>
    %cst_56 = arith.constant dense<0.000000e+00> : vector<4x8xf32>
    %319 = vector.multi_reduction <add>, %318, %cst_56 [2] : vector<4x8x16xf32> to vector<4x8xf32>
    %320 = vector.shape_cast %319 : vector<4x8xf32> to vector<4x8x1xf32>
    %c4_i32_57 = arith.constant 4 : i32
    %321 = vector.broadcast %c4_i32_57 : i32 to vector<8x16xi32>
    %322 = arith.cmpi eq, %10, %321 : vector<8x16xi32>
    %323 = vector.shape_cast %322 : vector<8x16xi1> to vector<1x8x16xi1>
    %cst_58 = arith.constant 0.000000e+00 : f32
    %324 = vector.shape_cast %323 : vector<1x8x16xi1> to vector<1x8x16xi1>
    %325 = vector.broadcast %324 : vector<1x8x16xi1> to vector<4x8x16xi1>
    %326 = vector.broadcast %cst_58 : f32 to vector<4x8x16xf32>
    %327 = arith.select %325, %284, %326 : vector<4x8x16xi1>, vector<4x8x16xf32>
    %cst_59 = arith.constant dense<0.000000e+00> : vector<4x8xf32>
    %328 = vector.multi_reduction <add>, %327, %cst_59 [2] : vector<4x8x16xf32> to vector<4x8xf32>
    %329 = vector.shape_cast %328 : vector<4x8xf32> to vector<4x8x1xf32>
    %c5_i32_60 = arith.constant 5 : i32
    %330 = vector.broadcast %c5_i32_60 : i32 to vector<8x16xi32>
    %331 = arith.cmpi eq, %10, %330 : vector<8x16xi32>
    %332 = vector.shape_cast %331 : vector<8x16xi1> to vector<1x8x16xi1>
    %cst_61 = arith.constant 0.000000e+00 : f32
    %333 = vector.shape_cast %332 : vector<1x8x16xi1> to vector<1x8x16xi1>
    %334 = vector.broadcast %333 : vector<1x8x16xi1> to vector<4x8x16xi1>
    %335 = vector.broadcast %cst_61 : f32 to vector<4x8x16xf32>
    %336 = arith.select %334, %284, %335 : vector<4x8x16xi1>, vector<4x8x16xf32>
    %cst_62 = arith.constant dense<0.000000e+00> : vector<4x8xf32>
    %337 = vector.multi_reduction <add>, %336, %cst_62 [2] : vector<4x8x16xf32> to vector<4x8xf32>
    %338 = vector.shape_cast %337 : vector<4x8xf32> to vector<4x8x1xf32>
    %c6_i32_63 = arith.constant 6 : i32
    %339 = vector.broadcast %c6_i32_63 : i32 to vector<8x16xi32>
    %340 = arith.cmpi eq, %10, %339 : vector<8x16xi32>
    %341 = vector.shape_cast %340 : vector<8x16xi1> to vector<1x8x16xi1>
    %cst_64 = arith.constant 0.000000e+00 : f32
    %342 = vector.shape_cast %341 : vector<1x8x16xi1> to vector<1x8x16xi1>
    %343 = vector.broadcast %342 : vector<1x8x16xi1> to vector<4x8x16xi1>
    %344 = vector.broadcast %cst_64 : f32 to vector<4x8x16xf32>
    %345 = arith.select %343, %284, %344 : vector<4x8x16xi1>, vector<4x8x16xf32>
    %cst_65 = arith.constant dense<0.000000e+00> : vector<4x8xf32>
    %346 = vector.multi_reduction <add>, %345, %cst_65 [2] : vector<4x8x16xf32> to vector<4x8xf32>
    %347 = vector.shape_cast %346 : vector<4x8xf32> to vector<4x8x1xf32>
    %c7_i32_66 = arith.constant 7 : i32
    %348 = vector.broadcast %c7_i32_66 : i32 to vector<8x16xi32>
    %349 = arith.cmpi eq, %10, %348 : vector<8x16xi32>
    %350 = vector.shape_cast %349 : vector<8x16xi1> to vector<1x8x16xi1>
    %cst_67 = arith.constant 0.000000e+00 : f32
    %351 = vector.shape_cast %350 : vector<1x8x16xi1> to vector<1x8x16xi1>
    %352 = vector.broadcast %351 : vector<1x8x16xi1> to vector<4x8x16xi1>
    %353 = vector.broadcast %cst_67 : f32 to vector<4x8x16xf32>
    %354 = arith.select %352, %284, %353 : vector<4x8x16xi1>, vector<4x8x16xf32>
    %cst_68 = arith.constant dense<0.000000e+00> : vector<4x8xf32>
    %355 = vector.multi_reduction <add>, %354, %cst_68 [2] : vector<4x8x16xf32> to vector<4x8xf32>
    %356 = vector.shape_cast %355 : vector<4x8xf32> to vector<4x8x1xf32>
    %c8_i32_69 = arith.constant 8 : i32
    %357 = vector.broadcast %c8_i32_69 : i32 to vector<8x16xi32>
    %358 = arith.cmpi eq, %10, %357 : vector<8x16xi32>
    %359 = vector.shape_cast %358 : vector<8x16xi1> to vector<1x8x16xi1>
    %cst_70 = arith.constant 0.000000e+00 : f32
    %360 = vector.shape_cast %359 : vector<1x8x16xi1> to vector<1x8x16xi1>
    %361 = vector.broadcast %360 : vector<1x8x16xi1> to vector<4x8x16xi1>
    %362 = vector.broadcast %cst_70 : f32 to vector<4x8x16xf32>
    %363 = arith.select %361, %284, %362 : vector<4x8x16xi1>, vector<4x8x16xf32>
    %cst_71 = arith.constant dense<0.000000e+00> : vector<4x8xf32>
    %364 = vector.multi_reduction <add>, %363, %cst_71 [2] : vector<4x8x16xf32> to vector<4x8xf32>
    %365 = vector.shape_cast %364 : vector<4x8xf32> to vector<4x8x1xf32>
    %c9_i32_72 = arith.constant 9 : i32
    %366 = vector.broadcast %c9_i32_72 : i32 to vector<8x16xi32>
    %367 = arith.cmpi eq, %10, %366 : vector<8x16xi32>
    %368 = vector.shape_cast %367 : vector<8x16xi1> to vector<1x8x16xi1>
    %cst_73 = arith.constant 0.000000e+00 : f32
    %369 = vector.shape_cast %368 : vector<1x8x16xi1> to vector<1x8x16xi1>
    %370 = vector.broadcast %369 : vector<1x8x16xi1> to vector<4x8x16xi1>
    %371 = vector.broadcast %cst_73 : f32 to vector<4x8x16xf32>
    %372 = arith.select %370, %284, %371 : vector<4x8x16xi1>, vector<4x8x16xf32>
    %cst_74 = arith.constant dense<0.000000e+00> : vector<4x8xf32>
    %373 = vector.multi_reduction <add>, %372, %cst_74 [2] : vector<4x8x16xf32> to vector<4x8xf32>
    %374 = vector.shape_cast %373 : vector<4x8xf32> to vector<4x8x1xf32>
    %c10_i32_75 = arith.constant 10 : i32
    %375 = vector.broadcast %c10_i32_75 : i32 to vector<8x16xi32>
    %376 = arith.cmpi eq, %10, %375 : vector<8x16xi32>
    %377 = vector.shape_cast %376 : vector<8x16xi1> to vector<1x8x16xi1>
    %cst_76 = arith.constant 0.000000e+00 : f32
    %378 = vector.shape_cast %377 : vector<1x8x16xi1> to vector<1x8x16xi1>
    %379 = vector.broadcast %378 : vector<1x8x16xi1> to vector<4x8x16xi1>
    %380 = vector.broadcast %cst_76 : f32 to vector<4x8x16xf32>
    %381 = arith.select %379, %284, %380 : vector<4x8x16xi1>, vector<4x8x16xf32>
    %cst_77 = arith.constant dense<0.000000e+00> : vector<4x8xf32>
    %382 = vector.multi_reduction <add>, %381, %cst_77 [2] : vector<4x8x16xf32> to vector<4x8xf32>
    %383 = vector.shape_cast %382 : vector<4x8xf32> to vector<4x8x1xf32>
    %c11_i32_78 = arith.constant 11 : i32
    %384 = vector.broadcast %c11_i32_78 : i32 to vector<8x16xi32>
    %385 = arith.cmpi eq, %10, %384 : vector<8x16xi32>
    %386 = vector.shape_cast %385 : vector<8x16xi1> to vector<1x8x16xi1>
    %cst_79 = arith.constant 0.000000e+00 : f32
    %387 = vector.shape_cast %386 : vector<1x8x16xi1> to vector<1x8x16xi1>
    %388 = vector.broadcast %387 : vector<1x8x16xi1> to vector<4x8x16xi1>
    %389 = vector.broadcast %cst_79 : f32 to vector<4x8x16xf32>
    %390 = arith.select %388, %284, %389 : vector<4x8x16xi1>, vector<4x8x16xf32>
    %cst_80 = arith.constant dense<0.000000e+00> : vector<4x8xf32>
    %391 = vector.multi_reduction <add>, %390, %cst_80 [2] : vector<4x8x16xf32> to vector<4x8xf32>
    %392 = vector.shape_cast %391 : vector<4x8xf32> to vector<4x8x1xf32>
    %c12_i32_81 = arith.constant 12 : i32
    %393 = vector.broadcast %c12_i32_81 : i32 to vector<8x16xi32>
    %394 = arith.cmpi eq, %10, %393 : vector<8x16xi32>
    %395 = vector.shape_cast %394 : vector<8x16xi1> to vector<1x8x16xi1>
    %cst_82 = arith.constant 0.000000e+00 : f32
    %396 = vector.shape_cast %395 : vector<1x8x16xi1> to vector<1x8x16xi1>
    %397 = vector.broadcast %396 : vector<1x8x16xi1> to vector<4x8x16xi1>
    %398 = vector.broadcast %cst_82 : f32 to vector<4x8x16xf32>
    %399 = arith.select %397, %284, %398 : vector<4x8x16xi1>, vector<4x8x16xf32>
    %cst_83 = arith.constant dense<0.000000e+00> : vector<4x8xf32>
    %400 = vector.multi_reduction <add>, %399, %cst_83 [2] : vector<4x8x16xf32> to vector<4x8xf32>
    %401 = vector.shape_cast %400 : vector<4x8xf32> to vector<4x8x1xf32>
    %c13_i32_84 = arith.constant 13 : i32
    %402 = vector.broadcast %c13_i32_84 : i32 to vector<8x16xi32>
    %403 = arith.cmpi eq, %10, %402 : vector<8x16xi32>
    %404 = vector.shape_cast %403 : vector<8x16xi1> to vector<1x8x16xi1>
    %cst_85 = arith.constant 0.000000e+00 : f32
    %405 = vector.shape_cast %404 : vector<1x8x16xi1> to vector<1x8x16xi1>
    %406 = vector.broadcast %405 : vector<1x8x16xi1> to vector<4x8x16xi1>
    %407 = vector.broadcast %cst_85 : f32 to vector<4x8x16xf32>
    %408 = arith.select %406, %284, %407 : vector<4x8x16xi1>, vector<4x8x16xf32>
    %cst_86 = arith.constant dense<0.000000e+00> : vector<4x8xf32>
    %409 = vector.multi_reduction <add>, %408, %cst_86 [2] : vector<4x8x16xf32> to vector<4x8xf32>
    %410 = vector.shape_cast %409 : vector<4x8xf32> to vector<4x8x1xf32>
    %c14_i32_87 = arith.constant 14 : i32
    %411 = vector.broadcast %c14_i32_87 : i32 to vector<8x16xi32>
    %412 = arith.cmpi eq, %10, %411 : vector<8x16xi32>
    %413 = vector.shape_cast %412 : vector<8x16xi1> to vector<1x8x16xi1>
    %cst_88 = arith.constant 0.000000e+00 : f32
    %414 = vector.shape_cast %413 : vector<1x8x16xi1> to vector<1x8x16xi1>
    %415 = vector.broadcast %414 : vector<1x8x16xi1> to vector<4x8x16xi1>
    %416 = vector.broadcast %cst_88 : f32 to vector<4x8x16xf32>
    %417 = arith.select %415, %284, %416 : vector<4x8x16xi1>, vector<4x8x16xf32>
    %cst_89 = arith.constant dense<0.000000e+00> : vector<4x8xf32>
    %418 = vector.multi_reduction <add>, %417, %cst_89 [2] : vector<4x8x16xf32> to vector<4x8xf32>
    %419 = vector.shape_cast %418 : vector<4x8xf32> to vector<4x8x1xf32>
    %c15_i32_90 = arith.constant 15 : i32
    %420 = vector.broadcast %c15_i32_90 : i32 to vector<8x16xi32>
    %421 = arith.cmpi eq, %10, %420 : vector<8x16xi32>
    %422 = vector.shape_cast %421 : vector<8x16xi1> to vector<1x8x16xi1>
    %cst_91 = arith.constant 0.000000e+00 : f32
    %423 = vector.shape_cast %422 : vector<1x8x16xi1> to vector<1x8x16xi1>
    %424 = vector.broadcast %423 : vector<1x8x16xi1> to vector<4x8x16xi1>
    %425 = vector.broadcast %cst_91 : f32 to vector<4x8x16xf32>
    %426 = arith.select %424, %284, %425 : vector<4x8x16xi1>, vector<4x8x16xf32>
    %cst_92 = arith.constant dense<0.000000e+00> : vector<4x8xf32>
    %427 = vector.multi_reduction <add>, %426, %cst_92 [2] : vector<4x8x16xf32> to vector<4x8xf32>
    %428 = vector.shape_cast %427 : vector<4x8xf32> to vector<4x8x1xf32>
    %429 = tpu.concatenate %293, %302, %311, %320, %329, %338, %347, %356, %365, %374, %383, %392, %401, %410, %419, %428 in 2 : vector<4x8x1xf32>, vector<4x8x1xf32>, vector<4x8x1xf32>, vector<4x8x1xf32>, vector<4x8x1xf32>, vector<4x8x1xf32>, vector<4x8x1xf32>, vector<4x8x1xf32>, vector<4x8x1xf32>, vector<4x8x1xf32>, vector<4x8x1xf32>, vector<4x8x1xf32>, vector<4x8x1xf32>, vector<4x8x1xf32>, vector<4x8x1xf32>, vector<4x8x1xf32> -> vector<4x8x16xf32>
    %430 = arith.truncf %284 : vector<4x8x16xf32> to vector<4x8x16xbf16>
    %431 = arith.truncf %429 : vector<4x8x16xf32> to vector<4x8x16xbf16>
    %432 = vector.extract_strided_slice %430 {offsets = [0, 0, 0], sizes = [1, 8, 16], strides = [1, 1, 1]} : vector<4x8x16xbf16> to vector<1x8x16xbf16>
    %433 = vector.shape_cast %432 : vector<1x8x16xbf16> to vector<8x16xbf16>
    %434 = vector.extract_strided_slice %5 {offsets = [0, 0], sizes = [16, 8], strides = [1, 1]} : vector<16x32xbf16> to vector<16x8xbf16>
    %cst_93 = arith.constant dense<0.000000e+00> : vector<8x8xf32>
    %435 = tpu.matmul %433, %434, %cst_93 {dimension_numbers = #tpu.dot_dimension_numbers<[1], [0], [0], [1], [0, 0, 1, 1], [], []>} : vector<8x16xbf16>, vector<16x8xbf16>, vector<8x8xf32> -> vector<8x8xf32>
    %436 = vector.extract_strided_slice %431 {offsets = [0, 0, 0], sizes = [1, 8, 16], strides = [1, 1, 1]} : vector<4x8x16xbf16> to vector<1x8x16xbf16>
    %437 = vector.shape_cast %436 : vector<1x8x16xbf16> to vector<8x16xbf16>
    %438 = vector.extract_strided_slice %8 {offsets = [0, 0], sizes = [16, 8], strides = [1, 1]} : vector<16x32xbf16> to vector<16x8xbf16>
    %cst_94 = arith.constant dense<0.000000e+00> : vector<8x8xf32>
    %439 = tpu.matmul %437, %438, %cst_94 {dimension_numbers = #tpu.dot_dimension_numbers<[1], [0], [0], [1], [0, 0, 1, 1], [], []>} : vector<8x16xbf16>, vector<16x8xbf16>, vector<8x8xf32> -> vector<8x8xf32>
    %440 = arith.addf %435, %439 : vector<8x8xf32>
    %441 = vector.extract_strided_slice %430 {offsets = [1, 0, 0], sizes = [1, 8, 16], strides = [1, 1, 1]} : vector<4x8x16xbf16> to vector<1x8x16xbf16>
    %442 = vector.shape_cast %441 : vector<1x8x16xbf16> to vector<8x16xbf16>
    %443 = vector.extract_strided_slice %5 {offsets = [0, 8], sizes = [16, 8], strides = [1, 1]} : vector<16x32xbf16> to vector<16x8xbf16>
    %cst_95 = arith.constant dense<0.000000e+00> : vector<8x8xf32>
    %444 = tpu.matmul %442, %443, %cst_95 {dimension_numbers = #tpu.dot_dimension_numbers<[1], [0], [0], [1], [0, 0, 1, 1], [], []>} : vector<8x16xbf16>, vector<16x8xbf16>, vector<8x8xf32> -> vector<8x8xf32>
    %445 = vector.extract_strided_slice %431 {offsets = [1, 0, 0], sizes = [1, 8, 16], strides = [1, 1, 1]} : vector<4x8x16xbf16> to vector<1x8x16xbf16>
    %446 = vector.shape_cast %445 : vector<1x8x16xbf16> to vector<8x16xbf16>
    %447 = vector.extract_strided_slice %8 {offsets = [0, 8], sizes = [16, 8], strides = [1, 1]} : vector<16x32xbf16> to vector<16x8xbf16>
    %cst_96 = arith.constant dense<0.000000e+00> : vector<8x8xf32>
    %448 = tpu.matmul %446, %447, %cst_96 {dimension_numbers = #tpu.dot_dimension_numbers<[1], [0], [0], [1], [0, 0, 1, 1], [], []>} : vector<8x16xbf16>, vector<16x8xbf16>, vector<8x8xf32> -> vector<8x8xf32>
    %449 = arith.addf %444, %448 : vector<8x8xf32>
    %450 = vector.extract_strided_slice %430 {offsets = [2, 0, 0], sizes = [1, 8, 16], strides = [1, 1, 1]} : vector<4x8x16xbf16> to vector<1x8x16xbf16>
    %451 = vector.shape_cast %450 : vector<1x8x16xbf16> to vector<8x16xbf16>
    %452 = vector.extract_strided_slice %5 {offsets = [0, 16], sizes = [16, 8], strides = [1, 1]} : vector<16x32xbf16> to vector<16x8xbf16>
    %cst_97 = arith.constant dense<0.000000e+00> : vector<8x8xf32>
    %453 = tpu.matmul %451, %452, %cst_97 {dimension_numbers = #tpu.dot_dimension_numbers<[1], [0], [0], [1], [0, 0, 1, 1], [], []>} : vector<8x16xbf16>, vector<16x8xbf16>, vector<8x8xf32> -> vector<8x8xf32>
    %454 = vector.extract_strided_slice %431 {offsets = [2, 0, 0], sizes = [1, 8, 16], strides = [1, 1, 1]} : vector<4x8x16xbf16> to vector<1x8x16xbf16>
    %455 = vector.shape_cast %454 : vector<1x8x16xbf16> to vector<8x16xbf16>
    %456 = vector.extract_strided_slice %8 {offsets = [0, 16], sizes = [16, 8], strides = [1, 1]} : vector<16x32xbf16> to vector<16x8xbf16>
    %cst_98 = arith.constant dense<0.000000e+00> : vector<8x8xf32>
    %457 = tpu.matmul %455, %456, %cst_98 {dimension_numbers = #tpu.dot_dimension_numbers<[1], [0], [0], [1], [0, 0, 1, 1], [], []>} : vector<8x16xbf16>, vector<16x8xbf16>, vector<8x8xf32> -> vector<8x8xf32>
    %458 = arith.addf %453, %457 : vector<8x8xf32>
    %459 = vector.extract_strided_slice %430 {offsets = [3, 0, 0], sizes = [1, 8, 16], strides = [1, 1, 1]} : vector<4x8x16xbf16> to vector<1x8x16xbf16>
    %460 = vector.shape_cast %459 : vector<1x8x16xbf16> to vector<8x16xbf16>
    %461 = vector.extract_strided_slice %5 {offsets = [0, 24], sizes = [16, 8], strides = [1, 1]} : vector<16x32xbf16> to vector<16x8xbf16>
    %cst_99 = arith.constant dense<0.000000e+00> : vector<8x8xf32>
    %462 = tpu.matmul %460, %461, %cst_99 {dimension_numbers = #tpu.dot_dimension_numbers<[1], [0], [0], [1], [0, 0, 1, 1], [], []>} : vector<8x16xbf16>, vector<16x8xbf16>, vector<8x8xf32> -> vector<8x8xf32>
    %463 = vector.extract_strided_slice %431 {offsets = [3, 0, 0], sizes = [1, 8, 16], strides = [1, 1, 1]} : vector<4x8x16xbf16> to vector<1x8x16xbf16>
    %464 = vector.shape_cast %463 : vector<1x8x16xbf16> to vector<8x16xbf16>
    %465 = vector.extract_strided_slice %8 {offsets = [0, 24], sizes = [16, 8], strides = [1, 1]} : vector<16x32xbf16> to vector<16x8xbf16>
    %cst_100 = arith.constant dense<0.000000e+00> : vector<8x8xf32>
    %466 = tpu.matmul %464, %465, %cst_100 {dimension_numbers = #tpu.dot_dimension_numbers<[1], [0], [0], [1], [0, 0, 1, 1], [], []>} : vector<8x16xbf16>, vector<16x8xbf16>, vector<8x8xf32> -> vector<8x8xf32>
    %467 = arith.addf %462, %466 : vector<8x8xf32>
    %468 = tpu.concatenate %440, %449, %458, %467 in 1 : vector<8x8xf32>, vector<8x8xf32>, vector<8x8xf32>, vector<8x8xf32> -> vector<8x32xf32>
    %469 = arith.truncf %468 : vector<8x32xf32> to vector<8x32xbf16>
    %c0_101 = arith.constant 0 : index
    %c0_102 = arith.constant 0 : index
    %470 = vector.load %arg9[%c0_101, %c0_102] : memref<32x32xbf16, #tpu.memory_space<vmem>>, vector<32x32xbf16>
    %cst_103 = arith.constant dense<0.000000e+00> : vector<8x32xf32>
    %471 = tpu.matmul %469, %470, %cst_103 {dimension_numbers = #tpu.dot_dimension_numbers<[1], [1], [0], [0], [0, 0, 1, 0], [], []>} : vector<8x32xbf16>, vector<32x32xbf16>, vector<8x32xf32> -> vector<8x32xf32>
    %c0_104 = arith.constant 0 : index
    %c0_105 = arith.constant 0 : index
    %c0_106 = arith.constant 0 : index
    %472 = vector.load %arg10[%c0_104, %c0_105, %c0_106] : memref<1x8x32xf32, #tpu.memory_space<vmem>>, vector<1x8x32xf32>
    %473 = vector.shape_cast %472 : vector<1x8x32xf32> to vector<8x32xf32>
    %474 = vector.shape_cast %471 : vector<8x32xf32> to vector<1x8x32xf32>
    tpu.vector_store %arg10[%c0_104, %c0_105, %c0_106], %474 {strides = array<i32>} : memref<1x8x32xf32, #tpu.memory_space<vmem>>, vector<1x8x32xf32>,
    return
  }
  func.func @transform_0(%arg0: i32) -> (i32, i32, i32) {
    %c0_i32 = arith.constant 0 : i32
    %c0_i32_0 = arith.constant 0 : i32
    %c0_i32_1 = arith.constant 0 : i32
    return %arg0, %c0_i32, %c0_i32_0 : i32, i32, i32
  }
  func.func @transform_1(%arg0: i32) -> (i32, i32, i32) {
    %c0_i32 = arith.constant 0 : i32
    %c0_i32_0 = arith.constant 0 : i32
    %c0_i32_1 = arith.constant 0 : i32
    return %arg0, %c0_i32, %c0_i32_0 : i32, i32, i32
  }
  func.func @transform_2(%arg0: i32) -> (i32, i32, i32) {
    %c0_i32 = arith.constant 0 : i32
    %c0_i32_0 = arith.constant 0 : i32
    %c0_i32_1 = arith.constant 0 : i32
    return %arg0, %c0_i32, %c0_i32_0 : i32, i32, i32
  }
  func.func @transform_3(%arg0: i32) -> (i32, i32, i32) {
    %c0_i32 = arith.constant 0 : i32
    %c0_i32_0 = arith.constant 0 : i32
    %c0_i32_1 = arith.constant 0 : i32
    return %arg0, %c0_i32, %c0_i32_0 : i32, i32, i32
  }
  func.func @transform_4(%arg0: i32) -> (i32, i32, i32) {
    %c0_i32 = arith.constant 0 : i32
    %c0_i32_0 = arith.constant 0 : i32
    %c0_i32_1 = arith.constant 0 : i32
    return %arg0, %c0_i32, %c0_i32_0 : i32, i32, i32
  }
  func.func @transform_5(%arg0: i32) -> (i32, i32) {
    %c0_i32 = arith.constant 0 : i32
    %c0_i32_0 = arith.constant 0 : i32
    %c0_i32_1 = arith.constant 0 : i32
    return %c0_i32, %c0_i32_0 : i32, i32
  }
  func.func @transform_6(%arg0: i32) -> (i32, i32) {
    %c0_i32 = arith.constant 0 : i32
    %c0_i32_0 = arith.constant 0 : i32
    %c0_i32_1 = arith.constant 0 : i32
    return %c0_i32, %c0_i32_0 : i32, i32
  }
  func.func @transform_7(%arg0: i32) -> (i32, i32) {
    %c0_i32 = arith.constant 0 : i32
    %c0_i32_0 = arith.constant 0 : i32
    %c0_i32_1 = arith.constant 0 : i32
    return %c0_i32, %c0_i32_0 : i32, i32
  }
  func.func @transform_8(%arg0: i32) -> (i32, i32) {
    %c0_i32 = arith.constant 0 : i32
    %c0_i32_0 = arith.constant 0 : i32
    %c0_i32_1 = arith.constant 0 : i32
    return %c0_i32, %c0_i32_0 : i32, i32
  }
  func.func @transform_9(%arg0: i32) -> (i32, i32, i32) {
    %c0_i32 = arith.constant 0 : i32
    %c0_i32_0 = arith.constant 0 : i32
    %c0_i32_1 = arith.constant 0 : i32
    return %arg0, %c0_i32, %c0_i32_0 : i32, i32, i32
  }
}

</mosaic_0001>

<llo_original>
// kernel: multi_head_attention_digraph.2
$region0: #{multi_head_attention_digraph.2}
  #allocation0 [shape = 'u32[]', space=smem, size = 0x4, offset = 0x4, fixed_abs, tag = 'smem constant byte address 0x4 - core index']
  #allocation1 [shape = 'u32[144,128]{1,0:T(1,128)}', space=vmem, size = 0x12000, scoped, tag = 'internal scratch']
  %s0 = inlined_call_operand.vmem [shape: f32[16,32], index: 0, kind: input, shape index: {}]
  %s1 = inlined_call_operand.vmem [shape: f32[160,32], index: 1, kind: input, shape index: {}]
  %s2 = inlined_call_operand.vmem [shape: f32[16,160], index: 2, kind: output, shape index: {}]
  %s3 = sld [smem:[#allocation0]]
  $region41: #{multi_head_attention_digraph.2} parent=0
    _
  %s5 = ssub.s32 1, %s3
  %s6 = scalar_select 0, %s5, %s3
  loop: start=0, step=1, limit=4
  $region2: #{multi_head_attention_digraph.2} parent=0 // loop_pre_header
    _
  $region3: #{multi_head_attention_digraph.2} parent=0 // loop_header
    %s8 = sphi 0, %s12
    %p9 = scmp.ge.s32.totalorder %s8, 4
    %s18 = sphi 0, %s20
    %s21 = sphi 0, %s18
    %s22 = sphi 0, %s21
    %s38 = sphi 0, %s22
    %s42 = sphi 0, %s42
    %s44 = sphi 0, %s42
    %s45 = sphi 0, %s44
    %s59 = sphi 0, %s45
    %s65 = sphi 0, %s67
    %s68 = sphi 0, %s65
    %s69 = sphi 0, %s68
    %s85 = sphi 0, %s69
  $region4: #{multi_head_attention_digraph.2} parent=0 // loop_header_branch
    %11 = sbr.rel (%p9) target = $region8
  $region5: #{multi_head_attention_digraph.2} parent=0 // loop_body
    %s13 = ssub.s32 %s8, 1
    %s14 = ssub.s32 %s8, 2
    %s15 = sadd.s32 %s8, 1
    %s16 = ssub.s32 %s8, %s15
    %p17 = scmp.eq.s32.totalorder %s16, 0
    %s19 = sadd.s32 %s18, 1
    %s20 = scalar_select %p17, %s18, %s19
    %p23 = pneg %p17
    %p24 = scmp.eq.s32.totalorder %s8, 1
    %p25 = por %p23, %p24
    %p26 = scmp.ne.s32.totalorder %s18, %s21
    %p27 = scmp.eq.s32.totalorder %s8, 0
    %p28 = por %p26, %p27
    %p29 = scmp.ne.s32.totalorder %s18, %s21
    %p30 = scmp.eq.s32.totalorder %s13, 1
    %p31 = por %p29, %p30
    %p32 = scmp.ne.s32.totalorder %s21, %s22
    %p33 = scmp.eq.s32.totalorder %s13, 0
    %p34 = por %p32, %p33
    %p35 = scmp.ne.s32.totalorder %s21, %s22
    %p36 = scmp.eq.s32.totalorder %s14, 1
    %p37 = por %p35, %p36
    %p39 = scmp.ne.s32.totalorder %s22, %s38
    %p40 = scmp.eq.s32.totalorder %s14, 0
    %p41 = por %p39, %p40
    %s43 = sadd.s32 %s42, 1
    %p46 = scmp.eq.s32.totalorder %s8, 1
    %p47 = scmp.ne.s32.totalorder %s42, %s44
    %p48 = scmp.eq.s32.totalorder %s8, 0
    %p49 = por %p47, %p48
    %p50 = scmp.ne.s32.totalorder %s42, %s44
    %p51 = scmp.eq.s32.totalorder %s13, 1
    %p52 = por %p50, %p51
    %p53 = scmp.ne.s32.totalorder %s44, %s45
    %p54 = scmp.eq.s32.totalorder %s13, 0
    %p55 = por %p53, %p54
    %p56 = scmp.ne.s32.totalorder %s44, %s45
    %p57 = scmp.eq.s32.totalorder %s14, 1
    %p58 = por %p56, %p57
    %p60 = scmp.ne.s32.totalorder %s45, %s59
    %p61 = scmp.eq.s32.totalorder %s14, 0
    %p62 = por %p60, %p61
    %s63 = ssub.s32 %s8, %s15
    %p64 = scmp.eq.s32.totalorder %s63, 0
    %s66 = sadd.s32 %s65, 1
    %s67 = scalar_select %p64, %s65, %s66
    %p70 = pneg %p64
    %p71 = scmp.eq.s32.totalorder %s8, 1
    %p72 = por %p70, %p71
    %p73 = scmp.ne.s32.totalorder %s65, %s68
    %p74 = scmp.eq.s32.totalorder %s8, 0
    %p75 = por %p73, %p74
    %p76 = scmp.ne.s32.totalorder %s65, %s68
    %p77 = scmp.eq.s32.totalorder %s13, 1
    %p78 = por %p76, %p77
    %p79 = scmp.ne.s32.totalorder %s68, %s69
    %p80 = scmp.eq.s32.totalorder %s13, 0
    %p81 = por %p79, %p80
    %p82 = scmp.ne.s32.totalorder %s68, %s69
    %p83 = scmp.eq.s32.totalorder %s14, 1
    %p84 = por %p82, %p83
    %p86 = scmp.ne.s32.totalorder %s69, %s85
    %p87 = scmp.eq.s32.totalorder %s14, 0
    %p88 = por %p86, %p87
    %p89 = scmp.le.s32.totalorder 1, %s8
    %p90 = scmp.lt.s32.totalorder %s8, 3
    %p91 = pnand %p89, %p90
    %p92 = pneg %p91
    // Predicated region
    $region9: #{multi_head_attention_digraph.2} parent=5 // pred_check
      _
    $region10: #{multi_head_attention_digraph.2} parent=5 // pred_check_branch
      %94 = sbr.rel (%p91) target = $region12
    $region11: #{multi_head_attention_digraph.2} parent=5 // pred_region
      %s95 = ssub.s32 %s8, 1
      // Predicated region
      $region13: #{multi_head_attention_digraph.2} parent=11 // pred_check
        %p96 = pneg %p55
      $region14: #{multi_head_attention_digraph.2} parent=11 // pred_check_branch
        %98 = sbr.rel (%p96) target = $region16
      $region15: #{multi_head_attention_digraph.2} parent=11 // pred_region
        _
      $region16: #{multi_head_attention_digraph.2} parent=11 // pred_fallthru
        _
    $region12: #{multi_head_attention_digraph.2} parent=5 // pred_fallthru
      _
    %p99 = scmp.lt.s32.totalorder %s8, 2
    // Predicated region
    $region17: #{multi_head_attention_digraph.2} parent=5 // pred_check
      %p100 = pneg %p99
    $region18: #{multi_head_attention_digraph.2} parent=5 // pred_check_branch
      %102 = sbr.rel (%p100) target = $region20
    $region19: #{multi_head_attention_digraph.2} parent=5 // pred_region
      // Predicated region
      $region21: #{multi_head_attention_digraph.2} parent=19 // pred_check
        %p103 = pneg %p28
      $region22: #{multi_head_attention_digraph.2} parent=19 // pred_check_branch
        %105 = sbr.rel (%p103) target = $region24
      $region23: #{multi_head_attention_digraph.2} parent=19 // pred_region
        %p106 = scmp.lt.s32.totalorder %s8, 1
        %s107 = scalar_select %p106, %s8, 1
        %s108 = smul.addr %s107, 8
        %s109 = scalar_lea.vmem %s0, %s108
      $region24: #{multi_head_attention_digraph.2} parent=19 // pred_fallthru
        _
    $region20: #{multi_head_attention_digraph.2} parent=5 // pred_fallthru
      _
    %p110 = scmp.le.s32.totalorder 1, %s8
    %p111 = scmp.lt.s32.totalorder %s8, 3
    %p112 = pnand %p110, %p111
    %p113 = pneg %p112
    // Predicated region
    $region25: #{multi_head_attention_digraph.2} parent=5 // pred_check
      _
    $region26: #{multi_head_attention_digraph.2} parent=5 // pred_check_branch
      %115 = sbr.rel (%p112) target = $region28
    $region27: #{multi_head_attention_digraph.2} parent=5 // pred_region
      %s116 = ssub.s32 %s8, 1
      %p117 = scmp.lt.s32.totalorder %s13, 1
      %s118 = scalar_select %p117, %s13, 1
      %s119 = smul.addr %s118, 8
      %s120 = scalar_lea.vmem %s0, %s119
      %p121 = pneg %p34
      %p122 = pneg %p31
      %p123 = pneg %p55
      %p124 = pneg %p52
      %p125 = pneg %p81
      %p126 = pneg %p78
      %p127 = scmp.lt.s32.totalorder %s13, 1
      %s128 = scalar_select %p127, %s13, 1
      %s129 = smul.addr %s128, 2
      %s130 = smul.addr %s129, 8
      %s131 = scalar_lea.vmem %s2, %s130
      %p132 = scmp.lt.s32.totalorder %s13, 1
      %s133 = scalar_select %p132, %s13, 1
      %s134 = smul.addr %s133, 8
      %s135 = scalar_lea.vmem %s0, %s134
      %p136 = scmp.lt.s32.totalorder %s13, 1
      %s137 = scalar_select %p136, %s13, 1
      %s138 = smul.addr %s137, 2
      %s139 = smul.addr %s138, 8
      %s140 = scalar_lea.vmem %s2, %s139
      %v141 = vld [vmem:[%s135] sm:$0xff]
      %v142 = vld [vmem:[%s1] sm:$0xff]
      %v143 = vld [vmem:[%s1 + $0x8] sm:$0xff]
      %v144 = vld [vmem:[%s1 + $0x10] sm:$0xff]
      %v145 = vld [vmem:[%s1 + $0x18] sm:$0xff]
      %v146 = vld [vmem:[%s1 + $0x20] sm:$0xff]
      %v147 = vld [vmem:[%s1 + $0x28] sm:$0xff]
      %v148 = vld [vmem:[%s1 + $0x30] sm:$0xff]
      %v149 = vld [vmem:[%s1 + $0x38] sm:$0xff]
      %v150 = vld [vmem:[%s1 + $0x40] sm:$0xff]
      %v151 = vld [vmem:[%s1 + $0x48] sm:$0xff]
      %v152 = vld [vmem:[%s1 + $0x50] sm:$0xff]
      %v153 = vld [vmem:[%s1 + $0x58] sm:$0xff]
      %v154 = vld [vmem:[%s1 + $0x60] sm:$0xff]
      %v155 = vld [vmem:[%s1 + $0x68] sm:$0xff]
      %v156 = vld [vmem:[%s1 + $0x70] sm:$0xff]
      %v157 = vld [vmem:[%s1 + $0x78] sm:$0xff]
      %v158 = vld [vmem:[%s1 + $0x80] sm:$0xff]
      %v159 = vld [vmem:[%s1 + $0x88] sm:$0xff]
      %v160 = vld [vmem:[%s1 + $0x90] sm:$0xff]
      %v161 = vld [vmem:[%s1 + $0x98] sm:$0xff]
      %vm162 = vcmask 261120
      %v164 = vsel %vm162, %v141, 0
      %v167 = vsel %vm162, %v142, 0
      %v170 = vsel %vm162, %v143, 0
      %v173 = vsel %vm162, %v144, 0
      %v176 = vsel %vm162, %v145, 0
      %v179 = vsel %vm162, %v146, 0
      %v182 = vsel %vm162, %v147, 0
      %v185 = vsel %vm162, %v148, 0
      %v188 = vsel %vm162, %v149, 0
      %v191 = vsel %vm162, %v150, 0
      %v194 = vsel %vm162, %v151, 0
      %v197 = vsel %vm162, %v152, 0
      %v200 = vsel %vm162, %v153, 0
      %v203 = vsel %vm162, %v154, 0
      %v206 = vsel %vm162, %v155, 0
      %v209 = vsel %vm162, %v156, 0
      %v212 = vsel %vm162, %v157, 0
      %v215 = vsel %vm162, %v158, 0
      %v218 = vsel %vm162, %v159, 0
      %v221 = vsel %vm162, %v160, 0
      %v224 = vsel %vm162, %v161, 0
      %226 = vmatprep.subr.mxu0 0.0
      %227 = vmatpush1.xpose.msra.mxu0 %v212
      %228 = vmatprep.subr.mxu0 0.0
      %229 = vmatpush1.xpose.msra.mxu0 %v209
      %230 = vmatprep.subr.mxu0 0.0
      %231 = vmatpush1.xpose.msra.mxu0 %v206
      %232 = vmatprep.subr.mxu0 0.0
      %233 = vmatpush1.xpose.msra.mxu0 %v203
      %234 = vmatprep.subr.mxu0 0.0
      %235 = vmatpush1.xpose.msra.mxu0 %v200
      %236 = vmatprep.subr.mxu0 0.0
      %237 = vmatpush1.xpose.msra.mxu0 %v197
      %238 = vmatprep.subr.mxu0 0.0
      %239 = vmatpush1.xpose.msra.mxu0 %v194
      %240 = vmatprep.subr.mxu0 0.0
      %241 = vmatpush1.xpose.msra.mxu0 %v191
      %242 = vmatprep.subr.mxu0 0.0
      %243 = vmatpush1.xpose.msra.mxu0 %v188
      %244 = vmatprep.subr.mxu0 0.0
      %245 = vmatpush1.xpose.msra.mxu0 %v185
      %246 = vmatprep.subr.mxu0 0.0
      %247 = vmatpush1.xpose.msra.mxu0 %v182
      %248 = vmatprep.subr.mxu0 0.0
      %249 = vmatpush1.xpose.msra.mxu0 %v179
      %250 = vmatprep.subr.mxu0 0.0
      %251 = vmatpush1.xpose.msra.mxu0 %v176
      %252 = vmatprep.subr.mxu0 0.0
      %253 = vmatpush1.xpose.msra.mxu0 %v173
      %254 = vmatprep.subr.mxu0 0.0
      %255 = vmatpush1.xpose.msra.mxu0 %v170
      %256 = vmatprep.subr.mxu0 0.0
      %257 = vmatpush1.xpose.msra.mxu0 %v167
      %258 = vmatprep.subr.mxu0 0.0
      %259 = vmatpush2.xpose.msra.mxu0 0.0
      %260 = vmatprep.subr.mxu0 0.0
      %261 = vmatpush2.xpose.msra.mxu0 0.0
      %262 = vmatprep.subr.mxu0 0.0
      %263 = vmatpush2.xpose.msra.mxu0 0.0
      %264 = vmatprep.subr.mxu0 0.0
      %265 = vmatpush2.xpose.msra.mxu0 0.0
      %266 = vmatprep.subr.mxu0 0.0
      %267 = vmatpush2.xpose.msra.mxu0 0.0
      %268 = vmatprep.subr.mxu0 0.0
      %269 = vmatpush2.xpose.msra.mxu0 0.0
      %270 = vmatprep.subr.mxu0 0.0
      %271 = vmatpush2.xpose.msra.mxu0 0.0
      %272 = vmatprep.subr.mxu0 0.0
      %273 = vmatpush2.xpose.msra.mxu0 0.0
      %274 = vmatprep.subr.mxu0 0.0
      %275 = vmatpush2.xpose.msra.mxu0 0.0
      %276 = vmatprep.subr.mxu0 0.0
      %277 = vmatpush2.xpose.msra.mxu0 0.0
      %278 = vmatprep.subr.mxu0 0.0
      %279 = vmatpush2.xpose.msra.mxu0 0.0
      %280 = vmatprep.subr.mxu0 0.0
      %281 = vmatpush2.xpose.msra.mxu0 0.0
      %282 = vmatprep.subr.mxu0 0.0
      %283 = vmatpush2.xpose.msra.mxu0 %v224
      %284 = vmatprep.subr.mxu0 0.0
      %285 = vmatpush2.xpose.msra.mxu0 %v221
      %286 = vmatprep.subr.mxu0 0.0
      %287 = vmatpush2.xpose.msra.mxu0 %v218
      %288 = vmatprep.subr.mxu0 0.0
      %289 = vmatpush2.xpose.msra.mxu0 %v215
      %290 = vmatprep.mubr.f32.mxu0 0.0
      %291 = vmatmul.mubr.f32.gmra.mxu0 %v164
      %v292 = vpop.f32.mrf.mxu0
      %v293 = vadd.f32 0.0, %v292
      %v294 = vpop.f32.mrf.mxu0
      %v295 = vadd.f32 0.0, %v294
      %296 = vdwg.mxu0
      %297 = vst [vmem:[%s140] sm:$0xff] %v293
      %298 = vst.msk [vmem:[%s140 + $0x8] sm:$0xff] %vm162, %v295
      %p299 = scmp.lt.s32.totalorder %s13, 1
      %s300 = scalar_select %p299, %s13, 1
      %s301 = smul.addr %s300, 2
      %s302 = smul.addr %s301, 8
      %s303 = scalar_lea.vmem %s2, %s302
      // Predicated region
      $region29: #{multi_head_attention_digraph.2} parent=27 // pred_check
        %p304 = pneg %p78
      $region30: #{multi_head_attention_digraph.2} parent=27 // pred_check_branch
        %306 = sbr.rel (%p304) target = $region32
      $region31: #{multi_head_attention_digraph.2} parent=27 // pred_region
        _
      $region32: #{multi_head_attention_digraph.2} parent=27 // pred_fallthru
        _
    $region28: #{multi_head_attention_digraph.2} parent=5 // pred_fallthru
      _
    %p307 = scmp.le.s32.totalorder 2, %s8
    // Predicated region
    $region33: #{multi_head_attention_digraph.2} parent=5 // pred_check
      %p308 = pneg %p307
    $region34: #{multi_head_attention_digraph.2} parent=5 // pred_check_branch
      %310 = sbr.rel (%p308) target = $region36
    $region35: #{multi_head_attention_digraph.2} parent=5 // pred_region
      %s311 = ssub.s32 %s8, 2
      // Predicated region
      $region37: #{multi_head_attention_digraph.2} parent=35 // pred_check
        %p312 = pneg %p84
      $region38: #{multi_head_attention_digraph.2} parent=35 // pred_check_branch
        %314 = sbr.rel (%p312) target = $region40
      $region39: #{multi_head_attention_digraph.2} parent=35 // pred_region
        %p315 = scmp.lt.s32.totalorder %s14, 1
        %s316 = scalar_select %p315, %s14, 1
        %s317 = smul.addr %s316, 2
        %s318 = smul.addr %s317, 8
        %s319 = scalar_lea.vmem %s2, %s318
      $region40: #{multi_head_attention_digraph.2} parent=35 // pred_fallthru
        _
    $region36: #{multi_head_attention_digraph.2} parent=5 // pred_fallthru
      _
  $region6: #{multi_head_attention_digraph.2} parent=0 // loop_footer
    %s12 = sadd.s32 1, %s8
  $region7: #{multi_head_attention_digraph.2} parent=0 // loop_footer_branch
    %7 = sbr.rel target = $region3
  $region8: #{multi_head_attention_digraph.2} parent=0 // loop_exit
    _

// kernel: multi_head_attention_digraph.3
$region0: #{multi_head_attention_digraph.3}
  #allocation0 [shape = 'u32[]', space=smem, size = 0x4, offset = 0x4, fixed_abs, tag = 'smem constant byte address 0x4 - core index']
  #allocation1 [shape = 'u32[144,128]{1,0:T(1,128)}', space=vmem, size = 0x12000, scoped, tag = 'internal scratch']
  %s0 = inlined_call_operand.vmem [shape: bf16[2,8,32], index: 0, kind: input, shape index: {}]
  %s1 = inlined_call_operand.vmem [shape: bf16[2,16,32], index: 1, kind: input, shape index: {}]
  %s2 = inlined_call_operand.vmem [shape: bf16[2,16,32], index: 2, kind: input, shape index: {}]
  %s3 = inlined_call_operand.vmem [shape: s32[2,8,16], index: 3, kind: input, shape index: {}]
  %s4 = inlined_call_operand.vmem [shape: f32[2,8,16], index: 4, kind: input, shape index: {}]
  %s5 = inlined_call_operand.vmem [shape: bf16[16,32], index: 5, kind: input, shape index: {}]
  %s6 = inlined_call_operand.vmem [shape: bf16[16,32], index: 6, kind: input, shape index: {}]
  %s7 = inlined_call_operand.vmem [shape: bf16[16,32], index: 7, kind: input, shape index: {}]
  %s8 = inlined_call_operand.vmem [shape: bf16[32,32], index: 8, kind: input, shape index: {}]
  %s9 = inlined_call_operand.hbm [shape: f32[2,8,32], index: 9, kind: output, shape index: {}]
  %s10 = sld [smem:[#allocation0]]
  $region69: #{multi_head_attention_digraph.3} parent=0
    _
  %s12 = ssub.s32 1, %s10
  %s13 = scalar_select 0, %s12, %s10
  $region1: #{multi_head_attention_digraph.3} parent=0
    #allocation2 [shape = 'u8[8192]{0}', space=vmem, size = 0x2000, scoped, tag = 'output window, operand 0']
    #allocation3 [shape = 's32[2]{0}', space=sflag, size = 0x8, scoped, tag = 'scoped memory for multi_head_attention_digraph.3']
    %14 = vsyncpa [#allocation3], 0
    %s15 = scalar_lea.sflag [#allocation3], 1
    %16 = vsyncpa %s15, 0
    loop: start=0, step=1, limit=4
    $region2: #{multi_head_attention_digraph.3} parent=1 // loop_pre_header
      _
    $region3: #{multi_head_attention_digraph.3} parent=1 // loop_header
      %s18 = sphi 0, %s22
      %p19 = scmp.ge.s32.totalorder %s18, 4
      %s28 = sphi 0, %s30
      %s31 = sphi 0, %s28
      %s32 = sphi 0, %s31
      %s48 = sphi 0, %s32
      %s54 = sphi 0, %s56
      %s57 = sphi 0, %s54
      %s58 = sphi 0, %s57
      %s74 = sphi 0, %s58
      %s80 = sphi 0, %s82
      %s83 = sphi 0, %s80
      %s84 = sphi 0, %s83
      %s100 = sphi 0, %s84
      %s106 = sphi 0, %s108
      %s109 = sphi 0, %s106
      %s110 = sphi 0, %s109
      %s126 = sphi 0, %s110
      %s132 = sphi 0, %s134
      %s135 = sphi 0, %s132
      %s136 = sphi 0, %s135
      %s152 = sphi 0, %s136
      %s156 = sphi 0, %s156
      %s158 = sphi 0, %s156
      %s159 = sphi 0, %s158
      %s173 = sphi 0, %s159
      %s177 = sphi 0, %s177
      %s179 = sphi 0, %s177
      %s180 = sphi 0, %s179
      %s194 = sphi 0, %s180
      %s198 = sphi 0, %s198
      %s200 = sphi 0, %s198
      %s201 = sphi 0, %s200
      %s215 = sphi 0, %s201
      %s219 = sphi 0, %s219
      %s221 = sphi 0, %s219
      %s222 = sphi 0, %s221
      %s236 = sphi 0, %s222
      %s242 = sphi 0, %s244
      %s245 = sphi 0, %s242
      %s246 = sphi 0, %s245
      %s262 = sphi 0, %s246
    $region4: #{multi_head_attention_digraph.3} parent=1 // loop_header_branch
      %21 = sbr.rel (%p19) target = $region8
    $region5: #{multi_head_attention_digraph.3} parent=1 // loop_body
      %s23 = ssub.s32 %s18, 1
      %s24 = ssub.s32 %s18, 2
      %s25 = sadd.s32 %s18, 1
      %s26 = ssub.s32 %s18, %s25
      %p27 = scmp.eq.s32.totalorder %s26, 0
      %s29 = sadd.s32 %s28, 1
      %s30 = scalar_select %p27, %s28, %s29
      %p33 = pneg %p27
      %p34 = scmp.eq.s32.totalorder %s18, 1
      %p35 = por %p33, %p34
      %p36 = scmp.ne.s32.totalorder %s28, %s31
      %p37 = scmp.eq.s32.totalorder %s18, 0
      %p38 = por %p36, %p37
      %p39 = scmp.ne.s32.totalorder %s28, %s31
      %p40 = scmp.eq.s32.totalorder %s23, 1
      %p41 = por %p39, %p40
      %p42 = scmp.ne.s32.totalorder %s31, %s32
      %p43 = scmp.eq.s32.totalorder %s23, 0
      %p44 = por %p42, %p43
      %p45 = scmp.ne.s32.totalorder %s31, %s32
      %p46 = scmp.eq.s32.totalorder %s24, 1
      %p47 = por %p45, %p46
      %p49 = scmp.ne.s32.totalorder %s32, %s48
      %p50 = scmp.eq.s32.totalorder %s24, 0
      %p51 = por %p49, %p50
      %s52 = ssub.s32 %s18, %s25
      %p53 = scmp.eq.s32.totalorder %s52, 0
      %s55 = sadd.s32 %s54, 1
      %s56 = scalar_select %p53, %s54, %s55
      %p59 = pneg %p53
      %p60 = scmp.eq.s32.totalorder %s18, 1
      %p61 = por %p59, %p60
      %p62 = scmp.ne.s32.totalorder %s54, %s57
      %p63 = scmp.eq.s32.totalorder %s18, 0
      %p64 = por %p62, %p63
      %p65 = scmp.ne.s32.totalorder %s54, %s57
      %p66 = scmp.eq.s32.totalorder %s23, 1
      %p67 = por %p65, %p66
      %p68 = scmp.ne.s32.totalorder %s57, %s58
      %p69 = scmp.eq.s32.totalorder %s23, 0
      %p70 = por %p68, %p69
      %p71 = scmp.ne.s32.totalorder %s57, %s58
      %p72 = scmp.eq.s32.totalorder %s24, 1
      %p73 = por %p71, %p72
      %p75 = scmp.ne.s32.totalorder %s58, %s74
      %p76 = scmp.eq.s32.totalorder %s24, 0
      %p77 = por %p75, %p76
      %s78 = ssub.s32 %s18, %s25
      %p79 = scmp.eq.s32.totalorder %s78, 0
      %s81 = sadd.s32 %s80, 1
      %s82 = scalar_select %p79, %s80, %s81
      %p85 = pneg %p79
      %p86 = scmp.eq.s32.totalorder %s18, 1
      %p87 = por %p85, %p86
      %p88 = scmp.ne.s32.totalorder %s80, %s83
      %p89 = scmp.eq.s32.totalorder %s18, 0
      %p90 = por %p88, %p89
      %p91 = scmp.ne.s32.totalorder %s80, %s83
      %p92 = scmp.eq.s32.totalorder %s23, 1
      %p93 = por %p91, %p92
      %p94 = scmp.ne.s32.totalorder %s83, %s84
      %p95 = scmp.eq.s32.totalorder %s23, 0
      %p96 = por %p94, %p95
      %p97 = scmp.ne.s32.totalorder %s83, %s84
      %p98 = scmp.eq.s32.totalorder %s24, 1
      %p99 = por %p97, %p98
      %p101 = scmp.ne.s32.totalorder %s84, %s100
      %p102 = scmp.eq.s32.totalorder %s24, 0
      %p103 = por %p101, %p102
      %s104 = ssub.s32 %s18, %s25
      %p105 = scmp.eq.s32.totalorder %s104, 0
      %s107 = sadd.s32 %s106, 1
      %s108 = scalar_select %p105, %s106, %s107
      %p111 = pneg %p105
      %p112 = scmp.eq.s32.totalorder %s18, 1
      %p113 = por %p111, %p112
      %p114 = scmp.ne.s32.totalorder %s106, %s109
      %p115 = scmp.eq.s32.totalorder %s18, 0
      %p116 = por %p114, %p115
      %p117 = scmp.ne.s32.totalorder %s106, %s109
      %p118 = scmp.eq.s32.totalorder %s23, 1
      %p119 = por %p117, %p118
      %p120 = scmp.ne.s32.totalorder %s109, %s110
      %p121 = scmp.eq.s32.totalorder %s23, 0
      %p122 = por %p120, %p121
      %p123 = scmp.ne.s32.totalorder %s109, %s110
      %p124 = scmp.eq.s32.totalorder %s24, 1
      %p125 = por %p123, %p124
      %p127 = scmp.ne.s32.totalorder %s110, %s126
      %p128 = scmp.eq.s32.totalorder %s24, 0
      %p129 = por %p127, %p128
      %s130 = ssub.s32 %s18, %s25
      %p131 = scmp.eq.s32.totalorder %s130, 0
      %s133 = sadd.s32 %s132, 1
      %s134 = scalar_select %p131, %s132, %s133
      %p137 = pneg %p131
      %p138 = scmp.eq.s32.totalorder %s18, 1
      %p139 = por %p137, %p138
      %p140 = scmp.ne.s32.totalorder %s132, %s135
      %p141 = scmp.eq.s32.totalorder %s18, 0
      %p142 = por %p140, %p141
      %p143 = scmp.ne.s32.totalorder %s132, %s135
      %p144 = scmp.eq.s32.totalorder %s23, 1
      %p145 = por %p143, %p144
      %p146 = scmp.ne.s32.totalorder %s135, %s136
      %p147 = scmp.eq.s32.totalorder %s23, 0
      %p148 = por %p146, %p147
      %p149 = scmp.ne.s32.totalorder %s135, %s136
      %p150 = scmp.eq.s32.totalorder %s24, 1
      %p151 = por %p149, %p150
      %p153 = scmp.ne.s32.totalorder %s136, %s152
      %p154 = scmp.eq.s32.totalorder %s24, 0
      %p155 = por %p153, %p154
      %s157 = sadd.s32 %s156, 1
      %p160 = scmp.eq.s32.totalorder %s18, 1
      %p161 = scmp.ne.s32.totalorder %s156, %s158
      %p162 = scmp.eq.s32.totalorder %s18, 0
      %p163 = por %p161, %p162
      %p164 = scmp.ne.s32.totalorder %s156, %s158
      %p165 = scmp.eq.s32.totalorder %s23, 1
      %p166 = por %p164, %p165
      %p167 = scmp.ne.s32.totalorder %s158, %s159
      %p168 = scmp.eq.s32.totalorder %s23, 0
      %p169 = por %p167, %p168
      %p170 = scmp.ne.s32.totalorder %s158, %s159
      %p171 = scmp.eq.s32.totalorder %s24, 1
      %p172 = por %p170, %p171
      %p174 = scmp.ne.s32.totalorder %s159, %s173
      %p175 = scmp.eq.s32.totalorder %s24, 0
      %p176 = por %p174, %p175
      %s178 = sadd.s32 %s177, 1
      %p181 = scmp.eq.s32.totalorder %s18, 1
      %p182 = scmp.ne.s32.totalorder %s177, %s179
      %p183 = scmp.eq.s32.totalorder %s18, 0
      %p184 = por %p182, %p183
      %p185 = scmp.ne.s32.totalorder %s177, %s179
      %p186 = scmp.eq.s32.totalorder %s23, 1
      %p187 = por %p185, %p186
      %p188 = scmp.ne.s32.totalorder %s179, %s180
      %p189 = scmp.eq.s32.totalorder %s23, 0
      %p190 = por %p188, %p189
      %p191 = scmp.ne.s32.totalorder %s179, %s180
      %p192 = scmp.eq.s32.totalorder %s24, 1
      %p193 = por %p191, %p192
      %p195 = scmp.ne.s32.totalorder %s180, %s194
      %p196 = scmp.eq.s32.totalorder %s24, 0
      %p197 = por %p195, %p196
      %s199 = sadd.s32 %s198, 1
      %p202 = scmp.eq.s32.totalorder %s18, 1
      %p203 = scmp.ne.s32.totalorder %s198, %s200
      %p204 = scmp.eq.s32.totalorder %s18, 0
      %p205 = por %p203, %p204
      %p206 = scmp.ne.s32.totalorder %s198, %s200
      %p207 = scmp.eq.s32.totalorder %s23, 1
      %p208 = por %p206, %p207
      %p209 = scmp.ne.s32.totalorder %s200, %s201
      %p210 = scmp.eq.s32.totalorder %s23, 0
      %p211 = por %p209, %p210
      %p212 = scmp.ne.s32.totalorder %s200, %s201
      %p213 = scmp.eq.s32.totalorder %s24, 1
      %p214 = por %p212, %p213
      %p216 = scmp.ne.s32.totalorder %s201, %s215
      %p217 = scmp.eq.s32.totalorder %s24, 0
      %p218 = por %p216, %p217
      %s220 = sadd.s32 %s219, 1
      %p223 = scmp.eq.s32.totalorder %s18, 1
      %p224 = scmp.ne.s32.totalorder %s219, %s221
      %p225 = scmp.eq.s32.totalorder %s18, 0
      %p226 = por %p224, %p225
      %p227 = scmp.ne.s32.totalorder %s219, %s221
      %p228 = scmp.eq.s32.totalorder %s23, 1
      %p229 = por %p227, %p228
      %p230 = scmp.ne.s32.totalorder %s221, %s222
      %p231 = scmp.eq.s32.totalorder %s23, 0
      %p232 = por %p230, %p231
      %p233 = scmp.ne.s32.totalorder %s221, %s222
      %p234 = scmp.eq.s32.totalorder %s24, 1
      %p235 = por %p233, %p234
      %p237 = scmp.ne.s32.totalorder %s222, %s236
      %p238 = scmp.eq.s32.totalorder %s24, 0
      %p239 = por %p237, %p238
      %s240 = ssub.s32 %s18, %s25
      %p241 = scmp.eq.s32.totalorder %s240, 0
      %s243 = sadd.s32 %s242, 1
      %s244 = scalar_select %p241, %s242, %s243
      %p247 = pneg %p241
      %p248 = scmp.eq.s32.totalorder %s18, 1
      %p249 = por %p247, %p248
      %p250 = scmp.ne.s32.totalorder %s242, %s245
      %p251 = scmp.eq.s32.totalorder %s18, 0
      %p252 = por %p250, %p251
      %p253 = scmp.ne.s32.totalorder %s242, %s245
      %p254 = scmp.eq.s32.totalorder %s23, 1
      %p255 = por %p253, %p254
      %p256 = scmp.ne.s32.totalorder %s245, %s246
      %p257 = scmp.eq.s32.totalorder %s23, 0
      %p258 = por %p256, %p257
      %p259 = scmp.ne.s32.totalorder %s245, %s246
      %p260 = scmp.eq.s32.totalorder %s24, 1
      %p261 = por %p259, %p260
      %p263 = scmp.ne.s32.totalorder %s246, %s262
      %p264 = scmp.eq.s32.totalorder %s24, 0
      %p265 = por %p263, %p264
      %p266 = scmp.le.s32.totalorder 1, %s18
      %p267 = scmp.lt.s32.totalorder %s18, 3
      %p268 = pnand %p266, %p267
      %p269 = pneg %p268
      // Predicated region
      $region9: #{multi_head_attention_digraph.3} parent=5 // pred_check
        _
      $region10: #{multi_head_attention_digraph.3} parent=5 // pred_check_branch
        %271 = sbr.rel (%p268) target = $region12
      $region11: #{multi_head_attention_digraph.3} parent=5 // pred_region
        %s272 = ssub.s32 %s18, 1
        // Predicated region
        $region13: #{multi_head_attention_digraph.3} parent=11 // pred_check
          %p273 = pneg %p169
        $region14: #{multi_head_attention_digraph.3} parent=11 // pred_check_branch
          %275 = sbr.rel (%p273) target = $region16
        $region15: #{multi_head_attention_digraph.3} parent=11 // pred_region
          _
        $region16: #{multi_head_attention_digraph.3} parent=11 // pred_fallthru
          _
        // Predicated region
        $region17: #{multi_head_attention_digraph.3} parent=11 // pred_check
          %p276 = pneg %p190
        $region18: #{multi_head_attention_digraph.3} parent=11 // pred_check_branch
          %278 = sbr.rel (%p276) target = $region20
        $region19: #{multi_head_attention_digraph.3} parent=11 // pred_region
          _
        $region20: #{multi_head_attention_digraph.3} parent=11 // pred_fallthru
          _
        // Predicated region
        $region21: #{multi_head_attention_digraph.3} parent=11 // pred_check
          %p279 = pneg %p211
        $region22: #{multi_head_attention_digraph.3} parent=11 // pred_check_branch
          %281 = sbr.rel (%p279) target = $region24
        $region23: #{multi_head_attention_digraph.3} parent=11 // pred_region
          _
        $region24: #{multi_head_attention_digraph.3} parent=11 // pred_fallthru
          _
        // Predicated region
        $region25: #{multi_head_attention_digraph.3} parent=11 // pred_check
          %p282 = pneg %p232
        $region26: #{multi_head_attention_digraph.3} parent=11 // pred_check_branch
          %284 = sbr.rel (%p282) target = $region28
        $region27: #{multi_head_attention_digraph.3} parent=11 // pred_region
          _
        $region28: #{multi_head_attention_digraph.3} parent=11 // pred_fallthru
          _
      $region12: #{multi_head_attention_digraph.3} parent=5 // pred_fallthru
        _
      %p285 = scmp.lt.s32.totalorder %s18, 2
      // Predicated region
      $region29: #{multi_head_attention_digraph.3} parent=5 // pred_check
        %p286 = pneg %p285
      $region30: #{multi_head_attention_digraph.3} parent=5 // pred_check_branch
        %288 = sbr.rel (%p286) target = $region32
      $region31: #{multi_head_attention_digraph.3} parent=5 // pred_region
        // Predicated region
        $region33: #{multi_head_attention_digraph.3} parent=31 // pred_check
          %p289 = pneg %p38
        $region34: #{multi_head_attention_digraph.3} parent=31 // pred_check_branch
          %291 = sbr.rel (%p289) target = $region36
        $region35: #{multi_head_attention_digraph.3} parent=31 // pred_region
          %p292 = scmp.lt.s32.totalorder %s18, 1
          %s293 = scalar_select %p292, %s18, 1
          %s294 = smul.addr %s293, 4
          %s295 = scalar_lea.vmem %s0, %s294
        $region36: #{multi_head_attention_digraph.3} parent=31 // pred_fallthru
          _
        // Predicated region
        $region37: #{multi_head_attention_digraph.3} parent=31 // pred_check
          %p296 = pneg %p64
        $region38: #{multi_head_attention_digraph.3} parent=31 // pred_check_branch
          %298 = sbr.rel (%p296) target = $region40
        $region39: #{multi_head_attention_digraph.3} parent=31 // pred_region
          %p299 = scmp.lt.s32.totalorder %s18, 1
          %s300 = scalar_select %p299, %s18, 1
          %s301 = smul.addr %s300, 2
          %s302 = smul.addr %s301, 4
          %s303 = scalar_lea.vmem %s1, %s302
        $region40: #{multi_head_attention_digraph.3} parent=31 // pred_fallthru
          _
        // Predicated region
        $region41: #{multi_head_attention_digraph.3} parent=31 // pred_check
          %p304 = pneg %p90
        $region42: #{multi_head_attention_digraph.3} parent=31 // pred_check_branch
          %306 = sbr.rel (%p304) target = $region44
        $region43: #{multi_head_attention_digraph.3} parent=31 // pred_region
          %p307 = scmp.lt.s32.totalorder %s18, 1
          %s308 = scalar_select %p307, %s18, 1
          %s309 = smul.addr %s308, 2
          %s310 = smul.addr %s309, 4
          %s311 = scalar_lea.vmem %s2, %s310
        $region44: #{multi_head_attention_digraph.3} parent=31 // pred_fallthru
          _
        // Predicated region
        $region45: #{multi_head_attention_digraph.3} parent=31 // pred_check
          %p312 = pneg %p116
        $region46: #{multi_head_attention_digraph.3} parent=31 // pred_check_branch
          %314 = sbr.rel (%p312) target = $region48
        $region47: #{multi_head_attention_digraph.3} parent=31 // pred_region
          %p315 = scmp.lt.s32.totalorder %s18, 1
          %s316 = scalar_select %p315, %s18, 1
          %s317 = smul.addr %s316, 8
          %s318 = scalar_lea.vmem %s3, %s317
        $region48: #{multi_head_attention_digraph.3} parent=31 // pred_fallthru
          _
        // Predicated region
        $region49: #{multi_head_attention_digraph.3} parent=31 // pred_check
          %p319 = pneg %p142
        $region50: #{multi_head_attention_digraph.3} parent=31 // pred_check_branch
          %321 = sbr.rel (%p319) target = $region52
        $region51: #{multi_head_attention_digraph.3} parent=31 // pred_region
          %p322 = scmp.lt.s32.totalorder %s18, 1
          %s323 = scalar_select %p322, %s18, 1
          %s324 = smul.addr %s323, 8
          %s325 = scalar_lea.vmem %s4, %s324
        $region52: #{multi_head_attention_digraph.3} parent=31 // pred_fallthru
          _
      $region32: #{multi_head_attention_digraph.3} parent=5 // pred_fallthru
        _
      %p326 = scmp.le.s32.totalorder 1, %s18
      %p327 = scmp.lt.s32.totalorder %s18, 3
      %p328 = pnand %p326, %p327
      %p329 = pneg %p328
      // Predicated region
      $region53: #{multi_head_attention_digraph.3} parent=5 // pred_check
        _
      $region54: #{multi_head_attention_digraph.3} parent=5 // pred_check_branch
        %331 = sbr.rel (%p328) target = $region56
      $region55: #{multi_head_attention_digraph.3} parent=5 // pred_region
        %s332 = ssub.s32 %s18, 1
        %p333 = scmp.lt.s32.totalorder %s23, 1
        %s334 = scalar_select %p333, %s23, 1
        %s335 = smul.addr %s334, 4
        %s336 = scalar_lea.vmem %s0, %s335
        %p337 = pneg %p44
        %p338 = pneg %p41
        %p339 = scmp.lt.s32.totalorder %s23, 1
        %s340 = scalar_select %p339, %s23, 1
        %s341 = smul.addr %s340, 2
        %s342 = smul.addr %s341, 4
        %s343 = scalar_lea.vmem %s1, %s342
        %p344 = pneg %p70
        %p345 = pneg %p67
        %p346 = scmp.lt.s32.totalorder %s23, 1
        %s347 = scalar_select %p346, %s23, 1
        %s348 = smul.addr %s347, 2
        %s349 = smul.addr %s348, 4
        %s350 = scalar_lea.vmem %s2, %s349
        %p351 = pneg %p96
        %p352 = pneg %p93
        %p353 = scmp.lt.s32.totalorder %s23, 1
        %s354 = scalar_select %p353, %s23, 1
        %s355 = smul.addr %s354, 8
        %s356 = scalar_lea.vmem %s3, %s355
        %p357 = pneg %p122
        %p358 = pneg %p119
        %p359 = scmp.lt.s32.totalorder %s23, 1
        %s360 = scalar_select %p359, %s23, 1
        %s361 = smul.addr %s360, 8
        %s362 = scalar_lea.vmem %s4, %s361
        %p363 = pneg %p148
        %p364 = pneg %p145
        %p365 = pneg %p169
        %p366 = pneg %p166
        %p367 = pneg %p190
        %p368 = pneg %p187
        %p369 = pneg %p211
        %p370 = pneg %p208
        %p371 = pneg %p232
        %p372 = pneg %p229
        %p373 = pneg %p258
        %p374 = pneg %p255
        %s375 = sand.u32 %s245, 1
        %s376 = scalar_lea.sflag [#allocation3], %s375
        %s377 = sand.u32 %s245, 1
        %s378 = smul.addr %s377, 8
        %s379 = scalar_lea.vmem [#allocation2], %s378
        %p380 = scmp.lt.s32.totalorder %s23, 1
        %s381 = scalar_select %p380, %s23, 1
        %s382 = smul.addr %s381, 4
        %s383 = scalar_lea.vmem %s0, %s382
        %p384 = scmp.lt.s32.totalorder %s23, 1
        %s385 = scalar_select %p384, %s23, 1
        %s386 = smul.addr %s385, 2
        %s387 = smul.addr %s386, 4
        %s388 = scalar_lea.vmem %s1, %s387
        %p389 = scmp.lt.s32.totalorder %s23, 1
        %s390 = scalar_select %p389, %s23, 1
        %s391 = smul.addr %s390, 2
        %s392 = smul.addr %s391, 4
        %s393 = scalar_lea.vmem %s2, %s392
        %p394 = scmp.lt.s32.totalorder %s23, 1
        %s395 = scalar_select %p394, %s23, 1
        %s396 = smul.addr %s395, 8
        %s397 = scalar_lea.vmem %s3, %s396
        %p398 = scmp.lt.s32.totalorder %s23, 1
        %s399 = scalar_select %p398, %s23, 1
        %s400 = smul.addr %s399, 8
        %s401 = scalar_lea.vmem %s4, %s400
        %v403 = vld [vmem:[%s383] sm:$0xf]
        %v404 = vld [vmem:[%s388] sm:$0xf]
        %v405 = vld [vmem:[%s388 + $0x4] sm:$0xf]
        %v406 = vld [vmem:[%s393] sm:$0xf]
        %v407 = vld [vmem:[%s393 + $0x4] sm:$0xf]
        %v408 = vld [vmem:[%s5] sm:$0xf]
        %v409 = vld [vmem:[%s5 + $0x4] sm:$0xf]
        %v410 = vld [vmem:[%s6] sm:$0xf]
        %v411 = vld [vmem:[%s6 + $0x4] sm:$0xf]
        %v412 = vld [vmem:[%s7] sm:$0xf]
        %v413 = vld [vmem:[%s7 + $0x4] sm:$0xf]
        %v414 = vld [vmem:[%s397] sm:$0xff]
        %v415 = vld [vmem:[%s401] sm:$0xff]
        %v418 = vunpack.c.l.b16 %v404
        %v419 = vunpack.c.l.b16 %v405
        %v420 = vpack.c.b16 %v419, %v418
        %v423 = vunpack.c.l.b16 %v408
        %v424 = vunpack.c.l.b16 %v409
        %v425 = vpack.c.b16 %v424, %v423
        %vm426 = vcmask 64512
        %v428 = vsel %vm426, %v403, 0
        %v431 = vsel %vm426, %v420, 0
        %v434 = vsel %vm426, %v425, 0
        %436 = vmatprep.subr.bf16.mxu0 0
        %437 = vmatpush1.bf16.xpose.msra.mxu0 0
        %438 = vmatprep.subr.bf16.mxu0 0
        %439 = vmatpush1.bf16.xpose.msra.mxu0 0
        %440 = vmatprep.subr.bf16.mxu0 0
        %441 = vmatpush1.bf16.xpose.msra.mxu0 0
        %442 = vmatprep.subr.bf16.mxu0 0
        %443 = vmatpush1.bf16.xpose.msra.mxu0 0
        %444 = vmatprep.subr.bf16.mxu0 0
        %445 = vmatpush1.bf16.xpose.msra.mxu0 0
        %446 = vmatprep.subr.bf16.mxu0 0
        %447 = vmatpush1.bf16.xpose.msra.mxu0 0
        %448 = vmatprep.subr.bf16.mxu0 0
        %449 = vmatpush1.bf16.xpose.msra.mxu0 %v434
        %450 = vmatprep.subr.bf16.mxu0 0
        %451 = vmatpush1.bf16.xpose.msra.mxu0 %v431
        %452 = vmatprep.subr.bf16.mxu0 0
        %453 = vmatpush2.bf16.xpose.msra.mxu0 0
        %454 = vmatprep.subr.bf16.mxu0 0
        %455 = vmatpush2.bf16.xpose.msra.mxu0 0
        %456 = vmatprep.subr.bf16.mxu0 0
        %457 = vmatpush2.bf16.xpose.msra.mxu0 0
        %458 = vmatprep.subr.bf16.mxu0 0
        %459 = vmatpush2.bf16.xpose.msra.mxu0 0
        %460 = vmatprep.subr.bf16.mxu0 0
        %461 = vmatpush2.bf16.xpose.msra.mxu0 0
        %462 = vmatprep.subr.bf16.mxu0 0
        %463 = vmatpush2.bf16.xpose.msra.mxu0 0
        %464 = vmatprep.subr.bf16.mxu0 0
        %465 = vmatpush2.bf16.xpose.msra.mxu0 0
        %466 = vmatprep.subr.bf16.mxu0 0
        %467 = vmatpush2.bf16.xpose.msra.mxu0 0
        %468 = vmatprep.mubr.bf16.mxu0 0
        %469 = vmatmul.mubr.bf16.gmra.mxu0 %v428
        %v470 = vpop.f32.mrf.mxu0
        %v471 = vadd.f32 0.0, %v470
        %v472 = vpop.f32.mrf.mxu0
        %v473 = vpop.f32.mrf.mxu0
        %v474 = vpop.f32.mrf.mxu0
        %475 = vdwg.mxu0
        %v478 = vunpack.c.l.b16 %v410
        %v479 = vunpack.c.l.b16 %v411
        %v480 = vpack.c.b16 %v479, %v478
        %v482 = vsel %vm426, %v480, 0
        %484 = vmatprep.subr.bf16.mxu0 0
        %485 = vmatpush1.bf16.xpose.msra.mxu0 0
        %486 = vmatprep.subr.bf16.mxu0 0
        %487 = vmatpush1.bf16.xpose.msra.mxu0 0
        %488 = vmatprep.subr.bf16.mxu0 0
        %489 = vmatpush1.bf16.xpose.msra.mxu0 0
        %490 = vmatprep.subr.bf16.mxu0 0
        %491 = vmatpush1.bf16.xpose.msra.mxu0 0
        %492 = vmatprep.subr.bf16.mxu0 0
        %493 = vmatpush1.bf16.xpose.msra.mxu0 0
        %494 = vmatprep.subr.bf16.mxu0 0
        %495 = vmatpush1.bf16.xpose.msra.mxu0 0
        %496 = vmatprep.subr.bf16.mxu0 0
        %497 = vmatpush1.bf16.xpose.msra.mxu0 0
        %498 = vmatprep.subr.bf16.mxu0 0
        %499 = vmatpush1.bf16.xpose.msra.mxu0 %v431
        %500 = vmatprep.subr.bf16.mxu0 0
        %501 = vmatpush2.bf16.xpose.msra.mxu0 0
        %502 = vmatprep.subr.bf16.mxu0 0
        %503 = vmatpush2.bf16.xpose.msra.mxu0 0
        %504 = vmatprep.subr.bf16.mxu0 0
        %505 = vmatpush2.bf16.xpose.msra.mxu0 0
        %506 = vmatprep.subr.bf16.mxu0 0
        %507 = vmatpush2.bf16.xpose.msra.mxu0 0
        %508 = vmatprep.subr.bf16.mxu0 0
        %509 = vmatpush2.bf16.xpose.msra.mxu0 0
        %510 = vmatprep.subr.bf16.mxu0 0
        %511 = vmatpush2.bf16.xpose.msra.mxu0 0
        %512 = vmatprep.subr.bf16.mxu0 0
        %513 = vmatpush2.bf16.xpose.msra.mxu0 0
        %514 = vmatprep.subr.bf16.mxu0 0
        %515 = vmatpush2.bf16.xpose.msra.mxu0 0
        %516 = vmatprep.mubr.bf16.mxu0 0
        %517 = vmatmul.mubr.bf16.gmra.mxu0 %v482
        %v518 = vpop.f32.mrf.mxu0
        %v519 = vadd.f32 0.0, %v518
        %v520 = vpop.f32.mrf.mxu0
        %v521 = vpop.f32.mrf.mxu0
        %v522 = vadd.f32 0.0, %v521
        %v523 = vpop.f32.mrf.mxu0
        %524 = vdwg.mxu0
        %v526 = vunpack.c.l.b16 %v403
        %v527 = vpack.c.b16 %v526, %v526
        %528 = vrot.lane.b32.xlu0 %v527, 120
        %v529 = vpop.permute.xlu0 %528
        %530 = vrot.lane.b32.xlu0 %v420, 120
        %v531 = vpop.permute.xlu0 %530
        %532 = vrot.lane.b32.xlu0 %v425, 120
        %v533 = vpop.permute.xlu0 %532
        %v535 = vsel %vm426, %v529, 0
        %v538 = vsel %vm426, %v531, 0
        %v541 = vsel %vm426, %v533, 0
        %543 = vmatprep.subr.bf16.mxu0 0
        %544 = vmatpush1.bf16.xpose.msra.mxu0 0
        %545 = vmatprep.subr.bf16.mxu0 0
        %546 = vmatpush1.bf16.xpose.msra.mxu0 0
        %547 = vmatprep.subr.bf16.mxu0 0
        %548 = vmatpush1.bf16.xpose.msra.mxu0 0
        %549 = vmatprep.subr.bf16.mxu0 0
        %550 = vmatpush1.bf16.xpose.msra.mxu0 0
        %551 = vmatprep.subr.bf16.mxu0 0
        %552 = vmatpush1.bf16.xpose.msra.mxu0 0
        %553 = vmatprep.subr.bf16.mxu0 0
        %554 = vmatpush1.bf16.xpose.msra.mxu0 0
        %555 = vmatprep.subr.bf16.mxu0 0
        %556 = vmatpush1.bf16.xpose.msra.mxu0 %v541
        %557 = vmatprep.subr.bf16.mxu0 0
        %558 = vmatpush1.bf16.xpose.msra.mxu0 %v538
        %559 = vmatprep.subr.bf16.mxu0 0
        %560 = vmatpush2.bf16.xpose.msra.mxu0 0
        %561 = vmatprep.subr.bf16.mxu0 0
        %562 = vmatpush2.bf16.xpose.msra.mxu0 0
        %563 = vmatprep.subr.bf16.mxu0 0
        %564 = vmatpush2.bf16.xpose.msra.mxu0 0
        %565 = vmatprep.subr.bf16.mxu0 0
        %566 = vmatpush2.bf16.xpose.msra.mxu0 0
        %567 = vmatprep.subr.bf16.mxu0 0
        %568 = vmatpush2.bf16.xpose.msra.mxu0 0
        %569 = vmatprep.subr.bf16.mxu0 0
        %570 = vmatpush2.bf16.xpose.msra.mxu0 0
        %571 = vmatprep.subr.bf16.mxu0 0
        %572 = vmatpush2.bf16.xpose.msra.mxu0 0
        %573 = vmatprep.subr.bf16.mxu0 0
        %574 = vmatpush2.bf16.xpose.msra.mxu0 0
        %575 = vmatprep.mubr.bf16.mxu0 0
        %576 = vmatmul.mubr.bf16.gmra.mxu0 %v535
        %v577 = vpop.f32.mrf.mxu0
        %v578 = vadd.f32 0.0, %v577
        %v579 = vpop.f32.mrf.mxu0
        %v580 = vpop.f32.mrf.mxu0
        %v581 = vpop.f32.mrf.mxu0
        %582 = vdwg.mxu0
        %583 = vrot.lane.b32.xlu0 %v480, 120
        %v584 = vpop.permute.xlu0 %583
        %v586 = vsel %vm426, %v584, 0
        %588 = vmatprep.subr.bf16.mxu0 0
        %589 = vmatpush1.bf16.xpose.msra.mxu0 0
        %590 = vmatprep.subr.bf16.mxu0 0
        %591 = vmatpush1.bf16.xpose.msra.mxu0 0
        %592 = vmatprep.subr.bf16.mxu0 0
        %593 = vmatpush1.bf16.xpose.msra.mxu0 0
        %594 = vmatprep.subr.bf16.mxu0 0
        %595 = vmatpush1.bf16.xpose.msra.mxu0 0
        %596 = vmatprep.subr.bf16.mxu0 0
        %597 = vmatpush1.bf16.xpose.msra.mxu0 0
        %598 = vmatprep.subr.bf16.mxu0 0
        %599 = vmatpush1.bf16.xpose.msra.mxu0 0
        %600 = vmatprep.subr.bf16.mxu0 0
        %601 = vmatpush1.bf16.xpose.msra.mxu0 0
        %602 = vmatprep.subr.bf16.mxu0 0
        %603 = vmatpush1.bf16.xpose.msra.mxu0 %v538
        %604 = vmatprep.subr.bf16.mxu0 0
        %605 = vmatpush2.bf16.xpose.msra.mxu0 0
        %606 = vmatprep.subr.bf16.mxu0 0
        %607 = vmatpush2.bf16.xpose.msra.mxu0 0
        %608 = vmatprep.subr.bf16.mxu0 0
        %609 = vmatpush2.bf16.xpose.msra.mxu0 0
        %610 = vmatprep.subr.bf16.mxu0 0
        %611 = vmatpush2.bf16.xpose.msra.mxu0 0
        %612 = vmatprep.subr.bf16.mxu0 0
        %613 = vmatpush2.bf16.xpose.msra.mxu0 0
        %614 = vmatprep.subr.bf16.mxu0 0
        %615 = vmatpush2.bf16.xpose.msra.mxu0 0
        %616 = vmatprep.subr.bf16.mxu0 0
        %617 = vmatpush2.bf16.xpose.msra.mxu0 0
        %618 = vmatprep.subr.bf16.mxu0 0
        %619 = vmatpush2.bf16.xpose.msra.mxu0 0
        %620 = vmatprep.mubr.bf16.mxu0 0
        %621 = vmatmul.mubr.bf16.gmra.mxu0 %v586
        %v622 = vpop.f32.mrf.mxu0
        %v623 = vadd.f32 0.0, %v622
        %v624 = vpop.f32.mrf.mxu0
        %v625 = vpop.f32.mrf.mxu0
        %v626 = vadd.f32 0.0, %v625
        %v627 = vpop.f32.mrf.mxu0
        %628 = vdwg.mxu0
        %629 = vrot.lane.b32.xlu0 %v527, 112
        %v630 = vpop.permute.xlu0 %629
        %631 = vrot.lane.b32.xlu0 %v420, 112
        %v632 = vpop.permute.xlu0 %631
        %633 = vrot.lane.b32.xlu0 %v425, 112
        %v634 = vpop.permute.xlu0 %633
        %v636 = vsel %vm426, %v630, 0
        %v639 = vsel %vm426, %v632, 0
        %v642 = vsel %vm426, %v634, 0
        %644 = vmatprep.subr.bf16.mxu0 0
        %645 = vmatpush1.bf16.xpose.msra.mxu0 0
        %646 = vmatprep.subr.bf16.mxu0 0
        %647 = vmatpush1.bf16.xpose.msra.mxu0 0
        %648 = vmatprep.subr.bf16.mxu0 0
        %649 = vmatpush1.bf16.xpose.msra.mxu0 0
        %650 = vmatprep.subr.bf16.mxu0 0
        %651 = vmatpush1.bf16.xpose.msra.mxu0 0
        %652 = vmatprep.subr.bf16.mxu0 0
        %653 = vmatpush1.bf16.xpose.msra.mxu0 0
        %654 = vmatprep.subr.bf16.mxu0 0
        %655 = vmatpush1.bf16.xpose.msra.mxu0 0
        %656 = vmatprep.subr.bf16.mxu0 0
        %657 = vmatpush1.bf16.xpose.msra.mxu0 %v642
        %658 = vmatprep.subr.bf16.mxu0 0
        %659 = vmatpush1.bf16.xpose.msra.mxu0 %v639
        %660 = vmatprep.subr.bf16.mxu0 0
        %661 = vmatpush2.bf16.xpose.msra.mxu0 0
        %662 = vmatprep.subr.bf16.mxu0 0
        %663 = vmatpush2.bf16.xpose.msra.mxu0 0
        %664 = vmatprep.subr.bf16.mxu0 0
        %665 = vmatpush2.bf16.xpose.msra.mxu0 0
        %666 = vmatprep.subr.bf16.mxu0 0
        %667 = vmatpush2.bf16.xpose.msra.mxu0 0
        %668 = vmatprep.subr.bf16.mxu0 0
        %669 = vmatpush2.bf16.xpose.msra.mxu0 0
        %670 = vmatprep.subr.bf16.mxu0 0
        %671 = vmatpush2.bf16.xpose.msra.mxu0 0
        %672 = vmatprep.subr.bf16.mxu0 0
        %673 = vmatpush2.bf16.xpose.msra.mxu0 0
        %674 = vmatprep.subr.bf16.mxu0 0
        %675 = vmatpush2.bf16.xpose.msra.mxu0 0
        %676 = vmatprep.mubr.bf16.mxu0 0
        %677 = vmatmul.mubr.bf16.gmra.mxu0 %v636
        %v678 = vpop.f32.mrf.mxu0
        %v679 = vadd.f32 0.0, %v678
        %v680 = vpop.f32.mrf.mxu0
        %v681 = vpop.f32.mrf.mxu0
        %v682 = vpop.f32.mrf.mxu0
        %683 = vdwg.mxu0
        %684 = vrot.lane.b32.xlu0 %v480, 112
        %v685 = vpop.permute.xlu0 %684
        %v687 = vsel %vm426, %v685, 0
        %689 = vmatprep.subr.bf16.mxu0 0
        %690 = vmatpush1.bf16.xpose.msra.mxu0 0
        %691 = vmatprep.subr.bf16.mxu0 0
        %692 = vmatpush1.bf16.xpose.msra.mxu0 0
        %693 = vmatprep.subr.bf16.mxu0 0
        %694 = vmatpush1.bf16.xpose.msra.mxu0 0
        %695 = vmatprep.subr.bf16.mxu0 0
        %696 = vmatpush1.bf16.xpose.msra.mxu0 0
        %697 = vmatprep.subr.bf16.mxu0 0
        %698 = vmatpush1.bf16.xpose.msra.mxu0 0
        %699 = vmatprep.subr.bf16.mxu0 0
        %700 = vmatpush1.bf16.xpose.msra.mxu0 0
        %701 = vmatprep.subr.bf16.mxu0 0
        %702 = vmatpush1.bf16.xpose.msra.mxu0 0
        %703 = vmatprep.subr.bf16.mxu0 0
        %704 = vmatpush1.bf16.xpose.msra.mxu0 %v639
        %705 = vmatprep.subr.bf16.mxu0 0
        %706 = vmatpush2.bf16.xpose.msra.mxu0 0
        %707 = vmatprep.subr.bf16.mxu0 0
        %708 = vmatpush2.bf16.xpose.msra.mxu0 0
        %709 = vmatprep.subr.bf16.mxu0 0
        %710 = vmatpush2.bf16.xpose.msra.mxu0 0
        %711 = vmatprep.subr.bf16.mxu0 0
        %712 = vmatpush2.bf16.xpose.msra.mxu0 0
        %713 = vmatprep.subr.bf16.mxu0 0
        %714 = vmatpush2.bf16.xpose.msra.mxu0 0
        %715 = vmatprep.subr.bf16.mxu0 0
        %716 = vmatpush2.bf16.xpose.msra.mxu0 0
        %717 = vmatprep.subr.bf16.mxu0 0
        %718 = vmatpush2.bf16.xpose.msra.mxu0 0
        %719 = vmatprep.subr.bf16.mxu0 0
        %720 = vmatpush2.bf16.xpose.msra.mxu0 0
        %721 = vmatprep.mubr.bf16.mxu0 0
        %722 = vmatmul.mubr.bf16.gmra.mxu0 %v687
        %v723 = vpop.f32.mrf.mxu0
        %v724 = vadd.f32 0.0, %v723
        %v725 = vpop.f32.mrf.mxu0
        %v726 = vpop.f32.mrf.mxu0
        %v727 = vadd.f32 0.0, %v726
        %v728 = vpop.f32.mrf.mxu0
        %729 = vdwg.mxu0
        %730 = vrot.lane.b32.xlu0 %v527, 104
        %v731 = vpop.permute.xlu0 %730
        %732 = vrot.lane.b32.xlu0 %v420, 104
        %v733 = vpop.permute.xlu0 %732
        %734 = vrot.lane.b32.xlu0 %v425, 104
        %v735 = vpop.permute.xlu0 %734
        %v737 = vsel %vm426, %v731, 0
        %v740 = vsel %vm426, %v733, 0
        %v743 = vsel %vm426, %v735, 0
        %745 = vmatprep.subr.bf16.mxu0 0
        %746 = vmatpush1.bf16.xpose.msra.mxu0 0
        %747 = vmatprep.subr.bf16.mxu0 0
        %748 = vmatpush1.bf16.xpose.msra.mxu0 0
        %749 = vmatprep.subr.bf16.mxu0 0
        %750 = vmatpush1.bf16.xpose.msra.mxu0 0
        %751 = vmatprep.subr.bf16.mxu0 0
        %752 = vmatpush1.bf16.xpose.msra.mxu0 0
        %753 = vmatprep.subr.bf16.mxu0 0
        %754 = vmatpush1.bf16.xpose.msra.mxu0 0
        %755 = vmatprep.subr.bf16.mxu0 0
        %756 = vmatpush1.bf16.xpose.msra.mxu0 0
        %757 = vmatprep.subr.bf16.mxu0 0
        %758 = vmatpush1.bf16.xpose.msra.mxu0 %v743
        %759 = vmatprep.subr.bf16.mxu0 0
        %760 = vmatpush1.bf16.xpose.msra.mxu0 %v740
        %761 = vmatprep.subr.bf16.mxu0 0
        %762 = vmatpush2.bf16.xpose.msra.mxu0 0
        %763 = vmatprep.subr.bf16.mxu0 0
        %764 = vmatpush2.bf16.xpose.msra.mxu0 0
        %765 = vmatprep.subr.bf16.mxu0 0
        %766 = vmatpush2.bf16.xpose.msra.mxu0 0
        %767 = vmatprep.subr.bf16.mxu0 0
        %768 = vmatpush2.bf16.xpose.msra.mxu0 0
        %769 = vmatprep.subr.bf16.mxu0 0
        %770 = vmatpush2.bf16.xpose.msra.mxu0 0
        %771 = vmatprep.subr.bf16.mxu0 0
        %772 = vmatpush2.bf16.xpose.msra.mxu0 0
        %773 = vmatprep.subr.bf16.mxu0 0
        %774 = vmatpush2.bf16.xpose.msra.mxu0 0
        %775 = vmatprep.subr.bf16.mxu0 0
        %776 = vmatpush2.bf16.xpose.msra.mxu0 0
        %777 = vmatprep.mubr.bf16.mxu0 0
        %778 = vmatmul.mubr.bf16.gmra.mxu0 %v737
        %v779 = vpop.f32.mrf.mxu0
        %v780 = vadd.f32 0.0, %v779
        %v781 = vpop.f32.mrf.mxu0
        %v782 = vpop.f32.mrf.mxu0
        %v783 = vpop.f32.mrf.mxu0
        %784 = vdwg.mxu0
        %785 = vrot.lane.b32.xlu0 %v480, 104
        %v786 = vpop.permute.xlu0 %785
        %v788 = vsel %vm426, %v786, 0
        %790 = vmatprep.subr.bf16.mxu0 0
        %791 = vmatpush1.bf16.xpose.msra.mxu0 0
        %792 = vmatprep.subr.bf16.mxu0 0
        %793 = vmatpush1.bf16.xpose.msra.mxu0 0
        %794 = vmatprep.subr.bf16.mxu0 0
        %795 = vmatpush1.bf16.xpose.msra.mxu0 0
        %796 = vmatprep.subr.bf16.mxu0 0
        %797 = vmatpush1.bf16.xpose.msra.mxu0 0
        %798 = vmatprep.subr.bf16.mxu0 0
        %799 = vmatpush1.bf16.xpose.msra.mxu0 0
        %800 = vmatprep.subr.bf16.mxu0 0
        %801 = vmatpush1.bf16.xpose.msra.mxu0 0
        %802 = vmatprep.subr.bf16.mxu0 0
        %803 = vmatpush1.bf16.xpose.msra.mxu0 0
        %804 = vmatprep.subr.bf16.mxu0 0
        %805 = vmatpush1.bf16.xpose.msra.mxu0 %v740
        %806 = vmatprep.subr.bf16.mxu0 0
        %807 = vmatpush2.bf16.xpose.msra.mxu0 0
        %808 = vmatprep.subr.bf16.mxu0 0
        %809 = vmatpush2.bf16.xpose.msra.mxu0 0
        %810 = vmatprep.subr.bf16.mxu0 0
        %811 = vmatpush2.bf16.xpose.msra.mxu0 0
        %812 = vmatprep.subr.bf16.mxu0 0
        %813 = vmatpush2.bf16.xpose.msra.mxu0 0
        %814 = vmatprep.subr.bf16.mxu0 0
        %815 = vmatpush2.bf16.xpose.msra.mxu0 0
        %816 = vmatprep.subr.bf16.mxu0 0
        %817 = vmatpush2.bf16.xpose.msra.mxu0 0
        %818 = vmatprep.subr.bf16.mxu0 0
        %819 = vmatpush2.bf16.xpose.msra.mxu0 0
        %820 = vmatprep.subr.bf16.mxu0 0
        %821 = vmatpush2.bf16.xpose.msra.mxu0 0
        %822 = vmatprep.mubr.bf16.mxu0 0
        %823 = vmatmul.mubr.bf16.gmra.mxu0 %v788
        %v824 = vpop.f32.mrf.mxu0
        %v825 = vadd.f32 0.0, %v824
        %v826 = vpop.f32.mrf.mxu0
        %v827 = vpop.f32.mrf.mxu0
        %v828 = vadd.f32 0.0, %v827
        %v829 = vpop.f32.mrf.mxu0
        %830 = vdwg.mxu0
        %v831 = vadd.f32 %v471, %v415
        %v832 = vadd.f32 %v578, %v415
        %v833 = vadd.f32 %v679, %v415
        %v834 = vadd.f32 %v780, %v415
        %vm835 = vcmp.eq.s32.totalorder %v414, 0
        %837 = vset.pattern.permute.xlu0 16
        %838 = vperm.xlu0 %837, %v471
        %v839 = vpop.permute.xlu0 %838
        %842 = vset.pattern.permute.xlu0 16
        %843 = vperm.xlu0 %842, %v578
        %v844 = vpop.permute.xlu0 %843
        %847 = vset.pattern.permute.xlu0 16
        %848 = vperm.xlu0 %847, %v679
        %v849 = vpop.permute.xlu0 %848
        %852 = vset.pattern.permute.xlu0 16
        %853 = vperm.xlu0 %852, %v780
        %v854 = vpop.permute.xlu0 %853
        %v856 = vlaneseq
        %v857 = vshrl.u32 %v856, 7
        %v858 = vsub.s32 0, %v857
        %v859 = vrot.slane %v519, %v858
        %v860 = vlaneseq
        %v861 = vshrl.u32 %v860, 7
        %v862 = vsub.s32 0, %v861
        %v863 = vrot.slane %v623, %v862
        %v864 = vlaneseq
        %v865 = vshrl.u32 %v864, 7
        %v866 = vsub.s32 0, %v865
        %v867 = vrot.slane %v724, %v866
        %v868 = vlaneseq
        %v869 = vshrl.u32 %v868, 7
        %v870 = vsub.s32 0, %v869
        %v871 = vrot.slane %v825, %v870
        %v872 = vadd.f32 %v839, %v859
        %v873 = vadd.f32 %v844, %v863
        %v874 = vadd.f32 %v849, %v867
        %v875 = vadd.f32 %v854, %v871
        %v876 = vsel %vm835, 1, 0
        %vm877 = vcmp.eq.s32.totalorder %v876, 1
        %v878 = vsel %vm877, %v872, 0.0
        %v879 = vsel %vm877, %v873, 0.0
        %v880 = vsel %vm877, %v874, 0.0
        %v881 = vsel %vm877, %v875, 0.0
        %v882 = vadd.f32 %v831, %v878
        %v883 = vadd.f32 %v832, %v879
        %v884 = vadd.f32 %v833, %v880
        %v885 = vadd.f32 %v834, %v881
        %vm886 = vcmp.eq.s32.totalorder %v414, 1
        %887 = vset.pattern.permute.xlu0 17
        %888 = vperm.xlu0 %887, %v471
        %v889 = vpop.permute.xlu0 %888
        %891 = vset.pattern.permute.xlu0 17
        %892 = vperm.xlu0 %891, %v578
        %v893 = vpop.permute.xlu0 %892
        %895 = vset.pattern.permute.xlu0 17
        %896 = vperm.xlu0 %895, %v679
        %v897 = vpop.permute.xlu0 %896
        %899 = vset.pattern.permute.xlu0 17
        %900 = vperm.xlu0 %899, %v780
        %v901 = vpop.permute.xlu0 %900
        %v903 = vlaneseq
        %v904 = vshrl.u32 %v903, 7
        %v905 = vsub.s32 1, %v904
        %v906 = vrot.slane %v519, %v905
        %v907 = vlaneseq
        %v908 = vshrl.u32 %v907, 7
        %v909 = vsub.s32 1, %v908
        %v910 = vrot.slane %v623, %v909
        %v911 = vlaneseq
        %v912 = vshrl.u32 %v911, 7
        %v913 = vsub.s32 1, %v912
        %v914 = vrot.slane %v724, %v913
        %v915 = vlaneseq
        %v916 = vshrl.u32 %v915, 7
        %v917 = vsub.s32 1, %v916
        %v918 = vrot.slane %v825, %v917
        %v919 = vadd.f32 %v889, %v906
        %v920 = vadd.f32 %v893, %v910
        %v921 = vadd.f32 %v897, %v914
        %v922 = vadd.f32 %v901, %v918
        %v923 = vsel %vm886, 1, 0
        %vm924 = vcmp.eq.s32.totalorder %v923, 1
        %v925 = vsel %vm924, %v919, 0.0
        %v926 = vsel %vm924, %v920, 0.0
        %v927 = vsel %vm924, %v921, 0.0
        %v928 = vsel %vm924, %v922, 0.0
        %v929 = vadd.f32 %v882, %v925
        %v930 = vadd.f32 %v883, %v926
        %v931 = vadd.f32 %v884, %v927
        %v932 = vadd.f32 %v885, %v928
        %vm933 = vcmp.eq.s32.totalorder %v414, 2
        %934 = vset.pattern.permute.xlu0 18
        %935 = vperm.xlu0 %934, %v471
        %v936 = vpop.permute.xlu0 %935
        %938 = vset.pattern.permute.xlu0 18
        %939 = vperm.xlu0 %938, %v578
        %v940 = vpop.permute.xlu0 %939
        %942 = vset.pattern.permute.xlu0 18
        %943 = vperm.xlu0 %942, %v679
        %v944 = vpop.permute.xlu0 %943
        %946 = vset.pattern.permute.xlu0 18
        %947 = vperm.xlu0 %946, %v780
        %v948 = vpop.permute.xlu0 %947
        %v950 = vlaneseq
        %v951 = vshrl.u32 %v950, 7
        %v952 = vsub.s32 2, %v951
        %v953 = vrot.slane %v519, %v952
        %v954 = vlaneseq
        %v955 = vshrl.u32 %v954, 7
        %v956 = vsub.s32 2, %v955
        %v957 = vrot.slane %v623, %v956
        %v958 = vlaneseq
        %v959 = vshrl.u32 %v958, 7
        %v960 = vsub.s32 2, %v959
        %v961 = vrot.slane %v724, %v960
        %v962 = vlaneseq
        %v963 = vshrl.u32 %v962, 7
        %v964 = vsub.s32 2, %v963
        %v965 = vrot.slane %v825, %v964
        %v966 = vadd.f32 %v936, %v953
        %v967 = vadd.f32 %v940, %v957
        %v968 = vadd.f32 %v944, %v961
        %v969 = vadd.f32 %v948, %v965
        %v970 = vsel %vm933, 1, 0
        %vm971 = vcmp.eq.s32.totalorder %v970, 1
        %v972 = vsel %vm971, %v966, 0.0
        %v973 = vsel %vm971, %v967, 0.0
        %v974 = vsel %vm971, %v968, 0.0
        %v975 = vsel %vm971, %v969, 0.0
        %v976 = vadd.f32 %v929, %v972
        %v977 = vadd.f32 %v930, %v973
        %v978 = vadd.f32 %v931, %v974
        %v979 = vadd.f32 %v932, %v975
        %vm980 = vcmp.eq.s32.totalorder %v414, 3
        %981 = vset.pattern.permute.xlu0 19
        %982 = vperm.xlu0 %981, %v471
        %v983 = vpop.permute.xlu0 %982
        %985 = vset.pattern.permute.xlu0 19
        %986 = vperm.xlu0 %985, %v578
        %v987 = vpop.permute.xlu0 %986
        %989 = vset.pattern.permute.xlu0 19
        %990 = vperm.xlu0 %989, %v679
        %v991 = vpop.permute.xlu0 %990
        %993 = vset.pattern.permute.xlu0 19
        %994 = vperm.xlu0 %993, %v780
        %v995 = vpop.permute.xlu0 %994
        %v997 = vlaneseq
        %v998 = vshrl.u32 %v997, 7
        %v999 = vsub.s32 3, %v998
        %v1000 = vrot.slane %v519, %v999
        %v1001 = vlaneseq
        %v1002 = vshrl.u32 %v1001, 7
        %v1003 = vsub.s32 3, %v1002
        %v1004 = vrot.slane %v623, %v1003
        %v1005 = vlaneseq
        %v1006 = vshrl.u32 %v1005, 7
        %v1007 = vsub.s32 3, %v1006
        %v1008 = vrot.slane %v724, %v1007
        %v1009 = vlaneseq
        %v1010 = vshrl.u32 %v1009, 7
        %v1011 = vsub.s32 3, %v1010
        %v1012 = vrot.slane %v825, %v1011
        %v1013 = vadd.f32 %v983, %v1000
        %v1014 = vadd.f32 %v987, %v1004
        %v1015 = vadd.f32 %v991, %v1008
        %v1016 = vadd.f32 %v995, %v1012
        %v1017 = vsel %vm980, 1, 0
        %vm1018 = vcmp.eq.s32.totalorder %v1017, 1
        %v1019 = vsel %vm1018, %v1013, 0.0
        %v1020 = vsel %vm1018, %v1014, 0.0
        %v1021 = vsel %vm1018, %v1015, 0.0
        %v1022 = vsel %vm1018, %v1016, 0.0
        %v1023 = vadd.f32 %v976, %v1019
        %v1024 = vadd.f32 %v977, %v1020
        %v1025 = vadd.f32 %v978, %v1021
        %v1026 = vadd.f32 %v979, %v1022
        %vm1027 = vcmp.eq.s32.totalorder %v414, 4
        %1028 = vset.pattern.permute.xlu0 20
        %1029 = vperm.xlu0 %1028, %v471
        %v1030 = vpop.permute.xlu0 %1029
        %1032 = vset.pattern.permute.xlu0 20
        %1033 = vperm.xlu0 %1032, %v578
        %v1034 = vpop.permute.xlu0 %1033
        %1036 = vset.pattern.permute.xlu0 20
        %1037 = vperm.xlu0 %1036, %v679
        %v1038 = vpop.permute.xlu0 %1037
        %1040 = vset.pattern.permute.xlu0 20
        %1041 = vperm.xlu0 %1040, %v780
        %v1042 = vpop.permute.xlu0 %1041
        %v1044 = vlaneseq
        %v1045 = vshrl.u32 %v1044, 7
        %v1046 = vsub.s32 4, %v1045
        %v1047 = vrot.slane %v519, %v1046
        %v1048 = vlaneseq
        %v1049 = vshrl.u32 %v1048, 7
        %v1050 = vsub.s32 4, %v1049
        %v1051 = vrot.slane %v623, %v1050
        %v1052 = vlaneseq
        %v1053 = vshrl.u32 %v1052, 7
        %v1054 = vsub.s32 4, %v1053
        %v1055 = vrot.slane %v724, %v1054
        %v1056 = vlaneseq
        %v1057 = vshrl.u32 %v1056, 7
        %v1058 = vsub.s32 4, %v1057
        %v1059 = vrot.slane %v825, %v1058
        %v1060 = vadd.f32 %v1030, %v1047
        %v1061 = vadd.f32 %v1034, %v1051
        %v1062 = vadd.f32 %v1038, %v1055
        %v1063 = vadd.f32 %v1042, %v1059
        %v1064 = vsel %vm1027, 1, 0
        %vm1065 = vcmp.eq.s32.totalorder %v1064, 1
        %v1066 = vsel %vm1065, %v1060, 0.0
        %v1067 = vsel %vm1065, %v1061, 0.0
        %v1068 = vsel %vm1065, %v1062, 0.0
        %v1069 = vsel %vm1065, %v1063, 0.0
        %v1070 = vadd.f32 %v1023, %v1066
        %v1071 = vadd.f32 %v1024, %v1067
        %v1072 = vadd.f32 %v1025, %v1068
        %v1073 = vadd.f32 %v1026, %v1069
        %vm1074 = vcmp.eq.s32.totalorder %v414, 5
        %1075 = vset.pattern.permute.xlu0 21
        %1076 = vperm.xlu0 %1075, %v471
        %v1077 = vpop.permute.xlu0 %1076
        %1079 = vset.pattern.permute.xlu0 21
        %1080 = vperm.xlu0 %1079, %v578
        %v1081 = vpop.permute.xlu0 %1080
        %1083 = vset.pattern.permute.xlu0 21
        %1084 = vperm.xlu0 %1083, %v679
        %v1085 = vpop.permute.xlu0 %1084
        %1087 = vset.pattern.permute.xlu0 21
        %1088 = vperm.xlu0 %1087, %v780
        %v1089 = vpop.permute.xlu0 %1088
        %v1091 = vlaneseq
        %v1092 = vshrl.u32 %v1091, 7
        %v1093 = vsub.s32 5, %v1092
        %v1094 = vrot.slane %v519, %v1093
        %v1095 = vlaneseq
        %v1096 = vshrl.u32 %v1095, 7
        %v1097 = vsub.s32 5, %v1096
        %v1098 = vrot.slane %v623, %v1097
        %v1099 = vlaneseq
        %v1100 = vshrl.u32 %v1099, 7
        %v1101 = vsub.s32 5, %v1100
        %v1102 = vrot.slane %v724, %v1101
        %v1103 = vlaneseq
        %v1104 = vshrl.u32 %v1103, 7
        %v1105 = vsub.s32 5, %v1104
        %v1106 = vrot.slane %v825, %v1105
        %v1107 = vadd.f32 %v1077, %v1094
        %v1108 = vadd.f32 %v1081, %v1098
        %v1109 = vadd.f32 %v1085, %v1102
        %v1110 = vadd.f32 %v1089, %v1106
        %v1111 = vsel %vm1074, 1, 0
        %vm1112 = vcmp.eq.s32.totalorder %v1111, 1
        %v1113 = vsel %vm1112, %v1107, 0.0
        %v1114 = vsel %vm1112, %v1108, 0.0
        %v1115 = vsel %vm1112, %v1109, 0.0
        %v1116 = vsel %vm1112, %v1110, 0.0
        %v1117 = vadd.f32 %v1070, %v1113
        %v1118 = vadd.f32 %v1071, %v1114
        %v1119 = vadd.f32 %v1072, %v1115
        %v1120 = vadd.f32 %v1073, %v1116
        %vm1121 = vcmp.eq.s32.totalorder %v414, 6
        %1122 = vset.pattern.permute.xlu0 22
        %1123 = vperm.xlu0 %1122, %v471
        %v1124 = vpop.permute.xlu0 %1123
        %1126 = vset.pattern.permute.xlu0 22
        %1127 = vperm.xlu0 %1126, %v578
        %v1128 = vpop.permute.xlu0 %1127
        %1130 = vset.pattern.permute.xlu0 22
        %1131 = vperm.xlu0 %1130, %v679
        %v1132 = vpop.permute.xlu0 %1131
        %1134 = vset.pattern.permute.xlu0 22
        %1135 = vperm.xlu0 %1134, %v780
        %v1136 = vpop.permute.xlu0 %1135
        %v1138 = vlaneseq
        %v1139 = vshrl.u32 %v1138, 7
        %v1140 = vsub.s32 6, %v1139
        %v1141 = vrot.slane %v519, %v1140
        %v1142 = vlaneseq
        %v1143 = vshrl.u32 %v1142, 7
        %v1144 = vsub.s32 6, %v1143
        %v1145 = vrot.slane %v623, %v1144
        %v1146 = vlaneseq
        %v1147 = vshrl.u32 %v1146, 7
        %v1148 = vsub.s32 6, %v1147
        %v1149 = vrot.slane %v724, %v1148
        %v1150 = vlaneseq
        %v1151 = vshrl.u32 %v1150, 7
        %v1152 = vsub.s32 6, %v1151
        %v1153 = vrot.slane %v825, %v1152
        %v1154 = vadd.f32 %v1124, %v1141
        %v1155 = vadd.f32 %v1128, %v1145
        %v1156 = vadd.f32 %v1132, %v1149
        %v1157 = vadd.f32 %v1136, %v1153
        %v1158 = vsel %vm1121, 1, 0
        %vm1159 = vcmp.eq.s32.totalorder %v1158, 1
        %v1160 = vsel %vm1159, %v1154, 0.0
        %v1161 = vsel %vm1159, %v1155, 0.0
        %v1162 = vsel %vm1159, %v1156, 0.0
        %v1163 = vsel %vm1159, %v1157, 0.0
        %v1164 = vadd.f32 %v1117, %v1160
        %v1165 = vadd.f32 %v1118, %v1161
        %v1166 = vadd.f32 %v1119, %v1162
        %v1167 = vadd.f32 %v1120, %v1163
        %vm1168 = vcmp.eq.s32.totalorder %v414, 7
        %1169 = vset.pattern.permute.xlu0 23
        %1170 = vperm.xlu0 %1169, %v471
        %v1171 = vpop.permute.xlu0 %1170
        %1173 = vset.pattern.permute.xlu0 23
        %1174 = vperm.xlu0 %1173, %v578
        %v1175 = vpop.permute.xlu0 %1174
        %1177 = vset.pattern.permute.xlu0 23
        %1178 = vperm.xlu0 %1177, %v679
        %v1179 = vpop.permute.xlu0 %1178
        %1181 = vset.pattern.permute.xlu0 23
        %1182 = vperm.xlu0 %1181, %v780
        %v1183 = vpop.permute.xlu0 %1182
        %v1185 = vlaneseq
        %v1186 = vshrl.u32 %v1185, 7
        %v1187 = vsub.s32 7, %v1186
        %v1188 = vrot.slane %v519, %v1187
        %v1189 = vlaneseq
        %v1190 = vshrl.u32 %v1189, 7
        %v1191 = vsub.s32 7, %v1190
        %v1192 = vrot.slane %v623, %v1191
        %v1193 = vlaneseq
        %v1194 = vshrl.u32 %v1193, 7
        %v1195 = vsub.s32 7, %v1194
        %v1196 = vrot.slane %v724, %v1195
        %v1197 = vlaneseq
        %v1198 = vshrl.u32 %v1197, 7
        %v1199 = vsub.s32 7, %v1198
        %v1200 = vrot.slane %v825, %v1199
        %v1201 = vadd.f32 %v1171, %v1188
        %v1202 = vadd.f32 %v1175, %v1192
        %v1203 = vadd.f32 %v1179, %v1196
        %v1204 = vadd.f32 %v1183, %v1200
        %v1205 = vsel %vm1168, 1, 0
        %vm1206 = vcmp.eq.s32.totalorder %v1205, 1
        %v1207 = vsel %vm1206, %v1201, 0.0
        %v1208 = vsel %vm1206, %v1202, 0.0
        %v1209 = vsel %vm1206, %v1203, 0.0
        %v1210 = vsel %vm1206, %v1204, 0.0
        %v1211 = vadd.f32 %v1164, %v1207
        %v1212 = vadd.f32 %v1165, %v1208
        %v1213 = vadd.f32 %v1166, %v1209
        %v1214 = vadd.f32 %v1167, %v1210
        %vm1215 = vcmp.eq.s32.totalorder %v414, 8
        %1216 = vset.pattern.permute.xlu0 24
        %1217 = vperm.xlu0 %1216, %v471
        %v1218 = vpop.permute.xlu0 %1217
        %1220 = vset.pattern.permute.xlu0 24
        %1221 = vperm.xlu0 %1220, %v578
        %v1222 = vpop.permute.xlu0 %1221
        %1224 = vset.pattern.permute.xlu0 24
        %1225 = vperm.xlu0 %1224, %v679
        %v1226 = vpop.permute.xlu0 %1225
        %1228 = vset.pattern.permute.xlu0 24
        %1229 = vperm.xlu0 %1228, %v780
        %v1230 = vpop.permute.xlu0 %1229
        %v1232 = vlaneseq
        %v1233 = vshrl.u32 %v1232, 7
        %v1234 = vsub.s32 0, %v1233
        %v1235 = vrot.slane %v522, %v1234
        %v1236 = vlaneseq
        %v1237 = vshrl.u32 %v1236, 7
        %v1238 = vsub.s32 0, %v1237
        %v1239 = vrot.slane %v626, %v1238
        %v1240 = vlaneseq
        %v1241 = vshrl.u32 %v1240, 7
        %v1242 = vsub.s32 0, %v1241
        %v1243 = vrot.slane %v727, %v1242
        %v1244 = vlaneseq
        %v1245 = vshrl.u32 %v1244, 7
        %v1246 = vsub.s32 0, %v1245
        %v1247 = vrot.slane %v828, %v1246
        %v1248 = vadd.f32 %v1218, %v1235
        %v1249 = vadd.f32 %v1222, %v1239
        %v1250 = vadd.f32 %v1226, %v1243
        %v1251 = vadd.f32 %v1230, %v1247
        %v1252 = vsel %vm1215, 1, 0
        %vm1253 = vcmp.eq.s32.totalorder %v1252, 1
        %v1254 = vsel %vm1253, %v1248, 0.0
        %v1255 = vsel %vm1253, %v1249, 0.0
        %v1256 = vsel %vm1253, %v1250, 0.0
        %v1257 = vsel %vm1253, %v1251, 0.0
        %v1258 = vadd.f32 %v1211, %v1254
        %v1259 = vadd.f32 %v1212, %v1255
        %v1260 = vadd.f32 %v1213, %v1256
        %v1261 = vadd.f32 %v1214, %v1257
        %vm1262 = vcmp.eq.s32.totalorder %v414, 9
        %1263 = vset.pattern.permute.xlu0 25
        %1264 = vperm.xlu0 %1263, %v471
        %v1265 = vpop.permute.xlu0 %1264
        %1267 = vset.pattern.permute.xlu0 25
        %1268 = vperm.xlu0 %1267, %v578
        %v1269 = vpop.permute.xlu0 %1268
        %1271 = vset.pattern.permute.xlu0 25
        %1272 = vperm.xlu0 %1271, %v679
        %v1273 = vpop.permute.xlu0 %1272
        %1275 = vset.pattern.permute.xlu0 25
        %1276 = vperm.xlu0 %1275, %v780
        %v1277 = vpop.permute.xlu0 %1276
        %v1279 = vlaneseq
        %v1280 = vshrl.u32 %v1279, 7
        %v1281 = vsub.s32 1, %v1280
        %v1282 = vrot.slane %v522, %v1281
        %v1283 = vlaneseq
        %v1284 = vshrl.u32 %v1283, 7
        %v1285 = vsub.s32 1, %v1284
        %v1286 = vrot.slane %v626, %v1285
        %v1287 = vlaneseq
        %v1288 = vshrl.u32 %v1287, 7
        %v1289 = vsub.s32 1, %v1288
        %v1290 = vrot.slane %v727, %v1289
        %v1291 = vlaneseq
        %v1292 = vshrl.u32 %v1291, 7
        %v1293 = vsub.s32 1, %v1292
        %v1294 = vrot.slane %v828, %v1293
        %v1295 = vadd.f32 %v1265, %v1282
        %v1296 = vadd.f32 %v1269, %v1286
        %v1297 = vadd.f32 %v1273, %v1290
        %v1298 = vadd.f32 %v1277, %v1294
        %v1299 = vsel %vm1262, 1, 0
        %vm1300 = vcmp.eq.s32.totalorder %v1299, 1
        %v1301 = vsel %vm1300, %v1295, 0.0
        %v1302 = vsel %vm1300, %v1296, 0.0
        %v1303 = vsel %vm1300, %v1297, 0.0
        %v1304 = vsel %vm1300, %v1298, 0.0
        %v1305 = vadd.f32 %v1258, %v1301
        %v1306 = vadd.f32 %v1259, %v1302
        %v1307 = vadd.f32 %v1260, %v1303
        %v1308 = vadd.f32 %v1261, %v1304
        %vm1309 = vcmp.eq.s32.totalorder %v414, 10
        %1310 = vset.pattern.permute.xlu0 26
        %1311 = vperm.xlu0 %1310, %v471
        %v1312 = vpop.permute.xlu0 %1311
        %1314 = vset.pattern.permute.xlu0 26
        %1315 = vperm.xlu0 %1314, %v578
        %v1316 = vpop.permute.xlu0 %1315
        %1318 = vset.pattern.permute.xlu0 26
        %1319 = vperm.xlu0 %1318, %v679
        %v1320 = vpop.permute.xlu0 %1319
        %1322 = vset.pattern.permute.xlu0 26
        %1323 = vperm.xlu0 %1322, %v780
        %v1324 = vpop.permute.xlu0 %1323
        %v1326 = vlaneseq
        %v1327 = vshrl.u32 %v1326, 7
        %v1328 = vsub.s32 2, %v1327
        %v1329 = vrot.slane %v522, %v1328
        %v1330 = vlaneseq
        %v1331 = vshrl.u32 %v1330, 7
        %v1332 = vsub.s32 2, %v1331
        %v1333 = vrot.slane %v626, %v1332
        %v1334 = vlaneseq
        %v1335 = vshrl.u32 %v1334, 7
        %v1336 = vsub.s32 2, %v1335
        %v1337 = vrot.slane %v727, %v1336
        %v1338 = vlaneseq
        %v1339 = vshrl.u32 %v1338, 7
        %v1340 = vsub.s32 2, %v1339
        %v1341 = vrot.slane %v828, %v1340
        %v1342 = vadd.f32 %v1312, %v1329
        %v1343 = vadd.f32 %v1316, %v1333
        %v1344 = vadd.f32 %v1320, %v1337
        %v1345 = vadd.f32 %v1324, %v1341
        %v1346 = vsel %vm1309, 1, 0
        %vm1347 = vcmp.eq.s32.totalorder %v1346, 1
        %v1348 = vsel %vm1347, %v1342, 0.0
        %v1349 = vsel %vm1347, %v1343, 0.0
        %v1350 = vsel %vm1347, %v1344, 0.0
        %v1351 = vsel %vm1347, %v1345, 0.0
        %v1352 = vadd.f32 %v1305, %v1348
        %v1353 = vadd.f32 %v1306, %v1349
        %v1354 = vadd.f32 %v1307, %v1350
        %v1355 = vadd.f32 %v1308, %v1351
        %vm1356 = vcmp.eq.s32.totalorder %v414, 11
        %1357 = vset.pattern.permute.xlu0 27
        %1358 = vperm.xlu0 %1357, %v471
        %v1359 = vpop.permute.xlu0 %1358
        %1361 = vset.pattern.permute.xlu0 27
        %1362 = vperm.xlu0 %1361, %v578
        %v1363 = vpop.permute.xlu0 %1362
        %1365 = vset.pattern.permute.xlu0 27
        %1366 = vperm.xlu0 %1365, %v679
        %v1367 = vpop.permute.xlu0 %1366
        %1369 = vset.pattern.permute.xlu0 27
        %1370 = vperm.xlu0 %1369, %v780
        %v1371 = vpop.permute.xlu0 %1370
        %v1373 = vlaneseq
        %v1374 = vshrl.u32 %v1373, 7
        %v1375 = vsub.s32 3, %v1374
        %v1376 = vrot.slane %v522, %v1375
        %v1377 = vlaneseq
        %v1378 = vshrl.u32 %v1377, 7
        %v1379 = vsub.s32 3, %v1378
        %v1380 = vrot.slane %v626, %v1379
        %v1381 = vlaneseq
        %v1382 = vshrl.u32 %v1381, 7
        %v1383 = vsub.s32 3, %v1382
        %v1384 = vrot.slane %v727, %v1383
        %v1385 = vlaneseq
        %v1386 = vshrl.u32 %v1385, 7
        %v1387 = vsub.s32 3, %v1386
        %v1388 = vrot.slane %v828, %v1387
        %v1389 = vadd.f32 %v1359, %v1376
        %v1390 = vadd.f32 %v1363, %v1380
        %v1391 = vadd.f32 %v1367, %v1384
        %v1392 = vadd.f32 %v1371, %v1388
        %v1393 = vsel %vm1356, 1, 0
        %vm1394 = vcmp.eq.s32.totalorder %v1393, 1
        %v1395 = vsel %vm1394, %v1389, 0.0
        %v1396 = vsel %vm1394, %v1390, 0.0
        %v1397 = vsel %vm1394, %v1391, 0.0
        %v1398 = vsel %vm1394, %v1392, 0.0
        %v1399 = vadd.f32 %v1352, %v1395
        %v1400 = vadd.f32 %v1353, %v1396
        %v1401 = vadd.f32 %v1354, %v1397
        %v1402 = vadd.f32 %v1355, %v1398
        %vm1403 = vcmp.eq.s32.totalorder %v414, 12
        %1404 = vset.pattern.permute.xlu0 28
        %1405 = vperm.xlu0 %1404, %v471
        %v1406 = vpop.permute.xlu0 %1405
        %1408 = vset.pattern.permute.xlu0 28
        %1409 = vperm.xlu0 %1408, %v578
        %v1410 = vpop.permute.xlu0 %1409
        %1412 = vset.pattern.permute.xlu0 28
        %1413 = vperm.xlu0 %1412, %v679
        %v1414 = vpop.permute.xlu0 %1413
        %1416 = vset.pattern.permute.xlu0 28
        %1417 = vperm.xlu0 %1416, %v780
        %v1418 = vpop.permute.xlu0 %1417
        %v1420 = vlaneseq
        %v1421 = vshrl.u32 %v1420, 7
        %v1422 = vsub.s32 4, %v1421
        %v1423 = vrot.slane %v522, %v1422
        %v1424 = vlaneseq
        %v1425 = vshrl.u32 %v1424, 7
        %v1426 = vsub.s32 4, %v1425
        %v1427 = vrot.slane %v626, %v1426
        %v1428 = vlaneseq
        %v1429 = vshrl.u32 %v1428, 7
        %v1430 = vsub.s32 4, %v1429
        %v1431 = vrot.slane %v727, %v1430
        %v1432 = vlaneseq
        %v1433 = vshrl.u32 %v1432, 7
        %v1434 = vsub.s32 4, %v1433
        %v1435 = vrot.slane %v828, %v1434
        %v1436 = vadd.f32 %v1406, %v1423
        %v1437 = vadd.f32 %v1410, %v1427
        %v1438 = vadd.f32 %v1414, %v1431
        %v1439 = vadd.f32 %v1418, %v1435
        %v1440 = vsel %vm1403, 1, 0
        %vm1441 = vcmp.eq.s32.totalorder %v1440, 1
        %v1442 = vsel %vm1441, %v1436, 0.0
        %v1443 = vsel %vm1441, %v1437, 0.0
        %v1444 = vsel %vm1441, %v1438, 0.0
        %v1445 = vsel %vm1441, %v1439, 0.0
        %v1446 = vadd.f32 %v1399, %v1442
        %v1447 = vadd.f32 %v1400, %v1443
        %v1448 = vadd.f32 %v1401, %v1444
        %v1449 = vadd.f32 %v1402, %v1445
        %vm1450 = vcmp.eq.s32.totalorder %v414, 13
        %1451 = vset.pattern.permute.xlu0 29
        %1452 = vperm.xlu0 %1451, %v471
        %v1453 = vpop.permute.xlu0 %1452
        %1455 = vset.pattern.permute.xlu0 29
        %1456 = vperm.xlu0 %1455, %v578
        %v1457 = vpop.permute.xlu0 %1456
        %1459 = vset.pattern.permute.xlu0 29
        %1460 = vperm.xlu0 %1459, %v679
        %v1461 = vpop.permute.xlu0 %1460
        %1463 = vset.pattern.permute.xlu0 29
        %1464 = vperm.xlu0 %1463, %v780
        %v1465 = vpop.permute.xlu0 %1464
        %v1467 = vlaneseq
        %v1468 = vshrl.u32 %v1467, 7
        %v1469 = vsub.s32 5, %v1468
        %v1470 = vrot.slane %v522, %v1469
        %v1471 = vlaneseq
        %v1472 = vshrl.u32 %v1471, 7
        %v1473 = vsub.s32 5, %v1472
        %v1474 = vrot.slane %v626, %v1473
        %v1475 = vlaneseq
        %v1476 = vshrl.u32 %v1475, 7
        %v1477 = vsub.s32 5, %v1476
        %v1478 = vrot.slane %v727, %v1477
        %v1479 = vlaneseq
        %v1480 = vshrl.u32 %v1479, 7
        %v1481 = vsub.s32 5, %v1480
        %v1482 = vrot.slane %v828, %v1481
        %v1483 = vadd.f32 %v1453, %v1470
        %v1484 = vadd.f32 %v1457, %v1474
        %v1485 = vadd.f32 %v1461, %v1478
        %v1486 = vadd.f32 %v1465, %v1482
        %v1487 = vsel %vm1450, 1, 0
        %vm1488 = vcmp.eq.s32.totalorder %v1487, 1
        %v1489 = vsel %vm1488, %v1483, 0.0
        %v1490 = vsel %vm1488, %v1484, 0.0
        %v1491 = vsel %vm1488, %v1485, 0.0
        %v1492 = vsel %vm1488, %v1486, 0.0
        %v1493 = vadd.f32 %v1446, %v1489
        %v1494 = vadd.f32 %v1447, %v1490
        %v1495 = vadd.f32 %v1448, %v1491
        %v1496 = vadd.f32 %v1449, %v1492
        %vm1497 = vcmp.eq.s32.totalorder %v414, 14
        %1498 = vset.pattern.permute.xlu0 30
        %1499 = vperm.xlu0 %1498, %v471
        %v1500 = vpop.permute.xlu0 %1499
        %1502 = vset.pattern.permute.xlu0 30
        %1503 = vperm.xlu0 %1502, %v578
        %v1504 = vpop.permute.xlu0 %1503
        %1506 = vset.pattern.permute.xlu0 30
        %1507 = vperm.xlu0 %1506, %v679
        %v1508 = vpop.permute.xlu0 %1507
        %1510 = vset.pattern.permute.xlu0 30
        %1511 = vperm.xlu0 %1510, %v780
        %v1512 = vpop.permute.xlu0 %1511
        %v1514 = vlaneseq
        %v1515 = vshrl.u32 %v1514, 7
        %v1516 = vsub.s32 6, %v1515
        %v1517 = vrot.slane %v522, %v1516
        %v1518 = vlaneseq
        %v1519 = vshrl.u32 %v1518, 7
        %v1520 = vsub.s32 6, %v1519
        %v1521 = vrot.slane %v626, %v1520
        %v1522 = vlaneseq
        %v1523 = vshrl.u32 %v1522, 7
        %v1524 = vsub.s32 6, %v1523
        %v1525 = vrot.slane %v727, %v1524
        %v1526 = vlaneseq
        %v1527 = vshrl.u32 %v1526, 7
        %v1528 = vsub.s32 6, %v1527
        %v1529 = vrot.slane %v828, %v1528
        %v1530 = vadd.f32 %v1500, %v1517
        %v1531 = vadd.f32 %v1504, %v1521
        %v1532 = vadd.f32 %v1508, %v1525
        %v1533 = vadd.f32 %v1512, %v1529
        %v1534 = vsel %vm1497, 1, 0
        %vm1535 = vcmp.eq.s32.totalorder %v1534, 1
        %v1536 = vsel %vm1535, %v1530, 0.0
        %v1537 = vsel %vm1535, %v1531, 0.0
        %v1538 = vsel %vm1535, %v1532, 0.0
        %v1539 = vsel %vm1535, %v1533, 0.0
        %v1540 = vadd.f32 %v1493, %v1536
        %v1541 = vadd.f32 %v1494, %v1537
        %v1542 = vadd.f32 %v1495, %v1538
        %v1543 = vadd.f32 %v1496, %v1539
        %vm1544 = vcmp.eq.s32.totalorder %v414, 15
        %1545 = vset.pattern.permute.xlu0 31
        %1546 = vperm.xlu0 %1545, %v471
        %v1547 = vpop.permute.xlu0 %1546
        %1549 = vset.pattern.permute.xlu0 31
        %1550 = vperm.xlu0 %1549, %v578
        %v1551 = vpop.permute.xlu0 %1550
        %1553 = vset.pattern.permute.xlu0 31
        %1554 = vperm.xlu0 %1553, %v679
        %v1555 = vpop.permute.xlu0 %1554
        %1557 = vset.pattern.permute.xlu0 31
        %1558 = vperm.xlu0 %1557, %v780
        %v1559 = vpop.permute.xlu0 %1558
        %v1561 = vlaneseq
        %v1562 = vshrl.u32 %v1561, 7
        %v1563 = vsub.s32 7, %v1562
        %v1564 = vrot.slane %v522, %v1563
        %v1565 = vlaneseq
        %v1566 = vshrl.u32 %v1565, 7
        %v1567 = vsub.s32 7, %v1566
        %v1568 = vrot.slane %v626, %v1567
        %v1569 = vlaneseq
        %v1570 = vshrl.u32 %v1569, 7
        %v1571 = vsub.s32 7, %v1570
        %v1572 = vrot.slane %v727, %v1571
        %v1573 = vlaneseq
        %v1574 = vshrl.u32 %v1573, 7
        %v1575 = vsub.s32 7, %v1574
        %v1576 = vrot.slane %v828, %v1575
        %v1577 = vadd.f32 %v1547, %v1564
        %v1578 = vadd.f32 %v1551, %v1568
        %v1579 = vadd.f32 %v1555, %v1572
        %v1580 = vadd.f32 %v1559, %v1576
        %v1581 = vsel %vm1544, 1, 0
        %vm1582 = vcmp.eq.s32.totalorder %v1581, 1
        %v1583 = vsel %vm1582, %v1577, 0.0
        %v1584 = vsel %vm1582, %v1578, 0.0
        %v1585 = vsel %vm1582, %v1579, 0.0
        %v1586 = vsel %vm1582, %v1580, 0.0
        %v1587 = vadd.f32 %v1540, %v1583
        %v1588 = vadd.f32 %v1541, %v1584
        %v1589 = vadd.f32 %v1542, %v1585
        %v1590 = vadd.f32 %v1543, %v1586
        %vm1591 = vcmask 130048
        %v1592 = vsel %vm1591, %v1587, -inf
        %1593 = vmax.xlane.f32.xlu0 %v1592
        %v1594 = vpop.xlane.xlu0 %1593
        %v1595 = vsel %vm1591, %v1588, -inf
        %1596 = vmax.xlane.f32.xlu0 %v1595
        %v1597 = vpop.xlane.xlu0 %1596
        %v1598 = vsel %vm1591, %v1589, -inf
        %1599 = vmax.xlane.f32.xlu0 %v1598
        %v1600 = vpop.xlane.xlu0 %1599
        %v1601 = vsel %vm1591, %v1590, -inf
        %1602 = vmax.xlane.f32.xlu0 %v1601
        %v1603 = vpop.xlane.xlu0 %1602
        %v1604 = vsub.f32 %v1587, %v1594
        %v1605 = vsub.f32 %v1588, %v1597
        %v1606 = vsub.f32 %v1589, %v1600
        %v1607 = vsub.f32 %v1590, %v1603
        %v1608 = vmul.f32 %v1604, 1.442695
        %v1609 = vpow.pop %v1608
        %v1610 = vmul.f32 %v1605, 1.442695
        %v1611 = vpow.pop %v1610
        %v1612 = vmul.f32 %v1606, 1.442695
        %v1613 = vpow.pop %v1612
        %v1614 = vmul.f32 %v1607, 1.442695
        %v1615 = vpow.pop %v1614
        %v1616 = vsel %vm1591, %v1609, 0.0
        %1617 = vadd.xlane.f32.xlu0 %v1616
        %v1618 = vpop.xlane.xlu0 %1617
        %v1619 = vsel %vm1591, %v1611, 0.0
        %1620 = vadd.xlane.f32.xlu0 %v1619
        %v1621 = vpop.xlane.xlu0 %1620
        %v1622 = vsel %vm1591, %v1613, 0.0
        %1623 = vadd.xlane.f32.xlu0 %v1622
        %v1624 = vpop.xlane.xlu0 %1623
        %v1625 = vsel %vm1591, %v1615, 0.0
        %1626 = vadd.xlane.f32.xlu0 %v1625
        %v1627 = vpop.xlane.xlu0 %1626
        %v1628 = vrcp.pop %v1618
        %v1629 = vrcp.pop %v1621
        %v1630 = vrcp.pop %v1624
        %v1631 = vrcp.pop %v1627
        %v1632 = vmul.f32 %v1609, %v1628
        %v1633 = vmul.f32 %v1611, %v1629
        %v1634 = vmul.f32 %v1613, %v1630
        %v1635 = vmul.f32 %v1615, %v1631
        %v1636 = vsel %vm877, %v1632, 0.0
        %v1637 = vsel %vm877, %v1633, 0.0
        %v1638 = vsel %vm877, %v1634, 0.0
        %v1639 = vsel %vm877, %v1635, 0.0
        %v1640 = vsel %vm1591, %v1636, 0.0
        %1641 = vadd.xlane.f32.xlu0 %v1640
        %v1642 = vpop.xlane.xlu0 %1641
        %v1643 = vsel %vm1591, %v1637, 0.0
        %1644 = vadd.xlane.f32.xlu0 %v1643
        %v1645 = vpop.xlane.xlu0 %1644
        %v1646 = vsel %vm1591, %v1638, 0.0
        %1647 = vadd.xlane.f32.xlu0 %v1646
        %v1648 = vpop.xlane.xlu0 %1647
        %v1649 = vsel %vm1591, %v1639, 0.0
        %1650 = vadd.xlane.f32.xlu0 %v1649
        %v1651 = vpop.xlane.xlu0 %1650
        %v1652 = vsel %vm924, %v1632, 0.0
        %v1653 = vsel %vm924, %v1633, 0.0
        %v1654 = vsel %vm924, %v1634, 0.0
        %v1655 = vsel %vm924, %v1635, 0.0
        %v1656 = vsel %vm1591, %v1652, 0.0
        %1657 = vadd.xlane.f32.xlu0 %v1656
        %v1658 = vpop.xlane.xlu0 %1657
        %v1659 = vsel %vm1591, %v1653, 0.0
        %1660 = vadd.xlane.f32.xlu0 %v1659
        %v1661 = vpop.xlane.xlu0 %1660
        %v1662 = vsel %vm1591, %v1654, 0.0
        %1663 = vadd.xlane.f32.xlu0 %v1662
        %v1664 = vpop.xlane.xlu0 %1663
        %v1665 = vsel %vm1591, %v1655, 0.0
        %1666 = vadd.xlane.f32.xlu0 %v1665
        %v1667 = vpop.xlane.xlu0 %1666
        %v1668 = vsel %vm971, %v1632, 0.0
        %v1669 = vsel %vm971, %v1633, 0.0
        %v1670 = vsel %vm971, %v1634, 0.0
        %v1671 = vsel %vm971, %v1635, 0.0
        %v1672 = vsel %vm1591, %v1668, 0.0
        %1673 = vadd.xlane.f32.xlu0 %v1672
        %v1674 = vpop.xlane.xlu0 %1673
        %v1675 = vsel %vm1591, %v1669, 0.0
        %1676 = vadd.xlane.f32.xlu0 %v1675
        %v1677 = vpop.xlane.xlu0 %1676
        %v1678 = vsel %vm1591, %v1670, 0.0
        %1679 = vadd.xlane.f32.xlu0 %v1678
        %v1680 = vpop.xlane.xlu0 %1679
        %v1681 = vsel %vm1591, %v1671, 0.0
        %1682 = vadd.xlane.f32.xlu0 %v1681
        %v1683 = vpop.xlane.xlu0 %1682
        %v1684 = vsel %vm1018, %v1632, 0.0
        %v1685 = vsel %vm1018, %v1633, 0.0
        %v1686 = vsel %vm1018, %v1634, 0.0
        %v1687 = vsel %vm1018, %v1635, 0.0
        %v1688 = vsel %vm1591, %v1684, 0.0
        %1689 = vadd.xlane.f32.xlu0 %v1688
        %v1690 = vpop.xlane.xlu0 %1689
        %v1691 = vsel %vm1591, %v1685, 0.0
        %1692 = vadd.xlane.f32.xlu0 %v1691
        %v1693 = vpop.xlane.xlu0 %1692
        %v1694 = vsel %vm1591, %v1686, 0.0
        %1695 = vadd.xlane.f32.xlu0 %v1694
        %v1696 = vpop.xlane.xlu0 %1695
        %v1697 = vsel %vm1591, %v1687, 0.0
        %1698 = vadd.xlane.f32.xlu0 %v1697
        %v1699 = vpop.xlane.xlu0 %1698
        %v1700 = vsel %vm1065, %v1632, 0.0
        %v1701 = vsel %vm1065, %v1633, 0.0
        %v1702 = vsel %vm1065, %v1634, 0.0
        %v1703 = vsel %vm1065, %v1635, 0.0
        %v1704 = vsel %vm1591, %v1700, 0.0
        %1705 = vadd.xlane.f32.xlu0 %v1704
        %v1706 = vpop.xlane.xlu0 %1705
        %v1707 = vsel %vm1591, %v1701, 0.0
        %1708 = vadd.xlane.f32.xlu0 %v1707
        %v1709 = vpop.xlane.xlu0 %1708
        %v1710 = vsel %vm1591, %v1702, 0.0
        %1711 = vadd.xlane.f32.xlu0 %v1710
        %v1712 = vpop.xlane.xlu0 %1711
        %v1713 = vsel %vm1591, %v1703, 0.0
        %1714 = vadd.xlane.f32.xlu0 %v1713
        %v1715 = vpop.xlane.xlu0 %1714
        %v1716 = vsel %vm1112, %v1632, 0.0
        %v1717 = vsel %vm1112, %v1633, 0.0
        %v1718 = vsel %vm1112, %v1634, 0.0
        %v1719 = vsel %vm1112, %v1635, 0.0
        %v1720 = vsel %vm1591, %v1716, 0.0
        %1721 = vadd.xlane.f32.xlu0 %v1720
        %v1722 = vpop.xlane.xlu0 %1721
        %v1723 = vsel %vm1591, %v1717, 0.0
        %1724 = vadd.xlane.f32.xlu0 %v1723
        %v1725 = vpop.xlane.xlu0 %1724
        %v1726 = vsel %vm1591, %v1718, 0.0
        %1727 = vadd.xlane.f32.xlu0 %v1726
        %v1728 = vpop.xlane.xlu0 %1727
        %v1729 = vsel %vm1591, %v1719, 0.0
        %1730 = vadd.xlane.f32.xlu0 %v1729
        %v1731 = vpop.xlane.xlu0 %1730
        %v1732 = vsel %vm1159, %v1632, 0.0
        %v1733 = vsel %vm1159, %v1633, 0.0
        %v1734 = vsel %vm1159, %v1634, 0.0
        %v1735 = vsel %vm1159, %v1635, 0.0
        %v1736 = vsel %vm1591, %v1732, 0.0
        %1737 = vadd.xlane.f32.xlu0 %v1736
        %v1738 = vpop.xlane.xlu0 %1737
        %v1739 = vsel %vm1591, %v1733, 0.0
        %1740 = vadd.xlane.f32.xlu0 %v1739
        %v1741 = vpop.xlane.xlu0 %1740
        %v1742 = vsel %vm1591, %v1734, 0.0
        %1743 = vadd.xlane.f32.xlu0 %v1742
        %v1744 = vpop.xlane.xlu0 %1743
        %v1745 = vsel %vm1591, %v1735, 0.0
        %1746 = vadd.xlane.f32.xlu0 %v1745
        %v1747 = vpop.xlane.xlu0 %1746
        %v1748 = vsel %vm1206, %v1632, 0.0
        %v1749 = vsel %vm1206, %v1633, 0.0
        %v1750 = vsel %vm1206, %v1634, 0.0
        %v1751 = vsel %vm1206, %v1635, 0.0
        %v1752 = vsel %vm1591, %v1748, 0.0
        %1753 = vadd.xlane.f32.xlu0 %v1752
        %v1754 = vpop.xlane.xlu0 %1753
        %v1755 = vsel %vm1591, %v1749, 0.0
        %1756 = vadd.xlane.f32.xlu0 %v1755
        %v1757 = vpop.xlane.xlu0 %1756
        %v1758 = vsel %vm1591, %v1750, 0.0
        %1759 = vadd.xlane.f32.xlu0 %v1758
        %v1760 = vpop.xlane.xlu0 %1759
        %v1761 = vsel %vm1591, %v1751, 0.0
        %1762 = vadd.xlane.f32.xlu0 %v1761
        %v1763 = vpop.xlane.xlu0 %1762
        %v1764 = vsel %vm1253, %v1632, 0.0
        %v1765 = vsel %vm1253, %v1633, 0.0
        %v1766 = vsel %vm1253, %v1634, 0.0
        %v1767 = vsel %vm1253, %v1635, 0.0
        %v1768 = vsel %vm1591, %v1764, 0.0
        %1769 = vadd.xlane.f32.xlu0 %v1768
        %v1770 = vpop.xlane.xlu0 %1769
        %v1771 = vsel %vm1591, %v1765, 0.0
        %1772 = vadd.xlane.f32.xlu0 %v1771
        %v1773 = vpop.xlane.xlu0 %1772
        %v1774 = vsel %vm1591, %v1766, 0.0
        %1775 = vadd.xlane.f32.xlu0 %v1774
        %v1776 = vpop.xlane.xlu0 %1775
        %v1777 = vsel %vm1591, %v1767, 0.0
        %1778 = vadd.xlane.f32.xlu0 %v1777
        %v1779 = vpop.xlane.xlu0 %1778
        %v1780 = vsel %vm1300, %v1632, 0.0
        %v1781 = vsel %vm1300, %v1633, 0.0
        %v1782 = vsel %vm1300, %v1634, 0.0
        %v1783 = vsel %vm1300, %v1635, 0.0
        %v1784 = vsel %vm1591, %v1780, 0.0
        %1785 = vadd.xlane.f32.xlu0 %v1784
        %v1786 = vpop.xlane.xlu0 %1785
        %v1787 = vsel %vm1591, %v1781, 0.0
        %1788 = vadd.xlane.f32.xlu0 %v1787
        %v1789 = vpop.xlane.xlu0 %1788
        %v1790 = vsel %vm1591, %v1782, 0.0
        %1791 = vadd.xlane.f32.xlu0 %v1790
        %v1792 = vpop.xlane.xlu0 %1791
        %v1793 = vsel %vm1591, %v1783, 0.0
        %1794 = vadd.xlane.f32.xlu0 %v1793
        %v1795 = vpop.xlane.xlu0 %1794
        %v1796 = vsel %vm1347, %v1632, 0.0
        %v1797 = vsel %vm1347, %v1633, 0.0
        %v1798 = vsel %vm1347, %v1634, 0.0
        %v1799 = vsel %vm1347, %v1635, 0.0
        %v1800 = vsel %vm1591, %v1796, 0.0
        %1801 = vadd.xlane.f32.xlu0 %v1800
        %v1802 = vpop.xlane.xlu0 %1801
        %v1803 = vsel %vm1591, %v1797, 0.0
        %1804 = vadd.xlane.f32.xlu0 %v1803
        %v1805 = vpop.xlane.xlu0 %1804
        %v1806 = vsel %vm1591, %v1798, 0.0
        %1807 = vadd.xlane.f32.xlu0 %v1806
        %v1808 = vpop.xlane.xlu0 %1807
        %v1809 = vsel %vm1591, %v1799, 0.0
        %1810 = vadd.xlane.f32.xlu0 %v1809
        %v1811 = vpop.xlane.xlu0 %1810
        %v1812 = vsel %vm1394, %v1632, 0.0
        %v1813 = vsel %vm1394, %v1633, 0.0
        %v1814 = vsel %vm1394, %v1634, 0.0
        %v1815 = vsel %vm1394, %v1635, 0.0
        %v1816 = vsel %vm1591, %v1812, 0.0
        %1817 = vadd.xlane.f32.xlu0 %v1816
        %v1818 = vpop.xlane.xlu0 %1817
        %v1819 = vsel %vm1591, %v1813, 0.0
        %1820 = vadd.xlane.f32.xlu0 %v1819
        %v1821 = vpop.xlane.xlu0 %1820
        %v1822 = vsel %vm1591, %v1814, 0.0
        %1823 = vadd.xlane.f32.xlu0 %v1822
        %v1824 = vpop.xlane.xlu0 %1823
        %v1825 = vsel %vm1591, %v1815, 0.0
        %1826 = vadd.xlane.f32.xlu0 %v1825
        %v1827 = vpop.xlane.xlu0 %1826
        %v1828 = vsel %vm1441, %v1632, 0.0
        %v1829 = vsel %vm1441, %v1633, 0.0
        %v1830 = vsel %vm1441, %v1634, 0.0
        %v1831 = vsel %vm1441, %v1635, 0.0
        %v1832 = vsel %vm1591, %v1828, 0.0
        %1833 = vadd.xlane.f32.xlu0 %v1832
        %v1834 = vpop.xlane.xlu0 %1833
        %v1835 = vsel %vm1591, %v1829, 0.0
        %1836 = vadd.xlane.f32.xlu0 %v1835
        %v1837 = vpop.xlane.xlu0 %1836
        %v1838 = vsel %vm1591, %v1830, 0.0
        %1839 = vadd.xlane.f32.xlu0 %v1838
        %v1840 = vpop.xlane.xlu0 %1839
        %v1841 = vsel %vm1591, %v1831, 0.0
        %1842 = vadd.xlane.f32.xlu0 %v1841
        %v1843 = vpop.xlane.xlu0 %1842
        %v1844 = vsel %vm1488, %v1632, 0.0
        %v1845 = vsel %vm1488, %v1633, 0.0
        %v1846 = vsel %vm1488, %v1634, 0.0
        %v1847 = vsel %vm1488, %v1635, 0.0
        %v1848 = vsel %vm1591, %v1844, 0.0
        %1849 = vadd.xlane.f32.xlu0 %v1848
        %v1850 = vpop.xlane.xlu0 %1849
        %v1851 = vsel %vm1591, %v1845, 0.0
        %1852 = vadd.xlane.f32.xlu0 %v1851
        %v1853 = vpop.xlane.xlu0 %1852
        %v1854 = vsel %vm1591, %v1846, 0.0
        %1855 = vadd.xlane.f32.xlu0 %v1854
        %v1856 = vpop.xlane.xlu0 %1855
        %v1857 = vsel %vm1591, %v1847, 0.0
        %1858 = vadd.xlane.f32.xlu0 %v1857
        %v1859 = vpop.xlane.xlu0 %1858
        %v1860 = vsel %vm1535, %v1632, 0.0
        %v1861 = vsel %vm1535, %v1633, 0.0
        %v1862 = vsel %vm1535, %v1634, 0.0
        %v1863 = vsel %vm1535, %v1635, 0.0
        %v1864 = vsel %vm1591, %v1860, 0.0
        %1865 = vadd.xlane.f32.xlu0 %v1864
        %v1866 = vpop.xlane.xlu0 %1865
        %v1867 = vsel %vm1591, %v1861, 0.0
        %1868 = vadd.xlane.f32.xlu0 %v1867
        %v1869 = vpop.xlane.xlu0 %1868
        %v1870 = vsel %vm1591, %v1862, 0.0
        %1871 = vadd.xlane.f32.xlu0 %v1870
        %v1872 = vpop.xlane.xlu0 %1871
        %v1873 = vsel %vm1591, %v1863, 0.0
        %1874 = vadd.xlane.f32.xlu0 %v1873
        %v1875 = vpop.xlane.xlu0 %1874
        %v1876 = vsel %vm1582, %v1632, 0.0
        %v1877 = vsel %vm1582, %v1633, 0.0
        %v1878 = vsel %vm1582, %v1634, 0.0
        %v1879 = vsel %vm1582, %v1635, 0.0
        %v1880 = vsel %vm1591, %v1876, 0.0
        %1881 = vadd.xlane.f32.xlu0 %v1880
        %v1882 = vpop.xlane.xlu0 %1881
        %v1883 = vsel %vm1591, %v1877, 0.0
        %1884 = vadd.xlane.f32.xlu0 %v1883
        %v1885 = vpop.xlane.xlu0 %1884
        %v1886 = vsel %vm1591, %v1878, 0.0
        %1887 = vadd.xlane.f32.xlu0 %v1886
        %v1888 = vpop.xlane.xlu0 %1887
        %v1889 = vsel %vm1591, %v1879, 0.0
        %1890 = vadd.xlane.f32.xlu0 %v1889
        %v1891 = vpop.xlane.xlu0 %1890
        %vm1892 = vcmask 7168
        %v1893 = vsel %vm1892, %v1642, %v1658
        %v1894 = vsel %vm1892, %v1645, %v1661
        %v1895 = vsel %vm1892, %v1648, %v1664
        %v1896 = vsel %vm1892, %v1651, %v1667
        %vm1897 = vcmask 15360
        %v1898 = vsel %vm1897, %v1893, %v1674
        %v1899 = vsel %vm1897, %v1894, %v1677
        %v1900 = vsel %vm1897, %v1895, %v1680
        %v1901 = vsel %vm1897, %v1896, %v1683
        %vm1902 = vcmask 23552
        %v1903 = vsel %vm1902, %v1898, %v1690
        %v1904 = vsel %vm1902, %v1899, %v1693
        %v1905 = vsel %vm1902, %v1900, %v1696
        %v1906 = vsel %vm1902, %v1901, %v1699
        %vm1907 = vcmask 31744
        %v1908 = vsel %vm1907, %v1903, %v1706
        %v1909 = vsel %vm1907, %v1904, %v1709
        %v1910 = vsel %vm1907, %v1905, %v1712
        %v1911 = vsel %vm1907, %v1906, %v1715
        %vm1912 = vcmask 39936
        %v1913 = vsel %vm1912, %v1908, %v1722
        %v1914 = vsel %vm1912, %v1909, %v1725
        %v1915 = vsel %vm1912, %v1910, %v1728
        %v1916 = vsel %vm1912, %v1911, %v1731
        %vm1917 = vcmask 48128
        %v1918 = vsel %vm1917, %v1913, %v1738
        %v1919 = vsel %vm1917, %v1914, %v1741
        %v1920 = vsel %vm1917, %v1915, %v1744
        %v1921 = vsel %vm1917, %v1916, %v1747
        %vm1922 = vcmask 56320
        %v1923 = vsel %vm1922, %v1918, %v1754
        %v1924 = vsel %vm1922, %v1919, %v1757
        %v1925 = vsel %vm1922, %v1920, %v1760
        %v1926 = vsel %vm1922, %v1921, %v1763
        %v1927 = vsel %vm426, %v1923, %v1770
        %v1928 = vsel %vm426, %v1924, %v1773
        %v1929 = vsel %vm426, %v1925, %v1776
        %v1930 = vsel %vm426, %v1926, %v1779
        %vm1931 = vcmask 72704
        %v1932 = vsel %vm1931, %v1927, %v1786
        %v1933 = vsel %vm1931, %v1928, %v1789
        %v1934 = vsel %vm1931, %v1929, %v1792
        %v1935 = vsel %vm1931, %v1930, %v1795
        %vm1936 = vcmask 80896
        %v1937 = vsel %vm1936, %v1932, %v1802
        %v1938 = vsel %vm1936, %v1933, %v1805
        %v1939 = vsel %vm1936, %v1934, %v1808
        %v1940 = vsel %vm1936, %v1935, %v1811
        %vm1941 = vcmask 89088
        %v1942 = vsel %vm1941, %v1937, %v1818
        %v1943 = vsel %vm1941, %v1938, %v1821
        %v1944 = vsel %vm1941, %v1939, %v1824
        %v1945 = vsel %vm1941, %v1940, %v1827
        %vm1946 = vcmask 97280
        %v1947 = vsel %vm1946, %v1942, %v1834
        %v1948 = vsel %vm1946, %v1943, %v1837
        %v1949 = vsel %vm1946, %v1944, %v1840
        %v1950 = vsel %vm1946, %v1945, %v1843
        %vm1951 = vcmask 105472
        %v1952 = vsel %vm1951, %v1947, %v1850
        %v1953 = vsel %vm1951, %v1948, %v1853
        %v1954 = vsel %vm1951, %v1949, %v1856
        %v1955 = vsel %vm1951, %v1950, %v1859
        %vm1956 = vcmask 113664
        %v1957 = vsel %vm1956, %v1952, %v1866
        %v1958 = vsel %vm1956, %v1953, %v1869
        %v1959 = vsel %vm1956, %v1954, %v1872
        %v1960 = vsel %vm1956, %v1955, %v1875
        %vm1961 = vcmask 121856
        %v1962 = vsel %vm1961, %v1957, %v1882
        %v1963 = vsel %vm1961, %v1958, %v1885
        %v1964 = vsel %vm1961, %v1959, %v1888
        %v1965 = vsel %vm1961, %v1960, %v1891
        %v1966 = vpack.c.bf16 %v1632, %v1632
        %v1967 = vpack.c.bf16 %v1633, %v1633
        %v1968 = vpack.c.bf16 %v1634, %v1634
        %v1969 = vpack.c.bf16 %v1635, %v1635
        %v1970 = vpack.c.bf16 %v1962, %v1962
        %v1971 = vpack.c.bf16 %v1963, %v1963
        %v1972 = vpack.c.bf16 %v1964, %v1964
        %v1973 = vpack.c.bf16 %v1965, %v1965
        %v1976 = vunpack.c.l.b16 %v412
        %v1977 = vunpack.c.l.b16 %v413
        %v1978 = vpack.c.b16 %v1977, %v1976
        %v1981 = vsel %vm1591, %v1970, 0
        %1983 = vmatprep.subr.bf16.mxu0 0
        %1984 = vmatpush1.bf16.msra.mxu0 0
        %1985 = vmatprep.subr.bf16.mxu0 0
        %1986 = vmatpush1.bf16.msra.mxu0 0
        %1987 = vmatprep.subr.bf16.mxu0 0
        %1988 = vmatpush1.bf16.msra.mxu0 0
        %1989 = vmatprep.subr.bf16.mxu0 0
        %1990 = vmatpush1.bf16.msra.mxu0 0
        %1991 = vmatprep.subr.bf16.mxu0 0
        %1992 = vmatpush1.bf16.msra.mxu0 0
        %1993 = vmatprep.subr.bf16.mxu0 0
        %1994 = vmatpush1.bf16.msra.mxu0 0
        %1995 = vmatprep.subr.bf16.mxu0 0
        %1996 = vmatpush1.bf16.msra.mxu0 0
        %1997 = vmatprep.subr.bf16.mxu0 0
        %1998 = vmatpush1.bf16.msra.mxu0 %v1978
        %1999 = vmatprep.subr.bf16.mxu0 0
        %2000 = vmatpush2.bf16.msra.mxu0 0
        %2001 = vmatprep.subr.bf16.mxu0 0
        %2002 = vmatpush2.bf16.msra.mxu0 0
        %2003 = vmatprep.subr.bf16.mxu0 0
        %2004 = vmatpush2.bf16.msra.mxu0 0
        %2005 = vmatprep.subr.bf16.mxu0 0
        %2006 = vmatpush2.bf16.msra.mxu0 0
        %2007 = vmatprep.subr.bf16.mxu0 0
        %2008 = vmatpush2.bf16.msra.mxu0 0
        %2009 = vmatprep.subr.bf16.mxu0 0
        %2010 = vmatpush2.bf16.msra.mxu0 0
        %2011 = vmatprep.subr.bf16.mxu0 0
        %2012 = vmatpush2.bf16.msra.mxu0 0
        %2013 = vmatprep.subr.bf16.mxu0 0
        %2014 = vmatpush2.bf16.msra.mxu0 0
        %2015 = vmatprep.mubr.bf16.mxu0 0
        %2016 = vmatmul.mubr.bf16.gmra.mxu0 %v1981
        %v2017 = vpop.f32.mrf.mxu0
        %v2018 = vadd.f32 0.0, %v2017
        %v2019 = vpop.f32.mrf.mxu0
        %v2020 = vpop.f32.mrf.mxu0
        %v2021 = vpop.f32.mrf.mxu0
        %2022 = vdwg.mxu0
        %v2025 = vunpack.c.l.b16 %v406
        %v2026 = vunpack.c.l.b16 %v407
        %v2027 = vpack.c.b16 %v2026, %v2025
        %v2030 = vsel %vm1591, %v1966, 0
        %2032 = vmatprep.subr.bf16.mxu0 0
        %2033 = vmatpush1.bf16.msra.mxu0 0
        %2034 = vmatprep.subr.bf16.mxu0 0
        %2035 = vmatpush1.bf16.msra.mxu0 0
        %2036 = vmatprep.subr.bf16.mxu0 0
        %2037 = vmatpush1.bf16.msra.mxu0 0
        %2038 = vmatprep.subr.bf16.mxu0 0
        %2039 = vmatpush1.bf16.msra.mxu0 0
        %2040 = vmatprep.subr.bf16.mxu0 0
        %2041 = vmatpush1.bf16.msra.mxu0 0
        %2042 = vmatprep.subr.bf16.mxu0 0
        %2043 = vmatpush1.bf16.msra.mxu0 0
        %2044 = vmatprep.subr.bf16.mxu0 0
        %2045 = vmatpush1.bf16.msra.mxu0 0
        %2046 = vmatprep.subr.bf16.mxu0 0
        %2047 = vmatpush1.bf16.msra.mxu0 %v2027
        %2048 = vmatprep.subr.bf16.mxu0 0
        %2049 = vmatpush2.bf16.msra.mxu0 0
        %2050 = vmatprep.subr.bf16.mxu0 0
        %2051 = vmatpush2.bf16.msra.mxu0 0
        %2052 = vmatprep.subr.bf16.mxu0 0
        %2053 = vmatpush2.bf16.msra.mxu0 0
        %2054 = vmatprep.subr.bf16.mxu0 0
        %2055 = vmatpush2.bf16.msra.mxu0 0
        %2056 = vmatprep.subr.bf16.mxu0 0
        %2057 = vmatpush2.bf16.msra.mxu0 0
        %2058 = vmatprep.subr.bf16.mxu0 0
        %2059 = vmatpush2.bf16.msra.mxu0 0
        %2060 = vmatprep.subr.bf16.mxu0 0
        %2061 = vmatpush2.bf16.msra.mxu0 0
        %2062 = vmatprep.subr.bf16.mxu0 0
        %2063 = vmatpush2.bf16.msra.mxu0 0
        %2064 = vmatprep.mubr.bf16.mxu0 0
        %2065 = vmatmul.mubr.bf16.gmra.mxu0 %v2030
        %v2066 = vpop.f32.mrf.mxu0
        %v2067 = vadd.f32 %v2018, %v2066
        %v2068 = vpop.f32.mrf.mxu0
        %v2069 = vpop.f32.mrf.mxu0
        %v2070 = vpop.f32.mrf.mxu0
        %2071 = vdwg.mxu0
        %2072 = vrot.lane.b32.xlu0 %v1978, 120
        %v2073 = vpop.permute.xlu0 %2072
        %v2076 = vsel %vm1591, %v1971, 0
        %2078 = vmatprep.subr.bf16.mxu0 0
        %2079 = vmatpush1.bf16.msra.mxu0 0
        %2080 = vmatprep.subr.bf16.mxu0 0
        %2081 = vmatpush1.bf16.msra.mxu0 0
        %2082 = vmatprep.subr.bf16.mxu0 0
        %2083 = vmatpush1.bf16.msra.mxu0 0
        %2084 = vmatprep.subr.bf16.mxu0 0
        %2085 = vmatpush1.bf16.msra.mxu0 0
        %2086 = vmatprep.subr.bf16.mxu0 0
        %2087 = vmatpush1.bf16.msra.mxu0 0
        %2088 = vmatprep.subr.bf16.mxu0 0
        %2089 = vmatpush1.bf16.msra.mxu0 0
        %2090 = vmatprep.subr.bf16.mxu0 0
        %2091 = vmatpush1.bf16.msra.mxu0 0
        %2092 = vmatprep.subr.bf16.mxu0 0
        %2093 = vmatpush1.bf16.msra.mxu0 %v2073
        %2094 = vmatprep.subr.bf16.mxu0 0
        %2095 = vmatpush2.bf16.msra.mxu0 0
        %2096 = vmatprep.subr.bf16.mxu0 0
        %2097 = vmatpush2.bf16.msra.mxu0 0
        %2098 = vmatprep.subr.bf16.mxu0 0
        %2099 = vmatpush2.bf16.msra.mxu0 0
        %2100 = vmatprep.subr.bf16.mxu0 0
        %2101 = vmatpush2.bf16.msra.mxu0 0
        %2102 = vmatprep.subr.bf16.mxu0 0
        %2103 = vmatpush2.bf16.msra.mxu0 0
        %2104 = vmatprep.subr.bf16.mxu0 0
        %2105 = vmatpush2.bf16.msra.mxu0 0
        %2106 = vmatprep.subr.bf16.mxu0 0
        %2107 = vmatpush2.bf16.msra.mxu0 0
        %2108 = vmatprep.subr.bf16.mxu0 0
        %2109 = vmatpush2.bf16.msra.mxu0 0
        %2110 = vmatprep.mubr.bf16.mxu0 0
        %2111 = vmatmul.mubr.bf16.gmra.mxu0 %v2076
        %v2112 = vpop.f32.mrf.mxu0
        %v2113 = vadd.f32 0.0, %v2112
        %v2114 = vpop.f32.mrf.mxu0
        %v2115 = vpop.f32.mrf.mxu0
        %v2116 = vpop.f32.mrf.mxu0
        %2117 = vdwg.mxu0
        %2118 = vrot.lane.b32.xlu0 %v2027, 120
        %v2119 = vpop.permute.xlu0 %2118
        %v2122 = vsel %vm1591, %v1967, 0
        %2124 = vmatprep.subr.bf16.mxu0 0
        %2125 = vmatpush1.bf16.msra.mxu0 0
        %2126 = vmatprep.subr.bf16.mxu0 0
        %2127 = vmatpush1.bf16.msra.mxu0 0
        %2128 = vmatprep.subr.bf16.mxu0 0
        %2129 = vmatpush1.bf16.msra.mxu0 0
        %2130 = vmatprep.subr.bf16.mxu0 0
        %2131 = vmatpush1.bf16.msra.mxu0 0
        %2132 = vmatprep.subr.bf16.mxu0 0
        %2133 = vmatpush1.bf16.msra.mxu0 0
        %2134 = vmatprep.subr.bf16.mxu0 0
        %2135 = vmatpush1.bf16.msra.mxu0 0
        %2136 = vmatprep.subr.bf16.mxu0 0
        %2137 = vmatpush1.bf16.msra.mxu0 0
        %2138 = vmatprep.subr.bf16.mxu0 0
        %2139 = vmatpush1.bf16.msra.mxu0 %v2119
        %2140 = vmatprep.subr.bf16.mxu0 0
        %2141 = vmatpush2.bf16.msra.mxu0 0
        %2142 = vmatprep.subr.bf16.mxu0 0
        %2143 = vmatpush2.bf16.msra.mxu0 0
        %2144 = vmatprep.subr.bf16.mxu0 0
        %2145 = vmatpush2.bf16.msra.mxu0 0
        %2146 = vmatprep.subr.bf16.mxu0 0
        %2147 = vmatpush2.bf16.msra.mxu0 0
        %2148 = vmatprep.subr.bf16.mxu0 0
        %2149 = vmatpush2.bf16.msra.mxu0 0
        %2150 = vmatprep.subr.bf16.mxu0 0
        %2151 = vmatpush2.bf16.msra.mxu0 0
        %2152 = vmatprep.subr.bf16.mxu0 0
        %2153 = vmatpush2.bf16.msra.mxu0 0
        %2154 = vmatprep.subr.bf16.mxu0 0
        %2155 = vmatpush2.bf16.msra.mxu0 0
        %2156 = vmatprep.mubr.bf16.mxu0 0
        %2157 = vmatmul.mubr.bf16.gmra.mxu0 %v2122
        %v2158 = vpop.f32.mrf.mxu0
        %v2159 = vadd.f32 %v2113, %v2158
        %v2160 = vpop.f32.mrf.mxu0
        %v2161 = vpop.f32.mrf.mxu0
        %v2162 = vpop.f32.mrf.mxu0
        %2163 = vdwg.mxu0
        %2164 = vrot.lane.b32.xlu0 %v1978, 112
        %v2165 = vpop.permute.xlu0 %2164
        %v2168 = vsel %vm1591, %v1972, 0
        %2170 = vmatprep.subr.bf16.mxu0 0
        %2171 = vmatpush1.bf16.msra.mxu0 0
        %2172 = vmatprep.subr.bf16.mxu0 0
        %2173 = vmatpush1.bf16.msra.mxu0 0
        %2174 = vmatprep.subr.bf16.mxu0 0
        %2175 = vmatpush1.bf16.msra.mxu0 0
        %2176 = vmatprep.subr.bf16.mxu0 0
        %2177 = vmatpush1.bf16.msra.mxu0 0
        %2178 = vmatprep.subr.bf16.mxu0 0
        %2179 = vmatpush1.bf16.msra.mxu0 0
        %2180 = vmatprep.subr.bf16.mxu0 0
        %2181 = vmatpush1.bf16.msra.mxu0 0
        %2182 = vmatprep.subr.bf16.mxu0 0
        %2183 = vmatpush1.bf16.msra.mxu0 0
        %2184 = vmatprep.subr.bf16.mxu0 0
        %2185 = vmatpush1.bf16.msra.mxu0 %v2165
        %2186 = vmatprep.subr.bf16.mxu0 0
        %2187 = vmatpush2.bf16.msra.mxu0 0
        %2188 = vmatprep.subr.bf16.mxu0 0
        %2189 = vmatpush2.bf16.msra.mxu0 0
        %2190 = vmatprep.subr.bf16.mxu0 0
        %2191 = vmatpush2.bf16.msra.mxu0 0
        %2192 = vmatprep.subr.bf16.mxu0 0
        %2193 = vmatpush2.bf16.msra.mxu0 0
        %2194 = vmatprep.subr.bf16.mxu0 0
        %2195 = vmatpush2.bf16.msra.mxu0 0
        %2196 = vmatprep.subr.bf16.mxu0 0
        %2197 = vmatpush2.bf16.msra.mxu0 0
        %2198 = vmatprep.subr.bf16.mxu0 0
        %2199 = vmatpush2.bf16.msra.mxu0 0
        %2200 = vmatprep.subr.bf16.mxu0 0
        %2201 = vmatpush2.bf16.msra.mxu0 0
        %2202 = vmatprep.mubr.bf16.mxu0 0
        %2203 = vmatmul.mubr.bf16.gmra.mxu0 %v2168
        %v2204 = vpop.f32.mrf.mxu0
        %v2205 = vadd.f32 0.0, %v2204
        %v2206 = vpop.f32.mrf.mxu0
        %v2207 = vpop.f32.mrf.mxu0
        %v2208 = vpop.f32.mrf.mxu0
        %2209 = vdwg.mxu0
        %2210 = vrot.lane.b32.xlu0 %v2027, 112
        %v2211 = vpop.permute.xlu0 %2210
        %v2214 = vsel %vm1591, %v1968, 0
        %2216 = vmatprep.subr.bf16.mxu0 0
        %2217 = vmatpush1.bf16.msra.mxu0 0
        %2218 = vmatprep.subr.bf16.mxu0 0
        %2219 = vmatpush1.bf16.msra.mxu0 0
        %2220 = vmatprep.subr.bf16.mxu0 0
        %2221 = vmatpush1.bf16.msra.mxu0 0
        %2222 = vmatprep.subr.bf16.mxu0 0
        %2223 = vmatpush1.bf16.msra.mxu0 0
        %2224 = vmatprep.subr.bf16.mxu0 0
        %2225 = vmatpush1.bf16.msra.mxu0 0
        %2226 = vmatprep.subr.bf16.mxu0 0
        %2227 = vmatpush1.bf16.msra.mxu0 0
        %2228 = vmatprep.subr.bf16.mxu0 0
        %2229 = vmatpush1.bf16.msra.mxu0 0
        %2230 = vmatprep.subr.bf16.mxu0 0
        %2231 = vmatpush1.bf16.msra.mxu0 %v2211
        %2232 = vmatprep.subr.bf16.mxu0 0
        %2233 = vmatpush2.bf16.msra.mxu0 0
        %2234 = vmatprep.subr.bf16.mxu0 0
        %2235 = vmatpush2.bf16.msra.mxu0 0
        %2236 = vmatprep.subr.bf16.mxu0 0
        %2237 = vmatpush2.bf16.msra.mxu0 0
        %2238 = vmatprep.subr.bf16.mxu0 0
        %2239 = vmatpush2.bf16.msra.mxu0 0
        %2240 = vmatprep.subr.bf16.mxu0 0
        %2241 = vmatpush2.bf16.msra.mxu0 0
        %2242 = vmatprep.subr.bf16.mxu0 0
        %2243 = vmatpush2.bf16.msra.mxu0 0
        %2244 = vmatprep.subr.bf16.mxu0 0
        %2245 = vmatpush2.bf16.msra.mxu0 0
        %2246 = vmatprep.subr.bf16.mxu0 0
        %2247 = vmatpush2.bf16.msra.mxu0 0
        %2248 = vmatprep.mubr.bf16.mxu0 0
        %2249 = vmatmul.mubr.bf16.gmra.mxu0 %v2214
        %v2250 = vpop.f32.mrf.mxu0
        %v2251 = vadd.f32 %v2205, %v2250
        %v2252 = vpop.f32.mrf.mxu0
        %v2253 = vpop.f32.mrf.mxu0
        %v2254 = vpop.f32.mrf.mxu0
        %2255 = vdwg.mxu0
        %2256 = vrot.lane.b32.xlu0 %v1978, 104
        %v2257 = vpop.permute.xlu0 %2256
        %v2260 = vsel %vm1591, %v1973, 0
        %2262 = vmatprep.subr.bf16.mxu0 0
        %2263 = vmatpush1.bf16.msra.mxu0 0
        %2264 = vmatprep.subr.bf16.mxu0 0
        %2265 = vmatpush1.bf16.msra.mxu0 0
        %2266 = vmatprep.subr.bf16.mxu0 0
        %2267 = vmatpush1.bf16.msra.mxu0 0
        %2268 = vmatprep.subr.bf16.mxu0 0
        %2269 = vmatpush1.bf16.msra.mxu0 0
        %2270 = vmatprep.subr.bf16.mxu0 0
        %2271 = vmatpush1.bf16.msra.mxu0 0
        %2272 = vmatprep.subr.bf16.mxu0 0
        %2273 = vmatpush1.bf16.msra.mxu0 0
        %2274 = vmatprep.subr.bf16.mxu0 0
        %2275 = vmatpush1.bf16.msra.mxu0 0
        %2276 = vmatprep.subr.bf16.mxu0 0
        %2277 = vmatpush1.bf16.msra.mxu0 %v2257
        %2278 = vmatprep.subr.bf16.mxu0 0
        %2279 = vmatpush2.bf16.msra.mxu0 0
        %2280 = vmatprep.subr.bf16.mxu0 0
        %2281 = vmatpush2.bf16.msra.mxu0 0
        %2282 = vmatprep.subr.bf16.mxu0 0
        %2283 = vmatpush2.bf16.msra.mxu0 0
        %2284 = vmatprep.subr.bf16.mxu0 0
        %2285 = vmatpush2.bf16.msra.mxu0 0
        %2286 = vmatprep.subr.bf16.mxu0 0
        %2287 = vmatpush2.bf16.msra.mxu0 0
        %2288 = vmatprep.subr.bf16.mxu0 0
        %2289 = vmatpush2.bf16.msra.mxu0 0
        %2290 = vmatprep.subr.bf16.mxu0 0
        %2291 = vmatpush2.bf16.msra.mxu0 0
        %2292 = vmatprep.subr.bf16.mxu0 0
        %2293 = vmatpush2.bf16.msra.mxu0 0
        %2294 = vmatprep.mubr.bf16.mxu0 0
        %2295 = vmatmul.mubr.bf16.gmra.mxu0 %v2260
        %v2296 = vpop.f32.mrf.mxu0
        %v2297 = vadd.f32 0.0, %v2296
        %v2298 = vpop.f32.mrf.mxu0
        %v2299 = vpop.f32.mrf.mxu0
        %v2300 = vpop.f32.mrf.mxu0
        %2301 = vdwg.mxu0
        %2302 = vrot.lane.b32.xlu0 %v2027, 104
        %v2303 = vpop.permute.xlu0 %2302
        %v2306 = vsel %vm1591, %v1969, 0
        %2308 = vmatprep.subr.bf16.mxu0 0
        %2309 = vmatpush1.bf16.msra.mxu0 0
        %2310 = vmatprep.subr.bf16.mxu0 0
        %2311 = vmatpush1.bf16.msra.mxu0 0
        %2312 = vmatprep.subr.bf16.mxu0 0
        %2313 = vmatpush1.bf16.msra.mxu0 0
        %2314 = vmatprep.subr.bf16.mxu0 0
        %2315 = vmatpush1.bf16.msra.mxu0 0
        %2316 = vmatprep.subr.bf16.mxu0 0
        %2317 = vmatpush1.bf16.msra.mxu0 0
        %2318 = vmatprep.subr.bf16.mxu0 0
        %2319 = vmatpush1.bf16.msra.mxu0 0
        %2320 = vmatprep.subr.bf16.mxu0 0
        %2321 = vmatpush1.bf16.msra.mxu0 0
        %2322 = vmatprep.subr.bf16.mxu0 0
        %2323 = vmatpush1.bf16.msra.mxu0 %v2303
        %2324 = vmatprep.subr.bf16.mxu0 0
        %2325 = vmatpush2.bf16.msra.mxu0 0
        %2326 = vmatprep.subr.bf16.mxu0 0
        %2327 = vmatpush2.bf16.msra.mxu0 0
        %2328 = vmatprep.subr.bf16.mxu0 0
        %2329 = vmatpush2.bf16.msra.mxu0 0
        %2330 = vmatprep.subr.bf16.mxu0 0
        %2331 = vmatpush2.bf16.msra.mxu0 0
        %2332 = vmatprep.subr.bf16.mxu0 0
        %2333 = vmatpush2.bf16.msra.mxu0 0
        %2334 = vmatprep.subr.bf16.mxu0 0
        %2335 = vmatpush2.bf16.msra.mxu0 0
        %2336 = vmatprep.subr.bf16.mxu0 0
        %2337 = vmatpush2.bf16.msra.mxu0 0
        %2338 = vmatprep.subr.bf16.mxu0 0
        %2339 = vmatpush2.bf16.msra.mxu0 0
        %2340 = vmatprep.mubr.bf16.mxu0 0
        %2341 = vmatmul.mubr.bf16.gmra.mxu0 %v2306
        %v2342 = vpop.f32.mrf.mxu0
        %v2343 = vadd.f32 %v2297, %v2342
        %v2344 = vpop.f32.mrf.mxu0
        %v2345 = vpop.f32.mrf.mxu0
        %v2346 = vpop.f32.mrf.mxu0
        %2347 = vdwg.mxu0
        %2349 = vrot.lane.b32.xlu0 %v2159, 8
        %v2350 = vpop.permute.xlu0 %2349
        %2353 = vrot.lane.b32.xlu0 %v2251, 16
        %v2354 = vpop.permute.xlu0 %2353
        %2357 = vrot.lane.b32.xlu0 %v2343, 24
        %v2358 = vpop.permute.xlu0 %2357
        %v2360 = vsel %vm426, %v2067, %v2350
        %v2361 = vsel %vm1591, %v2360, %v2354
        %vm2362 = vcmask 195584
        %v2363 = vsel %vm2362, %v2361, %v2358
        %v2364 = vpack.c.bf16 %v2363, %v2363
        %v2365 = vld [vmem:[%s8] sm:$0xf]
        %v2366 = vld [vmem:[%s8 + $0x4] sm:$0xf]
        %v2367 = vld [vmem:[%s8 + $0x8] sm:$0xf]
        %v2368 = vld [vmem:[%s8 + $0xc] sm:$0xf]
        %v2373 = vunpack.c.l.b16 %v2365
        %v2374 = vunpack.c.l.b16 %v2366
        %v2375 = vunpack.c.l.b16 %v2367
        %v2376 = vunpack.c.l.b16 %v2368
        %v2377 = vpack.c.b16 %v2374, %v2373
        %v2378 = vpack.c.b16 %v2376, %v2375
        %vm2379 = vcmask 261120
        %v2381 = vsel %vm2379, %v2364, 0
        %v2384 = vsel %vm2379, %v2377, 0
        %v2387 = vsel %vm2379, %v2378, 0
        %2389 = vmatprep.subr.bf16.mxu0 0
        %2390 = vmatpush1.bf16.xpose.msra.mxu0 0
        %2391 = vmatprep.subr.bf16.mxu0 0
        %2392 = vmatpush1.bf16.xpose.msra.mxu0 0
        %2393 = vmatprep.subr.bf16.mxu0 0
        %2394 = vmatpush1.bf16.xpose.msra.mxu0 0
        %2395 = vmatprep.subr.bf16.mxu0 0
        %2396 = vmatpush1.bf16.xpose.msra.mxu0 0
        %2397 = vmatprep.subr.bf16.mxu0 0
        %2398 = vmatpush1.bf16.xpose.msra.mxu0 0
        %2399 = vmatprep.subr.bf16.mxu0 0
        %2400 = vmatpush1.bf16.xpose.msra.mxu0 0
        %2401 = vmatprep.subr.bf16.mxu0 0
        %2402 = vmatpush1.bf16.xpose.msra.mxu0 %v2387
        %2403 = vmatprep.subr.bf16.mxu0 0
        %2404 = vmatpush1.bf16.xpose.msra.mxu0 %v2384
        %2405 = vmatprep.subr.bf16.mxu0 0
        %2406 = vmatpush2.bf16.xpose.msra.mxu0 0
        %2407 = vmatprep.subr.bf16.mxu0 0
        %2408 = vmatpush2.bf16.xpose.msra.mxu0 0
        %2409 = vmatprep.subr.bf16.mxu0 0
        %2410 = vmatpush2.bf16.xpose.msra.mxu0 0
        %2411 = vmatprep.subr.bf16.mxu0 0
        %2412 = vmatpush2.bf16.xpose.msra.mxu0 0
        %2413 = vmatprep.subr.bf16.mxu0 0
        %2414 = vmatpush2.bf16.xpose.msra.mxu0 0
        %2415 = vmatprep.subr.bf16.mxu0 0
        %2416 = vmatpush2.bf16.xpose.msra.mxu0 0
        %2417 = vmatprep.subr.bf16.mxu0 0
        %2418 = vmatpush2.bf16.xpose.msra.mxu0 0
        %2419 = vmatprep.subr.bf16.mxu0 0
        %2420 = vmatpush2.bf16.xpose.msra.mxu0 0
        %2421 = vmatprep.mubr.bf16.mxu0 0
        %2422 = vmatmul.mubr.bf16.gmra.mxu0 %v2381
        %v2423 = vpop.f32.mrf.mxu0
        %v2424 = vadd.f32 0.0, %v2423
        %v2425 = vpop.f32.mrf.mxu0
        %v2426 = vpop.f32.mrf.mxu0
        %v2427 = vpop.f32.mrf.mxu0
        %2428 = vdwg.mxu0
        %2429 = vst.msk [vmem:[%s379] sm:$0xff] %vm2379, %v2424
        %s2430 = sand.u32 %s245, 1
        %s2431 = scalar_lea.sflag [#allocation3], %s2430
        %s2432 = sand.u32 %s245, 1
        %s2433 = smul.addr %s2432, 8
        %s2434 = scalar_lea.vmem [#allocation2], %s2433
        // Predicated region
        $region57: #{multi_head_attention_digraph.3} parent=55 // pred_check
          %p2435 = pneg %p255
        $region58: #{multi_head_attention_digraph.3} parent=55 // pred_check_branch
          %2437 = sbr.rel (%p2435) target = $region60
        $region59: #{multi_head_attention_digraph.3} parent=55 // pred_region
          %s2439 = ssub.s32 128, 128
          %2440 = vsyncadd %s2431, %s2439
          %s2441 = smul.addr %s23, 128
          %s2442 = scalar_lea.hbm %s9, %s2441
          %s2444 = sshll.u32 %s2434, 4
          %s2445 = int_to_ptr.vmem [resolvable:$true] %s2444
          %2447 = dma.vmem_to_hbm [thread:$0]  %s2445, 128, %s2442, %s2431
        $region60: #{multi_head_attention_digraph.3} parent=55 // pred_fallthru
          _
      $region56: #{multi_head_attention_digraph.3} parent=5 // pred_fallthru
        _
      %p2448 = scmp.le.s32.totalorder 2, %s18
      // Predicated region
      $region61: #{multi_head_attention_digraph.3} parent=5 // pred_check
        %p2449 = pneg %p2448
      $region62: #{multi_head_attention_digraph.3} parent=5 // pred_check_branch
        %2451 = sbr.rel (%p2449) target = $region64
      $region63: #{multi_head_attention_digraph.3} parent=5 // pred_region
        %s2452 = ssub.s32 %s18, 2
        // Predicated region
        $region65: #{multi_head_attention_digraph.3} parent=63 // pred_check
          %p2453 = pneg %p261
        $region66: #{multi_head_attention_digraph.3} parent=63 // pred_check_branch
          %2455 = sbr.rel (%p2453) target = $region68
        $region67: #{multi_head_attention_digraph.3} parent=63 // pred_region
          %s2456 = sand.u32 %s246, 1
          %s2457 = scalar_lea.sflag [#allocation3], %s2456
          %s2458 = sand.u32 %s246, 1
          %s2459 = smul.addr %s2458, 8
          %s2460 = scalar_lea.vmem [#allocation2], %s2459
          %2461 = dma.done %s2457, 128
        $region68: #{multi_head_attention_digraph.3} parent=63 // pred_fallthru
          _
      $region64: #{multi_head_attention_digraph.3} parent=5 // pred_fallthru
        _
    $region6: #{multi_head_attention_digraph.3} parent=1 // loop_footer
      %s22 = sadd.s32 1, %s18
    $region7: #{multi_head_attention_digraph.3} parent=1 // loop_footer_branch
      %17 = sbr.rel target = $region3
    $region8: #{multi_head_attention_digraph.3} parent=1 // loop_exit
      _
    %2462 = vsyncpa [#allocation3], 1
    %s2463 = scalar_lea.sflag [#allocation3], 1
    %2464 = vsyncpa %s2463, 1

</llo_original>
